<compile_context>
chip_gen: v6e
topology: v6e:2x2x1
jax: 0.10.0
libtpu: 0.0.40
codegen_flags: <defaults>
</compile_context>

<pallas_src>
import jax
import jax.numpy as jnp
from jax.experimental import pallas as pl
from jax.experimental.pallas import tpu as pltpu


# ----------------------------- fused Pallas kernel -----------------------------

def _fused_net_kernel(ids_ref, emb_ref, lw_ref, lb_ref, gw_ref, gb_ref,
                      aw_ref, ab_ref, w1_ref, b1_ref, w2_ref, b2_ref,
                      out_ref, x_sc, lstm_sc, gru_sc):
    """Entire NeuralNet forward for one batch.

    ids_ref : (T*B, 1) int32 time-major token ids (row t*B+b = ids[b, t]), VMEM
    emb_ref : (Vpad, E) f32 zero-padded embedding table, VMEM
    lw_ref  : (2E+2H, 8H) block-diagonal packed bi-LSTM weights, lb_ref: (1, 8H)
    gw_ref  : (6H, 8H) block-diagonal packed bi-GRU weights,    gb_ref: (1, 8H)
    aw_ref  : (1, 2H) attention weight (transposed), ab_ref: (T, 1, 1) attention bias
    w1/b1, w2/b2 : linear layers
    out_ref : (B, C)
    x_sc    : (T, B, E)   pre-gathered embeddings
    lstm_sc : (T, B, 2H)  bi-LSTM outputs (lanes [0:H]=fwd, [H:2H]=bwd)
    gru_sc  : (T, B, 2H)  bi-GRU outputs
    """
    T, B, _ = x_sc.shape
    H = lstm_sc.shape[2] // 2
    vpad = emb_ref.shape[0]

    # ---------------- Stage 0: embedding gather as ONE one-hot matmul ----------------
    ids = ids_ref[...]                                               # (T*B, 1)
    cols = jax.lax.broadcasted_iota(jnp.int32, (T * B, vpad), 1)
    onehot = (cols == ids).astype(jnp.float32)                       # (T*B, Vpad)
    x_flat = jnp.dot(onehot, emb_ref[...],
                     preferred_element_type=jnp.float32)             # (T*B, E), exact
    for t in range(T):                                               # static, runs once
        x_sc[t] = x_flat[t * B:(t + 1) * B, :]

    # ---------------- Stage 1: bidirectional LSTM (both dirs in one matmul/step) ----
    lw, lb = lw_ref[...], lb_ref[...]                                # hoisted loads

    def lstm_step(t, carry):
        h, c = carry                                                 # (B, 2H) each
        rt = T - 1 - t
        lhs = jnp.concatenate([x_sc[t], x_sc[rt], h], axis=1)        # (B, 2E+2H)=(B,128)
        g = jnp.dot(lhs, lw, preferred_element_type=jnp.float32) + lb  # (B, 8H)
        sg = jax.nn.sigmoid(g[:, :6 * H])                            # i|f|o pairs only
        i = sg[:, 0:2 * H]
        f = sg[:, 2 * H:4 * H]
        o = sg[:, 4 * H:6 * H]
        gg = jnp.tanh(g[:, 6 * H:8 * H])                             # tanh only on g-gate
        c = f * c + i * gg
        h = o * jnp.tanh(c)
        lstm_sc[t, :, 0:H] = h[:, 0:H]                               # fwd half -> time t
        lstm_sc[rt, :, H:2 * H] = h[:, H:2 * H]                      # bwd half -> time rt
        return h, c

    zeros2 = jnp.zeros((B, 2 * H), jnp.float32)
    jax.lax.fori_loop(0, T, lstm_step, (zeros2, zeros2), unroll=True)

    # ---------------- Stage 2: bidirectional GRU (same fusion) ----------------
    gw, gb = gw_ref[...], gb_ref[...]

    def gru_step(t, h):
        rt = T - 1 - t
        lhs = jnp.concatenate([lstm_sc[t], lstm_sc[rt], h], axis=1)  # (B, 6H)=(B,192)
        g = jnp.dot(lhs, gw, preferred_element_type=jnp.float32) + gb  # (B, 8H)
        sg = jax.nn.sigmoid(g[:, :4 * H])                            # r|z pairs only
        r = sg[:, 0:2 * H]
        z = sg[:, 2 * H:4 * H]
        n = jnp.tanh(g[:, 4 * H:6 * H] + r * g[:, 6 * H:8 * H])      # Wih_n x + r*(Whh_n h + bhh_n)
        h = (1.0 - z) * n + z * h
        gru_sc[t, :, 0:H] = h[:, 0:H]
        gru_sc[rt, :, H:2 * H] = h[:, H:2 * H]
        return h

    jax.lax.fori_loop(0, T, gru_step, zeros2, unroll=True)

    # ---------------- Stage 3: attention + Linear/ReLU + Linear head ----------------
    g_all = gru_sc[...]                                    # (T, B, 2H) merged
    aw = aw_ref[...]                                       # (1, 2H)
    eij = jnp.sum(g_all * aw, axis=-1, keepdims=True)      # (T, B, 1)
    eij = jnp.tanh(eij + ab_ref[...])                      # ab: (T, 1, 1); runs once, tiny
    a = jnp.exp(eij)
    inv = pl.reciprocal(jnp.sum(a, axis=0, keepdims=True), approx=True)   # EUP slot
    a = a * inv + 1e-10                                    # matches torch: a/sum + eps
    weighted = jnp.sum(g_all * a, axis=0)                  # (B, 2H) -- no wf/wb concat

    h1 = jnp.dot(weighted, w1_ref[...],
                 preferred_element_type=jnp.float32) + b1_ref[...]
    h1 = jnp.maximum(h1, 0.0)                              # ReLU; Dropout = identity (eval)
    out_ref[...] = jnp.dot(h1, w2_ref[...],
                           preferred_element_type=jnp.float32) + b2_ref[...]


# ----------------------------- weight packing -----------------------------

def pack_params(p, hidden):
    """Pack raw (torch-layout-equivalent) params into fused-kernel operands."""
    H = hidden
    V, E = p["embedding"].shape
    Vp = ((V + 127) // 128) * 128
    emb = jnp.zeros((Vp, E), jnp.float32).at[:V].set(p["embedding"])

    # LSTM columns: [i_f i_b | f_f f_b | o_f o_b | g_f g_b]  (sigmoid on first 6H)
    def lstm_cols(w4, d):
        i, f, g, o = (w4[:, 0:H], w4[:, H:2 * H], w4[:, 2 * H:3 * H], w4[:, 3 * H:4 * H])
        z = jnp.zeros_like(i)
        parts = [i, z, f, z, o, z, g, z] if d == 0 else [z, i, z, f, z, o, z, g]
        return jnp.concatenate(parts, axis=1)

    lw = jnp.concatenate([lstm_cols(p["lstm_wih_f"], 0),      # rows 0:E      -> x_t
                          lstm_cols(p["lstm_wih_b"], 1),      # rows E:2E     -> x_{T-1-t}
                          lstm_cols(p["lstm_whh_f"], 0),      # rows 2E:2E+H  -> h_f
                          lstm_cols(p["lstm_whh_b"], 1)],     # rows 2E+H:    -> h_b
                         axis=0)                              # (2E+2H, 8H)
    lb = lstm_cols(p["lstm_b_f"], 0) + lstm_cols(p["lstm_b_b"], 1)   # (1, 8H)

    # GRU columns: [r_f r_b | z_f z_b | gin_f gin_b | ghn_f ghn_b]  (sigmoid on first 4H)
    def gru_cols(w3, d, kind):
        r, z, n = w3[:, 0:H], w3[:, H:2 * H], w3[:, 2 * H:3 * H]
        zero = jnp.zeros_like(r)
        gin = n if kind == "ih" else zero
        ghn = n if kind == "hh" else zero
        parts = ([r, zero, z, zero, gin, zero, ghn, zero] if d == 0
                 else [zero, r, zero, z, zero, gin, zero, ghn])
        return jnp.concatenate(parts, axis=1)

    gw = jnp.concatenate([gru_cols(p["gru_wih_f"], 0, "ih"),  # rows 0:2H   -> lstm_t
                          gru_cols(p["gru_wih_b"], 1, "ih"),  # rows 2H:4H  -> lstm_{T-1-t}
                          gru_cols(p["gru_whh_f"], 0, "hh"),  # rows 4H:5H  -> h_f
                          gru_cols(p["gru_whh_b"], 1, "hh")], # rows 5H:6H  -> h_b
                         axis=0)                              # (6H, 8H)
    gb = (gru_cols(p["gru_bih_f"], 0, "ih") + gru_cols(p["gru_bih_b"], 1, "ih")
          + gru_cols(p["gru_bhh_f"], 0, "hh") + gru_cols(p["gru_bhh_b"], 1, "hh"))

    T = p["attn_b"].shape[-1]
    return dict(
        emb=emb, lw=lw, lb=lb, gw=gw, gb=gb,
        attn_w=p["attn_w"],                                   # (1, 2H)
        attn_b=p["attn_b"].reshape(T, 1, 1),                  # (T, 1, 1)
        w1=p["lin1_w"], b1=p["lin1_b"], w2=p["lin2_w"], b2=p["lin2_b"],
    )


# ----------------------------- wrapper -----------------------------

def neural_net_forward(packed, x_ids):
    B, T = x_ids.shape
    H = packed["lw"].shape[1] // 8
    E = packed["emb"].shape[1]
    C = packed["w2"].shape[1]
    # time-major flattened ids: row t*B+b = x_ids[b, t]
    ids_flat = jnp.transpose(x_ids).reshape(T * B, 1).astype(jnp.int32)

    vmem = pl.BlockSpec(memory_space=pltpu.MemorySpace.VMEM)
    fused = pl.pallas_call(
        _fused_net_kernel,
        out_shape=jax.ShapeDtypeStruct((B, C), jnp.float32),
        in_specs=[vmem] * 12,
        out_specs=vmem,
        scratch_shapes=[pltpu.VMEM((T, B, E), jnp.float32),       # pre-gathered x
                        pltpu.VMEM((T, B, 2 * H), jnp.float32),   # bi-LSTM outputs
                        pltpu.VMEM((T, B, 2 * H), jnp.float32)],  # bi-GRU outputs
    )
    return fused(ids_flat, packed["emb"], packed["lw"], packed["lb"],
                 packed["gw"], packed["gb"], packed["attn_w"], packed["attn_b"],
                 packed["w1"], packed["b1"], packed["w2"], packed["b2"])


# ----------------------------- pure-JAX reference -----------------------------

def _ref_lstm_dir(x_tbe, wih, whh, b, hidden):
    bsz = x_tbe.shape[1]

    def step(carry, xt):
        h, c = carry
        gates = xt @ wih + h @ whh + b[0]
        i = jax.nn.sigmoid(gates[:, :hidden])
        f = jax.nn.sigmoid(gates[:, hidden:2 * hidden])
        g = jnp.tanh(gates[:, 2 * hidden:3 * hidden])
        o = jax.nn.sigmoid(gates[:, 3 * hidden:])
        c = f * c + i * g
        h = o * jnp.tanh(c)
        return (h, c), h

    init = (jnp.zeros((bsz, hidden)), jnp.zeros((bsz, hidden)))
    _, hs = jax.lax.scan(step, init, x_tbe)
    return hs


def _ref_gru_dir(x_tbe, wih, whh, bih, bhh, hidden):
    bsz = x_tbe.shape[1]

    def step(h, xt):
        gi = xt @ wih + bih[0]
        gh = h @ whh + bhh[0]
        r = jax.nn.sigmoid(gi[:, :hidden] + gh[:, :hidden])
        z = jax.nn.sigmoid(gi[:, hidden:2 * hidden] + gh[:, hidden:2 * hidden])
        n = jnp.tanh(gi[:, 2 * hidden:] + r * gh[:, 2 * hidden:])
        h = (1.0 - z) * n + z * h
        return h, h

    _, hs = jax.lax.scan(step, jnp.zeros((bsz, hidden)), x_tbe)
    return hs


def reference_forward(params, x_ids, hidden):
    emb = jnp.take(params["embedding"], x_ids, axis=0)
    x_tbe = jnp.transpose(emb, (1, 0, 2))
    lf = _ref_lstm_dir(x_tbe, params["lstm_wih_f"], params["lstm_whh_f"], params["lstm_b_f"], hidden)
    lb = _ref_lstm_dir(x_tbe[::-1], params["lstm_wih_b"], params["lstm_whh_b"], params["lstm_b_b"], hidden)[::-1]
    h_lstm = jnp.concatenate([lf, lb], axis=-1)
    gf = _ref_gru_dir(h_lstm, params["gru_wih_f"], params["gru_whh_f"],
                      params["gru_bih_f"], params["gru_bhh_f"], hidden)
    gb = _ref_gru_dir(h_lstm[::-1], params["gru_wih_b"], params["gru_whh_b"],
                      params["gru_bih_b"], params["gru_bhh_b"], hidden)[::-1]
    h_gru = jnp.transpose(jnp.concatenate([gf, gb], axis=-1), (1, 0, 2))   # (B, T, 2H)

    eij = jnp.tanh(jnp.sum(h_gru * params["attn_w"], axis=-1) + params["attn_b"])
    a = jnp.exp(eij)
    a = a / jnp.sum(a, axis=1, keepdims=True) + 1e-10
    weighted = jnp.sum(h_gru * a[:, :, None], axis=1)
    h = jnp.maximum(weighted @ params["lin1_w"] + params["lin1_b"], 0.0)
    return h @ params["lin2_w"] + params["lin2_b"]


# ----------------------------- params -----------------------------

def init_params(key, vocab, embed, hidden, maxlen, linear_size, n_classes):
    keys = iter(jax.random.split(key, 32))

    def u(shape, scale=0.1):
        return jax.random.uniform(next(keys), shape, jnp.float32, -scale, scale)

    p = {}
    p["embedding"] = u((vocab, embed), 0.5)
    for d in ("f", "b"):
        p[f"lstm_wih_{d}"] = u((embed, 4 * hidden))
        p[f"lstm_whh_{d}"] = u((hidden, 4 * hidden))
        p[f"lstm_b_{d}"] = u((1, 4 * hidden))
    for d in ("f", "b"):
        p[f"gru_wih_{d}"] = u((2 * hidden, 3 * hidden))
        p[f"gru_whh_{d}"] = u((hidden, 3 * hidden))
        p[f"gru_bih_{d}"] = u((1, 3 * hidden))
        p[f"gru_bhh_{d}"] = u((1, 3 * hidden))
    p["attn_w"] = u((1, 2 * hidden))              # torch Attention.weight (2H,1), stored transposed
    p["attn_b"] = u((1, maxlen))                  # attention bias (non-zero to exercise the path)
    p["lin1_w"] = u((2 * hidden, linear_size))
    p["lin1_b"] = u((1, linear_size))
    p["lin2_w"] = u((linear_size, n_classes))
    p["lin2_b"] = u((1, n_classes))
    return p


# ----------------------------- main -----------------------------

if __name__ == "__main__":
    B, T, E, H, L, C, V = 2, 8, 32, 32, 32, 9, 50   # batch, maxlen, embed, hidden, linear, classes, vocab
    key = jax.random.PRNGKey(0)
    pkey, xkey = jax.random.split(key)
    params = init_params(pkey, V, E, H, T, L, C)
    x_ids = jax.random.randint(xkey, (B, T), 0, V, dtype=jnp.int32)

    packed = pack_params(params, H)                 # one-time weight packing (host/XLA)
    fwd = jax.jit(neural_net_forward)
    out = jax.block_until_ready(fwd(packed, x_ids))
    assert out.shape == (B, C), out.shape

    ref = reference_forward(params, x_ids, H)
    assert bool(jnp.allclose(out, ref, rtol=1e-3, atol=1e-3)), (out, ref)

    print("KERNEL_OK")
</pallas_src>

<mosaic_0001>
module attributes {stable_mosaic.version = 11 : i64} {
  func.func @_fused_net_kernel(%arg0: memref<16x1xi32, #tpu.memory_space<vmem>>, %arg1: memref<128x32xf32, #tpu.memory_space<vmem>>, %arg2: memref<128x256xf32, #tpu.memory_space<vmem>>, %arg3: memref<1x256xf32, #tpu.memory_space<vmem>>, %arg4: memref<192x256xf32, #tpu.memory_space<vmem>>, %arg5: memref<1x256xf32, #tpu.memory_space<vmem>>, %arg6: memref<1x64xf32, #tpu.memory_space<vmem>>, %arg7: memref<8x1x1xf32, #tpu.memory_space<vmem>>, %arg8: memref<64x32xf32, #tpu.memory_space<vmem>>, %arg9: memref<1x32xf32, #tpu.memory_space<vmem>>, %arg10: memref<32x9xf32, #tpu.memory_space<vmem>>, %arg11: memref<1x9xf32, #tpu.memory_space<vmem>>, %arg12: memref<2x9xf32, #tpu.memory_space<vmem>>, %arg13: memref<8x2x32xf32, #tpu.memory_space<vmem>>, %arg14: memref<8x2x64xf32, #tpu.memory_space<vmem>>, %arg15: memref<8x2x64xf32, #tpu.memory_space<vmem>>) attributes {dimension_semantics = [], scalar_prefetch = 0 : i64, scratch_operands = 3 : i64, tpu.core_type = #tpu.core_type<tc>} {
    %c0 = arith.constant 0 : index
    %c0_0 = arith.constant 0 : index
    %0 = vector.load %arg0[%c0, %c0_0] : memref<16x1xi32, #tpu.memory_space<vmem>>, vector<16x1xi32>
    %1 = tpu.iota {dimensions = array<i32: 1>} : vector<16x128xi32>
    %2 = vector.broadcast %0 : vector<16x1xi32> to vector<16x128xi32>
    %3 = arith.cmpi eq, %1, %2 : vector<16x128xi32>
    %4 = arith.extui %3 : vector<16x128xi1> to vector<16x128xi32>
    %5 = arith.sitofp %4 : vector<16x128xi32> to vector<16x128xf32>
    %c0_1 = arith.constant 0 : index
    %c0_2 = arith.constant 0 : index
    %6 = vector.load %arg1[%c0_1, %c0_2] : memref<128x32xf32, #tpu.memory_space<vmem>>, vector<128x32xf32>
    %cst = arith.constant dense<0.000000e+00> : vector<16x32xf32>
    %7 = tpu.matmul %5, %6, %cst {dimension_numbers = #tpu.dot_dimension_numbers<[1], [0], [0], [1], [0, 0, 1, 1], [], []>} : vector<16x128xf32>, vector<128x32xf32>, vector<16x32xf32> -> vector<16x32xf32>
    %8 = vector.extract_strided_slice %7 {offsets = [0, 0], sizes = [2, 32], strides = [1, 1]} : vector<16x32xf32> to vector<2x32xf32>
    %c0_3 = arith.constant 0 : index
    %c0_4 = arith.constant 0 : index
    %c0_5 = arith.constant 0 : index
    %9 = vector.load %arg13[%c0_3, %c0_4, %c0_5] : memref<8x2x32xf32, #tpu.memory_space<vmem>>, vector<1x2x32xf32>
    %10 = vector.shape_cast %9 : vector<1x2x32xf32> to vector<2x32xf32>
    %11 = vector.shape_cast %8 : vector<2x32xf32> to vector<1x2x32xf32>
    tpu.vector_store %arg13[%c0_3, %c0_4, %c0_5], %11 {strides = array<i32>} : memref<8x2x32xf32, #tpu.memory_space<vmem>>, vector<1x2x32xf32>,
    %12 = vector.extract_strided_slice %7 {offsets = [2, 0], sizes = [2, 32], strides = [1, 1]} : vector<16x32xf32> to vector<2x32xf32>
    %c1 = arith.constant 1 : index
    %c0_6 = arith.constant 0 : index
    %c0_7 = arith.constant 0 : index
    %13 = vector.load %arg13[%c1, %c0_6, %c0_7] : memref<8x2x32xf32, #tpu.memory_space<vmem>>, vector<1x2x32xf32>
    %14 = vector.shape_cast %13 : vector<1x2x32xf32> to vector<2x32xf32>
    %15 = vector.shape_cast %12 : vector<2x32xf32> to vector<1x2x32xf32>
    tpu.vector_store %arg13[%c1, %c0_6, %c0_7], %15 {strides = array<i32>} : memref<8x2x32xf32, #tpu.memory_space<vmem>>, vector<1x2x32xf32>,
    %16 = vector.extract_strided_slice %7 {offsets = [4, 0], sizes = [2, 32], strides = [1, 1]} : vector<16x32xf32> to vector<2x32xf32>
    %c2 = arith.constant 2 : index
    %c0_8 = arith.constant 0 : index
    %c0_9 = arith.constant 0 : index
    %17 = vector.load %arg13[%c2, %c0_8, %c0_9] : memref<8x2x32xf32, #tpu.memory_space<vmem>>, vector<1x2x32xf32>
    %18 = vector.shape_cast %17 : vector<1x2x32xf32> to vector<2x32xf32>
    %19 = vector.shape_cast %16 : vector<2x32xf32> to vector<1x2x32xf32>
    tpu.vector_store %arg13[%c2, %c0_8, %c0_9], %19 {strides = array<i32>} : memref<8x2x32xf32, #tpu.memory_space<vmem>>, vector<1x2x32xf32>,
    %20 = vector.extract_strided_slice %7 {offsets = [6, 0], sizes = [2, 32], strides = [1, 1]} : vector<16x32xf32> to vector<2x32xf32>
    %c3 = arith.constant 3 : index
    %c0_10 = arith.constant 0 : index
    %c0_11 = arith.constant 0 : index
    %21 = vector.load %arg13[%c3, %c0_10, %c0_11] : memref<8x2x32xf32, #tpu.memory_space<vmem>>, vector<1x2x32xf32>
    %22 = vector.shape_cast %21 : vector<1x2x32xf32> to vector<2x32xf32>
    %23 = vector.shape_cast %20 : vector<2x32xf32> to vector<1x2x32xf32>
    tpu.vector_store %arg13[%c3, %c0_10, %c0_11], %23 {strides = array<i32>} : memref<8x2x32xf32, #tpu.memory_space<vmem>>, vector<1x2x32xf32>,
    %24 = vector.extract_strided_slice %7 {offsets = [8, 0], sizes = [2, 32], strides = [1, 1]} : vector<16x32xf32> to vector<2x32xf32>
    %c4 = arith.constant 4 : index
    %c0_12 = arith.constant 0 : index
    %c0_13 = arith.constant 0 : index
    %25 = vector.load %arg13[%c4, %c0_12, %c0_13] : memref<8x2x32xf32, #tpu.memory_space<vmem>>, vector<1x2x32xf32>
    %26 = vector.shape_cast %25 : vector<1x2x32xf32> to vector<2x32xf32>
    %27 = vector.shape_cast %24 : vector<2x32xf32> to vector<1x2x32xf32>
    tpu.vector_store %arg13[%c4, %c0_12, %c0_13], %27 {strides = array<i32>} : memref<8x2x32xf32, #tpu.memory_space<vmem>>, vector<1x2x32xf32>,
    %28 = vector.extract_strided_slice %7 {offsets = [10, 0], sizes = [2, 32], strides = [1, 1]} : vector<16x32xf32> to vector<2x32xf32>
    %c5 = arith.constant 5 : index
    %c0_14 = arith.constant 0 : index
    %c0_15 = arith.constant 0 : index
    %29 = vector.load %arg13[%c5, %c0_14, %c0_15] : memref<8x2x32xf32, #tpu.memory_space<vmem>>, vector<1x2x32xf32>
    %30 = vector.shape_cast %29 : vector<1x2x32xf32> to vector<2x32xf32>
    %31 = vector.shape_cast %28 : vector<2x32xf32> to vector<1x2x32xf32>
    tpu.vector_store %arg13[%c5, %c0_14, %c0_15], %31 {strides = array<i32>} : memref<8x2x32xf32, #tpu.memory_space<vmem>>, vector<1x2x32xf32>,
    %32 = vector.extract_strided_slice %7 {offsets = [12, 0], sizes = [2, 32], strides = [1, 1]} : vector<16x32xf32> to vector<2x32xf32>
    %c6 = arith.constant 6 : index
    %c0_16 = arith.constant 0 : index
    %c0_17 = arith.constant 0 : index
    %33 = vector.load %arg13[%c6, %c0_16, %c0_17] : memref<8x2x32xf32, #tpu.memory_space<vmem>>, vector<1x2x32xf32>
    %34 = vector.shape_cast %33 : vector<1x2x32xf32> to vector<2x32xf32>
    %35 = vector.shape_cast %32 : vector<2x32xf32> to vector<1x2x32xf32>
    tpu.vector_store %arg13[%c6, %c0_16, %c0_17], %35 {strides = array<i32>} : memref<8x2x32xf32, #tpu.memory_space<vmem>>, vector<1x2x32xf32>,
    %36 = vector.extract_strided_slice %7 {offsets = [14, 0], sizes = [2, 32], strides = [1, 1]} : vector<16x32xf32> to vector<2x32xf32>
    %c7 = arith.constant 7 : index
    %c0_18 = arith.constant 0 : index
    %c0_19 = arith.constant 0 : index
    %37 = vector.load %arg13[%c7, %c0_18, %c0_19] : memref<8x2x32xf32, #tpu.memory_space<vmem>>, vector<1x2x32xf32>
    %38 = vector.shape_cast %37 : vector<1x2x32xf32> to vector<2x32xf32>
    %39 = vector.shape_cast %36 : vector<2x32xf32> to vector<1x2x32xf32>
    tpu.vector_store %arg13[%c7, %c0_18, %c0_19], %39 {strides = array<i32>} : memref<8x2x32xf32, #tpu.memory_space<vmem>>, vector<1x2x32xf32>,
    %c0_20 = arith.constant 0 : index
    %c0_21 = arith.constant 0 : index
    %40 = vector.load %arg2[%c0_20, %c0_21] : memref<128x256xf32, #tpu.memory_space<vmem>>, vector<128x256xf32>
    %c0_22 = arith.constant 0 : index
    %c0_23 = arith.constant 0 : index
    %41 = vector.load %arg3[%c0_22, %c0_23] : memref<1x256xf32, #tpu.memory_space<vmem>>, vector<1x256xf32>
    %cst_24 = arith.constant 0.000000e+00 : f32
    %42 = vector.broadcast %cst_24 : f32 to vector<2x64xf32>
    %c0_i32 = arith.constant 0 : i32
    %c7_i32 = arith.constant 7 : i32
    %43 = arith.subi %c7_i32, %c0_i32 : i32
    %44 = arith.index_cast %c0_i32 : i32 to index
    %c0_25 = arith.constant 0 : index
    %c0_26 = arith.constant 0 : index
    %45 = vector.load %arg13[%44, %c0_25, %c0_26] : memref<8x2x32xf32, #tpu.memory_space<vmem>>, vector<1x2x32xf32>
    %46 = vector.shape_cast %45 : vector<1x2x32xf32> to vector<2x32xf32>
    %47 = arith.index_cast %43 : i32 to index
    %c0_27 = arith.constant 0 : index
    %c0_28 = arith.constant 0 : index
    %48 = vector.load %arg13[%47, %c0_27, %c0_28] : memref<8x2x32xf32, #tpu.memory_space<vmem>>, vector<1x2x32xf32>
    %49 = vector.shape_cast %48 : vector<1x2x32xf32> to vector<2x32xf32>
    %50 = tpu.concatenate %46, %49, %42 in 1 : vector<2x32xf32>, vector<2x32xf32>, vector<2x64xf32> -> vector<2x128xf32>
    %cst_29 = arith.constant dense<0.000000e+00> : vector<2x256xf32>
    %51 = tpu.matmul %50, %40, %cst_29 {dimension_numbers = #tpu.dot_dimension_numbers<[1], [0], [0], [1], [0, 0, 1, 1], [], []>} : vector<2x128xf32>, vector<128x256xf32>, vector<2x256xf32> -> vector<2x256xf32>
    %52 = vector.broadcast %41 : vector<1x256xf32> to vector<2x256xf32>
    %53 = arith.addf %51, %52 : vector<2x256xf32>
    %54 = vector.extract_strided_slice %53 {offsets = [0, 0], sizes = [2, 192], strides = [1, 1]} : vector<2x256xf32> to vector<2x192xf32>
    %55 = arith.negf %54 : vector<2x192xf32>
    %56 = math.exp %55 : vector<2x192xf32>
    %cst_30 = arith.constant 1.000000e+00 : f32
    %57 = vector.broadcast %cst_30 : f32 to vector<2x192xf32>
    %58 = arith.addf %57, %56 : vector<2x192xf32>
    %59 = arith.divf %57, %58 : vector<2x192xf32>
    %60 = vector.extract_strided_slice %59 {offsets = [0, 0], sizes = [2, 64], strides = [1, 1]} : vector<2x192xf32> to vector<2x64xf32>
    %61 = vector.extract_strided_slice %59 {offsets = [0, 64], sizes = [2, 64], strides = [1, 1]} : vector<2x192xf32> to vector<2x64xf32>
    %62 = vector.extract_strided_slice %59 {offsets = [0, 128], sizes = [2, 64], strides = [1, 1]} : vector<2x192xf32> to vector<2x64xf32>
    %63 = vector.extract_strided_slice %53 {offsets = [0, 192], sizes = [2, 64], strides = [1, 1]} : vector<2x256xf32> to vector<2x64xf32>
    %64 = math.tanh %63 : vector<2x64xf32>
    %65 = arith.mulf %61, %42 : vector<2x64xf32>
    %66 = arith.mulf %60, %64 : vector<2x64xf32>
    %67 = arith.addf %65, %66 : vector<2x64xf32>
    %68 = math.tanh %67 : vector<2x64xf32>
    %69 = arith.mulf %62, %68 : vector<2x64xf32>
    %70 = vector.extract_strided_slice %69 {offsets = [0, 0], sizes = [2, 32], strides = [1, 1]} : vector<2x64xf32> to vector<2x32xf32>
    %71 = arith.index_cast %c0_i32 : i32 to index
    %c0_31 = arith.constant 0 : index
    %c0_32 = arith.constant 0 : index
    %72 = vector.load %arg14[%71, %c0_31, %c0_32] : memref<8x2x64xf32, #tpu.memory_space<vmem>>, vector<1x2x32xf32>
    %73 = vector.shape_cast %72 : vector<1x2x32xf32> to vector<2x32xf32>
    %74 = vector.shape_cast %70 : vector<2x32xf32> to vector<1x2x32xf32>
    tpu.vector_store %arg14[%71, %c0_31, %c0_32], %74 {strides = array<i32>} : memref<8x2x64xf32, #tpu.memory_space<vmem>>, vector<1x2x32xf32>,
    %75 = vector.extract_strided_slice %69 {offsets = [0, 32], sizes = [2, 32], strides = [1, 1]} : vector<2x64xf32> to vector<2x32xf32>
    %76 = arith.index_cast %43 : i32 to index
    %c0_33 = arith.constant 0 : index
    %c32 = arith.constant 32 : index
    %77 = vector.load %arg14[%76, %c0_33, %c32] : memref<8x2x64xf32, #tpu.memory_space<vmem>>, vector<1x2x32xf32>
    %78 = vector.shape_cast %77 : vector<1x2x32xf32> to vector<2x32xf32>
    %79 = vector.shape_cast %75 : vector<2x32xf32> to vector<1x2x32xf32>
    tpu.vector_store %arg14[%76, %c0_33, %c32], %79 {strides = array<i32>} : memref<8x2x64xf32, #tpu.memory_space<vmem>>, vector<1x2x32xf32>,
    %c1_i32 = arith.constant 1 : i32
    %c7_i32_34 = arith.constant 7 : i32
    %80 = arith.subi %c7_i32_34, %c1_i32 : i32
    %81 = arith.index_cast %c1_i32 : i32 to index
    %c0_35 = arith.constant 0 : index
    %c0_36 = arith.constant 0 : index
    %82 = vector.load %arg13[%81, %c0_35, %c0_36] : memref<8x2x32xf32, #tpu.memory_space<vmem>>, vector<1x2x32xf32>
    %83 = vector.shape_cast %82 : vector<1x2x32xf32> to vector<2x32xf32>
    %84 = arith.index_cast %80 : i32 to index
    %c0_37 = arith.constant 0 : index
    %c0_38 = arith.constant 0 : index
    %85 = vector.load %arg13[%84, %c0_37, %c0_38] : memref<8x2x32xf32, #tpu.memory_space<vmem>>, vector<1x2x32xf32>
    %86 = vector.shape_cast %85 : vector<1x2x32xf32> to vector<2x32xf32>
    %87 = tpu.concatenate %83, %86, %69 in 1 : vector<2x32xf32>, vector<2x32xf32>, vector<2x64xf32> -> vector<2x128xf32>
    %cst_39 = arith.constant dense<0.000000e+00> : vector<2x256xf32>
    %88 = tpu.matmul %87, %40, %cst_39 {dimension_numbers = #tpu.dot_dimension_numbers<[1], [0], [0], [1], [0, 0, 1, 1], [], []>} : vector<2x128xf32>, vector<128x256xf32>, vector<2x256xf32> -> vector<2x256xf32>
    %89 = vector.broadcast %41 : vector<1x256xf32> to vector<2x256xf32>
    %90 = arith.addf %88, %89 : vector<2x256xf32>
    %91 = vector.extract_strided_slice %90 {offsets = [0, 0], sizes = [2, 192], strides = [1, 1]} : vector<2x256xf32> to vector<2x192xf32>
    %92 = arith.negf %91 : vector<2x192xf32>
    %93 = math.exp %92 : vector<2x192xf32>
    %cst_40 = arith.constant 1.000000e+00 : f32
    %94 = vector.broadcast %cst_40 : f32 to vector<2x192xf32>
    %95 = arith.addf %94, %93 : vector<2x192xf32>
    %96 = arith.divf %94, %95 : vector<2x192xf32>
    %97 = vector.extract_strided_slice %96 {offsets = [0, 0], sizes = [2, 64], strides = [1, 1]} : vector<2x192xf32> to vector<2x64xf32>
    %98 = vector.extract_strided_slice %96 {offsets = [0, 64], sizes = [2, 64], strides = [1, 1]} : vector<2x192xf32> to vector<2x64xf32>
    %99 = vector.extract_strided_slice %96 {offsets = [0, 128], sizes = [2, 64], strides = [1, 1]} : vector<2x192xf32> to vector<2x64xf32>
    %100 = vector.extract_strided_slice %90 {offsets = [0, 192], sizes = [2, 64], strides = [1, 1]} : vector<2x256xf32> to vector<2x64xf32>
    %101 = math.tanh %100 : vector<2x64xf32>
    %102 = arith.mulf %98, %67 : vector<2x64xf32>
    %103 = arith.mulf %97, %101 : vector<2x64xf32>
    %104 = arith.addf %102, %103 : vector<2x64xf32>
    %105 = math.tanh %104 : vector<2x64xf32>
    %106 = arith.mulf %99, %105 : vector<2x64xf32>
    %107 = vector.extract_strided_slice %106 {offsets = [0, 0], sizes = [2, 32], strides = [1, 1]} : vector<2x64xf32> to vector<2x32xf32>
    %108 = arith.index_cast %c1_i32 : i32 to index
    %c0_41 = arith.constant 0 : index
    %c0_42 = arith.constant 0 : index
    %109 = vector.load %arg14[%108, %c0_41, %c0_42] : memref<8x2x64xf32, #tpu.memory_space<vmem>>, vector<1x2x32xf32>
    %110 = vector.shape_cast %109 : vector<1x2x32xf32> to vector<2x32xf32>
    %111 = vector.shape_cast %107 : vector<2x32xf32> to vector<1x2x32xf32>
    tpu.vector_store %arg14[%108, %c0_41, %c0_42], %111 {strides = array<i32>} : memref<8x2x64xf32, #tpu.memory_space<vmem>>, vector<1x2x32xf32>,
    %112 = vector.extract_strided_slice %106 {offsets = [0, 32], sizes = [2, 32], strides = [1, 1]} : vector<2x64xf32> to vector<2x32xf32>
    %113 = arith.index_cast %80 : i32 to index
    %c0_43 = arith.constant 0 : index
    %c32_44 = arith.constant 32 : index
    %114 = vector.load %arg14[%113, %c0_43, %c32_44] : memref<8x2x64xf32, #tpu.memory_space<vmem>>, vector<1x2x32xf32>
    %115 = vector.shape_cast %114 : vector<1x2x32xf32> to vector<2x32xf32>
    %116 = vector.shape_cast %112 : vector<2x32xf32> to vector<1x2x32xf32>
    tpu.vector_store %arg14[%113, %c0_43, %c32_44], %116 {strides = array<i32>} : memref<8x2x64xf32, #tpu.memory_space<vmem>>, vector<1x2x32xf32>,
    %c2_i32 = arith.constant 2 : i32
    %c7_i32_45 = arith.constant 7 : i32
    %117 = arith.subi %c7_i32_45, %c2_i32 : i32
    %118 = arith.index_cast %c2_i32 : i32 to index
    %c0_46 = arith.constant 0 : index
    %c0_47 = arith.constant 0 : index
    %119 = vector.load %arg13[%118, %c0_46, %c0_47] : memref<8x2x32xf32, #tpu.memory_space<vmem>>, vector<1x2x32xf32>
    %120 = vector.shape_cast %119 : vector<1x2x32xf32> to vector<2x32xf32>
    %121 = arith.index_cast %117 : i32 to index
    %c0_48 = arith.constant 0 : index
    %c0_49 = arith.constant 0 : index
    %122 = vector.load %arg13[%121, %c0_48, %c0_49] : memref<8x2x32xf32, #tpu.memory_space<vmem>>, vector<1x2x32xf32>
    %123 = vector.shape_cast %122 : vector<1x2x32xf32> to vector<2x32xf32>
    %124 = tpu.concatenate %120, %123, %106 in 1 : vector<2x32xf32>, vector<2x32xf32>, vector<2x64xf32> -> vector<2x128xf32>
    %cst_50 = arith.constant dense<0.000000e+00> : vector<2x256xf32>
    %125 = tpu.matmul %124, %40, %cst_50 {dimension_numbers = #tpu.dot_dimension_numbers<[1], [0], [0], [1], [0, 0, 1, 1], [], []>} : vector<2x128xf32>, vector<128x256xf32>, vector<2x256xf32> -> vector<2x256xf32>
    %126 = vector.broadcast %41 : vector<1x256xf32> to vector<2x256xf32>
    %127 = arith.addf %125, %126 : vector<2x256xf32>
    %128 = vector.extract_strided_slice %127 {offsets = [0, 0], sizes = [2, 192], strides = [1, 1]} : vector<2x256xf32> to vector<2x192xf32>
    %129 = arith.negf %128 : vector<2x192xf32>
    %130 = math.exp %129 : vector<2x192xf32>
    %cst_51 = arith.constant 1.000000e+00 : f32
    %131 = vector.broadcast %cst_51 : f32 to vector<2x192xf32>
    %132 = arith.addf %131, %130 : vector<2x192xf32>
    %133 = arith.divf %131, %132 : vector<2x192xf32>
    %134 = vector.extract_strided_slice %133 {offsets = [0, 0], sizes = [2, 64], strides = [1, 1]} : vector<2x192xf32> to vector<2x64xf32>
    %135 = vector.extract_strided_slice %133 {offsets = [0, 64], sizes = [2, 64], strides = [1, 1]} : vector<2x192xf32> to vector<2x64xf32>
    %136 = vector.extract_strided_slice %133 {offsets = [0, 128], sizes = [2, 64], strides = [1, 1]} : vector<2x192xf32> to vector<2x64xf32>
    %137 = vector.extract_strided_slice %127 {offsets = [0, 192], sizes = [2, 64], strides = [1, 1]} : vector<2x256xf32> to vector<2x64xf32>
    %138 = math.tanh %137 : vector<2x64xf32>
    %139 = arith.mulf %135, %104 : vector<2x64xf32>
    %140 = arith.mulf %134, %138 : vector<2x64xf32>
    %141 = arith.addf %139, %140 : vector<2x64xf32>
    %142 = math.tanh %141 : vector<2x64xf32>
    %143 = arith.mulf %136, %142 : vector<2x64xf32>
    %144 = vector.extract_strided_slice %143 {offsets = [0, 0], sizes = [2, 32], strides = [1, 1]} : vector<2x64xf32> to vector<2x32xf32>
    %145 = arith.index_cast %c2_i32 : i32 to index
    %c0_52 = arith.constant 0 : index
    %c0_53 = arith.constant 0 : index
    %146 = vector.load %arg14[%145, %c0_52, %c0_53] : memref<8x2x64xf32, #tpu.memory_space<vmem>>, vector<1x2x32xf32>
    %147 = vector.shape_cast %146 : vector<1x2x32xf32> to vector<2x32xf32>
    %148 = vector.shape_cast %144 : vector<2x32xf32> to vector<1x2x32xf32>
    tpu.vector_store %arg14[%145, %c0_52, %c0_53], %148 {strides = array<i32>} : memref<8x2x64xf32, #tpu.memory_space<vmem>>, vector<1x2x32xf32>,
    %149 = vector.extract_strided_slice %143 {offsets = [0, 32], sizes = [2, 32], strides = [1, 1]} : vector<2x64xf32> to vector<2x32xf32>
    %150 = arith.index_cast %117 : i32 to index
    %c0_54 = arith.constant 0 : index
    %c32_55 = arith.constant 32 : index
    %151 = vector.load %arg14[%150, %c0_54, %c32_55] : memref<8x2x64xf32, #tpu.memory_space<vmem>>, vector<1x2x32xf32>
    %152 = vector.shape_cast %151 : vector<1x2x32xf32> to vector<2x32xf32>
    %153 = vector.shape_cast %149 : vector<2x32xf32> to vector<1x2x32xf32>
    tpu.vector_store %arg14[%150, %c0_54, %c32_55], %153 {strides = array<i32>} : memref<8x2x64xf32, #tpu.memory_space<vmem>>, vector<1x2x32xf32>,
    %c3_i32 = arith.constant 3 : i32
    %c7_i32_56 = arith.constant 7 : i32
    %154 = arith.subi %c7_i32_56, %c3_i32 : i32
    %155 = arith.index_cast %c3_i32 : i32 to index
    %c0_57 = arith.constant 0 : index
    %c0_58 = arith.constant 0 : index
    %156 = vector.load %arg13[%155, %c0_57, %c0_58] : memref<8x2x32xf32, #tpu.memory_space<vmem>>, vector<1x2x32xf32>
    %157 = vector.shape_cast %156 : vector<1x2x32xf32> to vector<2x32xf32>
    %158 = arith.index_cast %154 : i32 to index
    %c0_59 = arith.constant 0 : index
    %c0_60 = arith.constant 0 : index
    %159 = vector.load %arg13[%158, %c0_59, %c0_60] : memref<8x2x32xf32, #tpu.memory_space<vmem>>, vector<1x2x32xf32>
    %160 = vector.shape_cast %159 : vector<1x2x32xf32> to vector<2x32xf32>
    %161 = tpu.concatenate %157, %160, %143 in 1 : vector<2x32xf32>, vector<2x32xf32>, vector<2x64xf32> -> vector<2x128xf32>
    %cst_61 = arith.constant dense<0.000000e+00> : vector<2x256xf32>
    %162 = tpu.matmul %161, %40, %cst_61 {dimension_numbers = #tpu.dot_dimension_numbers<[1], [0], [0], [1], [0, 0, 1, 1], [], []>} : vector<2x128xf32>, vector<128x256xf32>, vector<2x256xf32> -> vector<2x256xf32>
    %163 = vector.broadcast %41 : vector<1x256xf32> to vector<2x256xf32>
    %164 = arith.addf %162, %163 : vector<2x256xf32>
    %165 = vector.extract_strided_slice %164 {offsets = [0, 0], sizes = [2, 192], strides = [1, 1]} : vector<2x256xf32> to vector<2x192xf32>
    %166 = arith.negf %165 : vector<2x192xf32>
    %167 = math.exp %166 : vector<2x192xf32>
    %cst_62 = arith.constant 1.000000e+00 : f32
    %168 = vector.broadcast %cst_62 : f32 to vector<2x192xf32>
    %169 = arith.addf %168, %167 : vector<2x192xf32>
    %170 = arith.divf %168, %169 : vector<2x192xf32>
    %171 = vector.extract_strided_slice %170 {offsets = [0, 0], sizes = [2, 64], strides = [1, 1]} : vector<2x192xf32> to vector<2x64xf32>
    %172 = vector.extract_strided_slice %170 {offsets = [0, 64], sizes = [2, 64], strides = [1, 1]} : vector<2x192xf32> to vector<2x64xf32>
    %173 = vector.extract_strided_slice %170 {offsets = [0, 128], sizes = [2, 64], strides = [1, 1]} : vector<2x192xf32> to vector<2x64xf32>
    %174 = vector.extract_strided_slice %164 {offsets = [0, 192], sizes = [2, 64], strides = [1, 1]} : vector<2x256xf32> to vector<2x64xf32>
    %175 = math.tanh %174 : vector<2x64xf32>
    %176 = arith.mulf %172, %141 : vector<2x64xf32>
    %177 = arith.mulf %171, %175 : vector<2x64xf32>
    %178 = arith.addf %176, %177 : vector<2x64xf32>
    %179 = math.tanh %178 : vector<2x64xf32>
    %180 = arith.mulf %173, %179 : vector<2x64xf32>
    %181 = vector.extract_strided_slice %180 {offsets = [0, 0], sizes = [2, 32], strides = [1, 1]} : vector<2x64xf32> to vector<2x32xf32>
    %182 = arith.index_cast %c3_i32 : i32 to index
    %c0_63 = arith.constant 0 : index
    %c0_64 = arith.constant 0 : index
    %183 = vector.load %arg14[%182, %c0_63, %c0_64] : memref<8x2x64xf32, #tpu.memory_space<vmem>>, vector<1x2x32xf32>
    %184 = vector.shape_cast %183 : vector<1x2x32xf32> to vector<2x32xf32>
    %185 = vector.shape_cast %181 : vector<2x32xf32> to vector<1x2x32xf32>
    tpu.vector_store %arg14[%182, %c0_63, %c0_64], %185 {strides = array<i32>} : memref<8x2x64xf32, #tpu.memory_space<vmem>>, vector<1x2x32xf32>,
    %186 = vector.extract_strided_slice %180 {offsets = [0, 32], sizes = [2, 32], strides = [1, 1]} : vector<2x64xf32> to vector<2x32xf32>
    %187 = arith.index_cast %154 : i32 to index
    %c0_65 = arith.constant 0 : index
    %c32_66 = arith.constant 32 : index
    %188 = vector.load %arg14[%187, %c0_65, %c32_66] : memref<8x2x64xf32, #tpu.memory_space<vmem>>, vector<1x2x32xf32>
    %189 = vector.shape_cast %188 : vector<1x2x32xf32> to vector<2x32xf32>
    %190 = vector.shape_cast %186 : vector<2x32xf32> to vector<1x2x32xf32>
    tpu.vector_store %arg14[%187, %c0_65, %c32_66], %190 {strides = array<i32>} : memref<8x2x64xf32, #tpu.memory_space<vmem>>, vector<1x2x32xf32>,
    %c4_i32 = arith.constant 4 : i32
    %c7_i32_67 = arith.constant 7 : i32
    %191 = arith.subi %c7_i32_67, %c4_i32 : i32
    %192 = arith.index_cast %c4_i32 : i32 to index
    %c0_68 = arith.constant 0 : index
    %c0_69 = arith.constant 0 : index
    %193 = vector.load %arg13[%192, %c0_68, %c0_69] : memref<8x2x32xf32, #tpu.memory_space<vmem>>, vector<1x2x32xf32>
    %194 = vector.shape_cast %193 : vector<1x2x32xf32> to vector<2x32xf32>
    %195 = arith.index_cast %191 : i32 to index
    %c0_70 = arith.constant 0 : index
    %c0_71 = arith.constant 0 : index
    %196 = vector.load %arg13[%195, %c0_70, %c0_71] : memref<8x2x32xf32, #tpu.memory_space<vmem>>, vector<1x2x32xf32>
    %197 = vector.shape_cast %196 : vector<1x2x32xf32> to vector<2x32xf32>
    %198 = tpu.concatenate %194, %197, %180 in 1 : vector<2x32xf32>, vector<2x32xf32>, vector<2x64xf32> -> vector<2x128xf32>
    %cst_72 = arith.constant dense<0.000000e+00> : vector<2x256xf32>
    %199 = tpu.matmul %198, %40, %cst_72 {dimension_numbers = #tpu.dot_dimension_numbers<[1], [0], [0], [1], [0, 0, 1, 1], [], []>} : vector<2x128xf32>, vector<128x256xf32>, vector<2x256xf32> -> vector<2x256xf32>
    %200 = vector.broadcast %41 : vector<1x256xf32> to vector<2x256xf32>
    %201 = arith.addf %199, %200 : vector<2x256xf32>
    %202 = vector.extract_strided_slice %201 {offsets = [0, 0], sizes = [2, 192], strides = [1, 1]} : vector<2x256xf32> to vector<2x192xf32>
    %203 = arith.negf %202 : vector<2x192xf32>
    %204 = math.exp %203 : vector<2x192xf32>
    %cst_73 = arith.constant 1.000000e+00 : f32
    %205 = vector.broadcast %cst_73 : f32 to vector<2x192xf32>
    %206 = arith.addf %205, %204 : vector<2x192xf32>
    %207 = arith.divf %205, %206 : vector<2x192xf32>
    %208 = vector.extract_strided_slice %207 {offsets = [0, 0], sizes = [2, 64], strides = [1, 1]} : vector<2x192xf32> to vector<2x64xf32>
    %209 = vector.extract_strided_slice %207 {offsets = [0, 64], sizes = [2, 64], strides = [1, 1]} : vector<2x192xf32> to vector<2x64xf32>
    %210 = vector.extract_strided_slice %207 {offsets = [0, 128], sizes = [2, 64], strides = [1, 1]} : vector<2x192xf32> to vector<2x64xf32>
    %211 = vector.extract_strided_slice %201 {offsets = [0, 192], sizes = [2, 64], strides = [1, 1]} : vector<2x256xf32> to vector<2x64xf32>
    %212 = math.tanh %211 : vector<2x64xf32>
    %213 = arith.mulf %209, %178 : vector<2x64xf32>
    %214 = arith.mulf %208, %212 : vector<2x64xf32>
    %215 = arith.addf %213, %214 : vector<2x64xf32>
    %216 = math.tanh %215 : vector<2x64xf32>
    %217 = arith.mulf %210, %216 : vector<2x64xf32>
    %218 = vector.extract_strided_slice %217 {offsets = [0, 0], sizes = [2, 32], strides = [1, 1]} : vector<2x64xf32> to vector<2x32xf32>
    %219 = arith.index_cast %c4_i32 : i32 to index
    %c0_74 = arith.constant 0 : index
    %c0_75 = arith.constant 0 : index
    %220 = vector.load %arg14[%219, %c0_74, %c0_75] : memref<8x2x64xf32, #tpu.memory_space<vmem>>, vector<1x2x32xf32>
    %221 = vector.shape_cast %220 : vector<1x2x32xf32> to vector<2x32xf32>
    %222 = vector.shape_cast %218 : vector<2x32xf32> to vector<1x2x32xf32>
    tpu.vector_store %arg14[%219, %c0_74, %c0_75], %222 {strides = array<i32>} : memref<8x2x64xf32, #tpu.memory_space<vmem>>, vector<1x2x32xf32>,
    %223 = vector.extract_strided_slice %217 {offsets = [0, 32], sizes = [2, 32], strides = [1, 1]} : vector<2x64xf32> to vector<2x32xf32>
    %224 = arith.index_cast %191 : i32 to index
    %c0_76 = arith.constant 0 : index
    %c32_77 = arith.constant 32 : index
    %225 = vector.load %arg14[%224, %c0_76, %c32_77] : memref<8x2x64xf32, #tpu.memory_space<vmem>>, vector<1x2x32xf32>
    %226 = vector.shape_cast %225 : vector<1x2x32xf32> to vector<2x32xf32>
    %227 = vector.shape_cast %223 : vector<2x32xf32> to vector<1x2x32xf32>
    tpu.vector_store %arg14[%224, %c0_76, %c32_77], %227 {strides = array<i32>} : memref<8x2x64xf32, #tpu.memory_space<vmem>>, vector<1x2x32xf32>,
    %c5_i32 = arith.constant 5 : i32
    %c7_i32_78 = arith.constant 7 : i32
    %228 = arith.subi %c7_i32_78, %c5_i32 : i32
    %229 = arith.index_cast %c5_i32 : i32 to index
    %c0_79 = arith.constant 0 : index
    %c0_80 = arith.constant 0 : index
    %230 = vector.load %arg13[%229, %c0_79, %c0_80] : memref<8x2x32xf32, #tpu.memory_space<vmem>>, vector<1x2x32xf32>
    %231 = vector.shape_cast %230 : vector<1x2x32xf32> to vector<2x32xf32>
    %232 = arith.index_cast %228 : i32 to index
    %c0_81 = arith.constant 0 : index
    %c0_82 = arith.constant 0 : index
    %233 = vector.load %arg13[%232, %c0_81, %c0_82] : memref<8x2x32xf32, #tpu.memory_space<vmem>>, vector<1x2x32xf32>
    %234 = vector.shape_cast %233 : vector<1x2x32xf32> to vector<2x32xf32>
    %235 = tpu.concatenate %231, %234, %217 in 1 : vector<2x32xf32>, vector<2x32xf32>, vector<2x64xf32> -> vector<2x128xf32>
    %cst_83 = arith.constant dense<0.000000e+00> : vector<2x256xf32>
    %236 = tpu.matmul %235, %40, %cst_83 {dimension_numbers = #tpu.dot_dimension_numbers<[1], [0], [0], [1], [0, 0, 1, 1], [], []>} : vector<2x128xf32>, vector<128x256xf32>, vector<2x256xf32> -> vector<2x256xf32>
    %237 = vector.broadcast %41 : vector<1x256xf32> to vector<2x256xf32>
    %238 = arith.addf %236, %237 : vector<2x256xf32>
    %239 = vector.extract_strided_slice %238 {offsets = [0, 0], sizes = [2, 192], strides = [1, 1]} : vector<2x256xf32> to vector<2x192xf32>
    %240 = arith.negf %239 : vector<2x192xf32>
    %241 = math.exp %240 : vector<2x192xf32>
    %cst_84 = arith.constant 1.000000e+00 : f32
    %242 = vector.broadcast %cst_84 : f32 to vector<2x192xf32>
    %243 = arith.addf %242, %241 : vector<2x192xf32>
    %244 = arith.divf %242, %243 : vector<2x192xf32>
    %245 = vector.extract_strided_slice %244 {offsets = [0, 0], sizes = [2, 64], strides = [1, 1]} : vector<2x192xf32> to vector<2x64xf32>
    %246 = vector.extract_strided_slice %244 {offsets = [0, 64], sizes = [2, 64], strides = [1, 1]} : vector<2x192xf32> to vector<2x64xf32>
    %247 = vector.extract_strided_slice %244 {offsets = [0, 128], sizes = [2, 64], strides = [1, 1]} : vector<2x192xf32> to vector<2x64xf32>
    %248 = vector.extract_strided_slice %238 {offsets = [0, 192], sizes = [2, 64], strides = [1, 1]} : vector<2x256xf32> to vector<2x64xf32>
    %249 = math.tanh %248 : vector<2x64xf32>
    %250 = arith.mulf %246, %215 : vector<2x64xf32>
    %251 = arith.mulf %245, %249 : vector<2x64xf32>
    %252 = arith.addf %250, %251 : vector<2x64xf32>
    %253 = math.tanh %252 : vector<2x64xf32>
    %254 = arith.mulf %247, %253 : vector<2x64xf32>
    %255 = vector.extract_strided_slice %254 {offsets = [0, 0], sizes = [2, 32], strides = [1, 1]} : vector<2x64xf32> to vector<2x32xf32>
    %256 = arith.index_cast %c5_i32 : i32 to index
    %c0_85 = arith.constant 0 : index
    %c0_86 = arith.constant 0 : index
    %257 = vector.load %arg14[%256, %c0_85, %c0_86] : memref<8x2x64xf32, #tpu.memory_space<vmem>>, vector<1x2x32xf32>
    %258 = vector.shape_cast %257 : vector<1x2x32xf32> to vector<2x32xf32>
    %259 = vector.shape_cast %255 : vector<2x32xf32> to vector<1x2x32xf32>
    tpu.vector_store %arg14[%256, %c0_85, %c0_86], %259 {strides = array<i32>} : memref<8x2x64xf32, #tpu.memory_space<vmem>>, vector<1x2x32xf32>,
    %260 = vector.extract_strided_slice %254 {offsets = [0, 32], sizes = [2, 32], strides = [1, 1]} : vector<2x64xf32> to vector<2x32xf32>
    %261 = arith.index_cast %228 : i32 to index
    %c0_87 = arith.constant 0 : index
    %c32_88 = arith.constant 32 : index
    %262 = vector.load %arg14[%261, %c0_87, %c32_88] : memref<8x2x64xf32, #tpu.memory_space<vmem>>, vector<1x2x32xf32>
    %263 = vector.shape_cast %262 : vector<1x2x32xf32> to vector<2x32xf32>
    %264 = vector.shape_cast %260 : vector<2x32xf32> to vector<1x2x32xf32>
    tpu.vector_store %arg14[%261, %c0_87, %c32_88], %264 {strides = array<i32>} : memref<8x2x64xf32, #tpu.memory_space<vmem>>, vector<1x2x32xf32>,
    %c6_i32 = arith.constant 6 : i32
    %c7_i32_89 = arith.constant 7 : i32
    %265 = arith.subi %c7_i32_89, %c6_i32 : i32
    %266 = arith.index_cast %c6_i32 : i32 to index
    %c0_90 = arith.constant 0 : index
    %c0_91 = arith.constant 0 : index
    %267 = vector.load %arg13[%266, %c0_90, %c0_91] : memref<8x2x32xf32, #tpu.memory_space<vmem>>, vector<1x2x32xf32>
    %268 = vector.shape_cast %267 : vector<1x2x32xf32> to vector<2x32xf32>
    %269 = arith.index_cast %265 : i32 to index
    %c0_92 = arith.constant 0 : index
    %c0_93 = arith.constant 0 : index
    %270 = vector.load %arg13[%269, %c0_92, %c0_93] : memref<8x2x32xf32, #tpu.memory_space<vmem>>, vector<1x2x32xf32>
    %271 = vector.shape_cast %270 : vector<1x2x32xf32> to vector<2x32xf32>
    %272 = tpu.concatenate %268, %271, %254 in 1 : vector<2x32xf32>, vector<2x32xf32>, vector<2x64xf32> -> vector<2x128xf32>
    %cst_94 = arith.constant dense<0.000000e+00> : vector<2x256xf32>
    %273 = tpu.matmul %272, %40, %cst_94 {dimension_numbers = #tpu.dot_dimension_numbers<[1], [0], [0], [1], [0, 0, 1, 1], [], []>} : vector<2x128xf32>, vector<128x256xf32>, vector<2x256xf32> -> vector<2x256xf32>
    %274 = vector.broadcast %41 : vector<1x256xf32> to vector<2x256xf32>
    %275 = arith.addf %273, %274 : vector<2x256xf32>
    %276 = vector.extract_strided_slice %275 {offsets = [0, 0], sizes = [2, 192], strides = [1, 1]} : vector<2x256xf32> to vector<2x192xf32>
    %277 = arith.negf %276 : vector<2x192xf32>
    %278 = math.exp %277 : vector<2x192xf32>
    %cst_95 = arith.constant 1.000000e+00 : f32
    %279 = vector.broadcast %cst_95 : f32 to vector<2x192xf32>
    %280 = arith.addf %279, %278 : vector<2x192xf32>
    %281 = arith.divf %279, %280 : vector<2x192xf32>
    %282 = vector.extract_strided_slice %281 {offsets = [0, 0], sizes = [2, 64], strides = [1, 1]} : vector<2x192xf32> to vector<2x64xf32>
    %283 = vector.extract_strided_slice %281 {offsets = [0, 64], sizes = [2, 64], strides = [1, 1]} : vector<2x192xf32> to vector<2x64xf32>
    %284 = vector.extract_strided_slice %281 {offsets = [0, 128], sizes = [2, 64], strides = [1, 1]} : vector<2x192xf32> to vector<2x64xf32>
    %285 = vector.extract_strided_slice %275 {offsets = [0, 192], sizes = [2, 64], strides = [1, 1]} : vector<2x256xf32> to vector<2x64xf32>
    %286 = math.tanh %285 : vector<2x64xf32>
    %287 = arith.mulf %283, %252 : vector<2x64xf32>
    %288 = arith.mulf %282, %286 : vector<2x64xf32>
    %289 = arith.addf %287, %288 : vector<2x64xf32>
    %290 = math.tanh %289 : vector<2x64xf32>
    %291 = arith.mulf %284, %290 : vector<2x64xf32>
    %292 = vector.extract_strided_slice %291 {offsets = [0, 0], sizes = [2, 32], strides = [1, 1]} : vector<2x64xf32> to vector<2x32xf32>
    %293 = arith.index_cast %c6_i32 : i32 to index
    %c0_96 = arith.constant 0 : index
    %c0_97 = arith.constant 0 : index
    %294 = vector.load %arg14[%293, %c0_96, %c0_97] : memref<8x2x64xf32, #tpu.memory_space<vmem>>, vector<1x2x32xf32>
    %295 = vector.shape_cast %294 : vector<1x2x32xf32> to vector<2x32xf32>
    %296 = vector.shape_cast %292 : vector<2x32xf32> to vector<1x2x32xf32>
    tpu.vector_store %arg14[%293, %c0_96, %c0_97], %296 {strides = array<i32>} : memref<8x2x64xf32, #tpu.memory_space<vmem>>, vector<1x2x32xf32>,
    %297 = vector.extract_strided_slice %291 {offsets = [0, 32], sizes = [2, 32], strides = [1, 1]} : vector<2x64xf32> to vector<2x32xf32>
    %298 = arith.index_cast %265 : i32 to index
    %c0_98 = arith.constant 0 : index
    %c32_99 = arith.constant 32 : index
    %299 = vector.load %arg14[%298, %c0_98, %c32_99] : memref<8x2x64xf32, #tpu.memory_space<vmem>>, vector<1x2x32xf32>
    %300 = vector.shape_cast %299 : vector<1x2x32xf32> to vector<2x32xf32>
    %301 = vector.shape_cast %297 : vector<2x32xf32> to vector<1x2x32xf32>
    tpu.vector_store %arg14[%298, %c0_98, %c32_99], %301 {strides = array<i32>} : memref<8x2x64xf32, #tpu.memory_space<vmem>>, vector<1x2x32xf32>,
    %c7_i32_100 = arith.constant 7 : i32
    %c7_i32_101 = arith.constant 7 : i32
    %302 = arith.subi %c7_i32_101, %c7_i32_100 : i32
    %303 = arith.index_cast %c7_i32_100 : i32 to index
    %c0_102 = arith.constant 0 : index
    %c0_103 = arith.constant 0 : index
    %304 = vector.load %arg13[%303, %c0_102, %c0_103] : memref<8x2x32xf32, #tpu.memory_space<vmem>>, vector<1x2x32xf32>
    %305 = vector.shape_cast %304 : vector<1x2x32xf32> to vector<2x32xf32>
    %306 = arith.index_cast %302 : i32 to index
    %c0_104 = arith.constant 0 : index
    %c0_105 = arith.constant 0 : index
    %307 = vector.load %arg13[%306, %c0_104, %c0_105] : memref<8x2x32xf32, #tpu.memory_space<vmem>>, vector<1x2x32xf32>
    %308 = vector.shape_cast %307 : vector<1x2x32xf32> to vector<2x32xf32>
    %309 = tpu.concatenate %305, %308, %291 in 1 : vector<2x32xf32>, vector<2x32xf32>, vector<2x64xf32> -> vector<2x128xf32>
    %cst_106 = arith.constant dense<0.000000e+00> : vector<2x256xf32>
    %310 = tpu.matmul %309, %40, %cst_106 {dimension_numbers = #tpu.dot_dimension_numbers<[1], [0], [0], [1], [0, 0, 1, 1], [], []>} : vector<2x128xf32>, vector<128x256xf32>, vector<2x256xf32> -> vector<2x256xf32>
    %311 = vector.broadcast %41 : vector<1x256xf32> to vector<2x256xf32>
    %312 = arith.addf %310, %311 : vector<2x256xf32>
    %313 = vector.extract_strided_slice %312 {offsets = [0, 0], sizes = [2, 192], strides = [1, 1]} : vector<2x256xf32> to vector<2x192xf32>
    %314 = arith.negf %313 : vector<2x192xf32>
    %315 = math.exp %314 : vector<2x192xf32>
    %cst_107 = arith.constant 1.000000e+00 : f32
    %316 = vector.broadcast %cst_107 : f32 to vector<2x192xf32>
    %317 = arith.addf %316, %315 : vector<2x192xf32>
    %318 = arith.divf %316, %317 : vector<2x192xf32>
    %319 = vector.extract_strided_slice %318 {offsets = [0, 0], sizes = [2, 64], strides = [1, 1]} : vector<2x192xf32> to vector<2x64xf32>
    %320 = vector.extract_strided_slice %318 {offsets = [0, 64], sizes = [2, 64], strides = [1, 1]} : vector<2x192xf32> to vector<2x64xf32>
    %321 = vector.extract_strided_slice %318 {offsets = [0, 128], sizes = [2, 64], strides = [1, 1]} : vector<2x192xf32> to vector<2x64xf32>
    %322 = vector.extract_strided_slice %312 {offsets = [0, 192], sizes = [2, 64], strides = [1, 1]} : vector<2x256xf32> to vector<2x64xf32>
    %323 = math.tanh %322 : vector<2x64xf32>
    %324 = arith.mulf %320, %289 : vector<2x64xf32>
    %325 = arith.mulf %319, %323 : vector<2x64xf32>
    %326 = arith.addf %324, %325 : vector<2x64xf32>
    %327 = math.tanh %326 : vector<2x64xf32>
    %328 = arith.mulf %321, %327 : vector<2x64xf32>
    %329 = vector.extract_strided_slice %328 {offsets = [0, 0], sizes = [2, 32], strides = [1, 1]} : vector<2x64xf32> to vector<2x32xf32>
    %330 = arith.index_cast %c7_i32_100 : i32 to index
    %c0_108 = arith.constant 0 : index
    %c0_109 = arith.constant 0 : index
    %331 = vector.load %arg14[%330, %c0_108, %c0_109] : memref<8x2x64xf32, #tpu.memory_space<vmem>>, vector<1x2x32xf32>
    %332 = vector.shape_cast %331 : vector<1x2x32xf32> to vector<2x32xf32>
    %333 = vector.shape_cast %329 : vector<2x32xf32> to vector<1x2x32xf32>
    tpu.vector_store %arg14[%330, %c0_108, %c0_109], %333 {strides = array<i32>} : memref<8x2x64xf32, #tpu.memory_space<vmem>>, vector<1x2x32xf32>,
    %334 = vector.extract_strided_slice %328 {offsets = [0, 32], sizes = [2, 32], strides = [1, 1]} : vector<2x64xf32> to vector<2x32xf32>
    %335 = arith.index_cast %302 : i32 to index
    %c0_110 = arith.constant 0 : index
    %c32_111 = arith.constant 32 : index
    %336 = vector.load %arg14[%335, %c0_110, %c32_111] : memref<8x2x64xf32, #tpu.memory_space<vmem>>, vector<1x2x32xf32>
    %337 = vector.shape_cast %336 : vector<1x2x32xf32> to vector<2x32xf32>
    %338 = vector.shape_cast %334 : vector<2x32xf32> to vector<1x2x32xf32>
    tpu.vector_store %arg14[%335, %c0_110, %c32_111], %338 {strides = array<i32>} : memref<8x2x64xf32, #tpu.memory_space<vmem>>, vector<1x2x32xf32>,
    %c8_i32 = arith.constant 8 : i32
    %c0_112 = arith.constant 0 : index
    %c0_113 = arith.constant 0 : index
    %339 = vector.load %arg4[%c0_112, %c0_113] : memref<192x256xf32, #tpu.memory_space<vmem>>, vector<192x256xf32>
    %c0_114 = arith.constant 0 : index
    %c0_115 = arith.constant 0 : index
    %340 = vector.load %arg5[%c0_114, %c0_115] : memref<1x256xf32, #tpu.memory_space<vmem>>, vector<1x256xf32>
    %c0_i32_116 = arith.constant 0 : i32
    %c7_i32_117 = arith.constant 7 : i32
    %341 = arith.subi %c7_i32_117, %c0_i32_116 : i32
    %342 = arith.index_cast %c0_i32_116 : i32 to index
    %c0_118 = arith.constant 0 : index
    %c0_119 = arith.constant 0 : index
    %343 = vector.load %arg14[%342, %c0_118, %c0_119] : memref<8x2x64xf32, #tpu.memory_space<vmem>>, vector<1x2x64xf32>
    %344 = vector.shape_cast %343 : vector<1x2x64xf32> to vector<2x64xf32>
    %345 = arith.index_cast %341 : i32 to index
    %c0_120 = arith.constant 0 : index
    %c0_121 = arith.constant 0 : index
    %346 = vector.load %arg14[%345, %c0_120, %c0_121] : memref<8x2x64xf32, #tpu.memory_space<vmem>>, vector<1x2x64xf32>
    %347 = vector.shape_cast %346 : vector<1x2x64xf32> to vector<2x64xf32>
    %348 = tpu.concatenate %344, %347, %42 in 1 : vector<2x64xf32>, vector<2x64xf32>, vector<2x64xf32> -> vector<2x192xf32>
    %cst_122 = arith.constant dense<0.000000e+00> : vector<2x256xf32>
    %349 = tpu.matmul %348, %339, %cst_122 {dimension_numbers = #tpu.dot_dimension_numbers<[1], [0], [0], [1], [0, 0, 1, 1], [], []>} : vector<2x192xf32>, vector<192x256xf32>, vector<2x256xf32> -> vector<2x256xf32>
    %350 = vector.broadcast %340 : vector<1x256xf32> to vector<2x256xf32>
    %351 = arith.addf %349, %350 : vector<2x256xf32>
    %352 = vector.extract_strided_slice %351 {offsets = [0, 0], sizes = [2, 128], strides = [1, 1]} : vector<2x256xf32> to vector<2x128xf32>
    %353 = arith.negf %352 : vector<2x128xf32>
    %354 = math.exp %353 : vector<2x128xf32>
    %cst_123 = arith.constant 1.000000e+00 : f32
    %355 = vector.broadcast %cst_123 : f32 to vector<2x128xf32>
    %356 = arith.addf %355, %354 : vector<2x128xf32>
    %357 = arith.divf %355, %356 : vector<2x128xf32>
    %358 = vector.extract_strided_slice %357 {offsets = [0, 0], sizes = [2, 64], strides = [1, 1]} : vector<2x128xf32> to vector<2x64xf32>
    %359 = vector.extract_strided_slice %357 {offsets = [0, 64], sizes = [2, 64], strides = [1, 1]} : vector<2x128xf32> to vector<2x64xf32>
    %360 = vector.extract_strided_slice %351 {offsets = [0, 128], sizes = [2, 64], strides = [1, 1]} : vector<2x256xf32> to vector<2x64xf32>
    %361 = vector.extract_strided_slice %351 {offsets = [0, 192], sizes = [2, 64], strides = [1, 1]} : vector<2x256xf32> to vector<2x64xf32>
    %362 = arith.mulf %358, %361 : vector<2x64xf32>
    %363 = arith.addf %360, %362 : vector<2x64xf32>
    %364 = math.tanh %363 : vector<2x64xf32>
    %cst_124 = arith.constant 1.000000e+00 : f32
    %365 = vector.broadcast %cst_124 : f32 to vector<2x64xf32>
    %366 = arith.subf %365, %359 : vector<2x64xf32>
    %367 = arith.mulf %366, %364 : vector<2x64xf32>
    %368 = arith.mulf %359, %42 : vector<2x64xf32>
    %369 = arith.addf %367, %368 : vector<2x64xf32>
    %370 = vector.extract_strided_slice %369 {offsets = [0, 0], sizes = [2, 32], strides = [1, 1]} : vector<2x64xf32> to vector<2x32xf32>
    %371 = arith.index_cast %c0_i32_116 : i32 to index
    %c0_125 = arith.constant 0 : index
    %c0_126 = arith.constant 0 : index
    %372 = vector.load %arg15[%371, %c0_125, %c0_126] : memref<8x2x64xf32, #tpu.memory_space<vmem>>, vector<1x2x32xf32>
    %373 = vector.shape_cast %372 : vector<1x2x32xf32> to vector<2x32xf32>
    %374 = vector.shape_cast %370 : vector<2x32xf32> to vector<1x2x32xf32>
    tpu.vector_store %arg15[%371, %c0_125, %c0_126], %374 {strides = array<i32>} : memref<8x2x64xf32, #tpu.memory_space<vmem>>, vector<1x2x32xf32>,
    %375 = vector.extract_strided_slice %369 {offsets = [0, 32], sizes = [2, 32], strides = [1, 1]} : vector<2x64xf32> to vector<2x32xf32>
    %376 = arith.index_cast %341 : i32 to index
    %c0_127 = arith.constant 0 : index
    %c32_128 = arith.constant 32 : index
    %377 = vector.load %arg15[%376, %c0_127, %c32_128] : memref<8x2x64xf32, #tpu.memory_space<vmem>>, vector<1x2x32xf32>
    %378 = vector.shape_cast %377 : vector<1x2x32xf32> to vector<2x32xf32>
    %379 = vector.shape_cast %375 : vector<2x32xf32> to vector<1x2x32xf32>
    tpu.vector_store %arg15[%376, %c0_127, %c32_128], %379 {strides = array<i32>} : memref<8x2x64xf32, #tpu.memory_space<vmem>>, vector<1x2x32xf32>,
    %c1_i32_129 = arith.constant 1 : i32
    %c7_i32_130 = arith.constant 7 : i32
    %380 = arith.subi %c7_i32_130, %c1_i32_129 : i32
    %381 = arith.index_cast %c1_i32_129 : i32 to index
    %c0_131 = arith.constant 0 : index
    %c0_132 = arith.constant 0 : index
    %382 = vector.load %arg14[%381, %c0_131, %c0_132] : memref<8x2x64xf32, #tpu.memory_space<vmem>>, vector<1x2x64xf32>
    %383 = vector.shape_cast %382 : vector<1x2x64xf32> to vector<2x64xf32>
    %384 = arith.index_cast %380 : i32 to index
    %c0_133 = arith.constant 0 : index
    %c0_134 = arith.constant 0 : index
    %385 = vector.load %arg14[%384, %c0_133, %c0_134] : memref<8x2x64xf32, #tpu.memory_space<vmem>>, vector<1x2x64xf32>
    %386 = vector.shape_cast %385 : vector<1x2x64xf32> to vector<2x64xf32>
    %387 = tpu.concatenate %383, %386, %369 in 1 : vector<2x64xf32>, vector<2x64xf32>, vector<2x64xf32> -> vector<2x192xf32>
    %cst_135 = arith.constant dense<0.000000e+00> : vector<2x256xf32>
    %388 = tpu.matmul %387, %339, %cst_135 {dimension_numbers = #tpu.dot_dimension_numbers<[1], [0], [0], [1], [0, 0, 1, 1], [], []>} : vector<2x192xf32>, vector<192x256xf32>, vector<2x256xf32> -> vector<2x256xf32>
    %389 = vector.broadcast %340 : vector<1x256xf32> to vector<2x256xf32>
    %390 = arith.addf %388, %389 : vector<2x256xf32>
    %391 = vector.extract_strided_slice %390 {offsets = [0, 0], sizes = [2, 128], strides = [1, 1]} : vector<2x256xf32> to vector<2x128xf32>
    %392 = arith.negf %391 : vector<2x128xf32>
    %393 = math.exp %392 : vector<2x128xf32>
    %cst_136 = arith.constant 1.000000e+00 : f32
    %394 = vector.broadcast %cst_136 : f32 to vector<2x128xf32>
    %395 = arith.addf %394, %393 : vector<2x128xf32>
    %396 = arith.divf %394, %395 : vector<2x128xf32>
    %397 = vector.extract_strided_slice %396 {offsets = [0, 0], sizes = [2, 64], strides = [1, 1]} : vector<2x128xf32> to vector<2x64xf32>
    %398 = vector.extract_strided_slice %396 {offsets = [0, 64], sizes = [2, 64], strides = [1, 1]} : vector<2x128xf32> to vector<2x64xf32>
    %399 = vector.extract_strided_slice %390 {offsets = [0, 128], sizes = [2, 64], strides = [1, 1]} : vector<2x256xf32> to vector<2x64xf32>
    %400 = vector.extract_strided_slice %390 {offsets = [0, 192], sizes = [2, 64], strides = [1, 1]} : vector<2x256xf32> to vector<2x64xf32>
    %401 = arith.mulf %397, %400 : vector<2x64xf32>
    %402 = arith.addf %399, %401 : vector<2x64xf32>
    %403 = math.tanh %402 : vector<2x64xf32>
    %cst_137 = arith.constant 1.000000e+00 : f32
    %404 = vector.broadcast %cst_137 : f32 to vector<2x64xf32>
    %405 = arith.subf %404, %398 : vector<2x64xf32>
    %406 = arith.mulf %405, %403 : vector<2x64xf32>
    %407 = arith.mulf %398, %369 : vector<2x64xf32>
    %408 = arith.addf %406, %407 : vector<2x64xf32>
    %409 = vector.extract_strided_slice %408 {offsets = [0, 0], sizes = [2, 32], strides = [1, 1]} : vector<2x64xf32> to vector<2x32xf32>
    %410 = arith.index_cast %c1_i32_129 : i32 to index
    %c0_138 = arith.constant 0 : index
    %c0_139 = arith.constant 0 : index
    %411 = vector.load %arg15[%410, %c0_138, %c0_139] : memref<8x2x64xf32, #tpu.memory_space<vmem>>, vector<1x2x32xf32>
    %412 = vector.shape_cast %411 : vector<1x2x32xf32> to vector<2x32xf32>
    %413 = vector.shape_cast %409 : vector<2x32xf32> to vector<1x2x32xf32>
    tpu.vector_store %arg15[%410, %c0_138, %c0_139], %413 {strides = array<i32>} : memref<8x2x64xf32, #tpu.memory_space<vmem>>, vector<1x2x32xf32>,
    %414 = vector.extract_strided_slice %408 {offsets = [0, 32], sizes = [2, 32], strides = [1, 1]} : vector<2x64xf32> to vector<2x32xf32>
    %415 = arith.index_cast %380 : i32 to index
    %c0_140 = arith.constant 0 : index
    %c32_141 = arith.constant 32 : index
    %416 = vector.load %arg15[%415, %c0_140, %c32_141] : memref<8x2x64xf32, #tpu.memory_space<vmem>>, vector<1x2x32xf32>
    %417 = vector.shape_cast %416 : vector<1x2x32xf32> to vector<2x32xf32>
    %418 = vector.shape_cast %414 : vector<2x32xf32> to vector<1x2x32xf32>
    tpu.vector_store %arg15[%415, %c0_140, %c32_141], %418 {strides = array<i32>} : memref<8x2x64xf32, #tpu.memory_space<vmem>>, vector<1x2x32xf32>,
    %c2_i32_142 = arith.constant 2 : i32
    %c7_i32_143 = arith.constant 7 : i32
    %419 = arith.subi %c7_i32_143, %c2_i32_142 : i32
    %420 = arith.index_cast %c2_i32_142 : i32 to index
    %c0_144 = arith.constant 0 : index
    %c0_145 = arith.constant 0 : index
    %421 = vector.load %arg14[%420, %c0_144, %c0_145] : memref<8x2x64xf32, #tpu.memory_space<vmem>>, vector<1x2x64xf32>
    %422 = vector.shape_cast %421 : vector<1x2x64xf32> to vector<2x64xf32>
    %423 = arith.index_cast %419 : i32 to index
    %c0_146 = arith.constant 0 : index
    %c0_147 = arith.constant 0 : index
    %424 = vector.load %arg14[%423, %c0_146, %c0_147] : memref<8x2x64xf32, #tpu.memory_space<vmem>>, vector<1x2x64xf32>
    %425 = vector.shape_cast %424 : vector<1x2x64xf32> to vector<2x64xf32>
    %426 = tpu.concatenate %422, %425, %408 in 1 : vector<2x64xf32>, vector<2x64xf32>, vector<2x64xf32> -> vector<2x192xf32>
    %cst_148 = arith.constant dense<0.000000e+00> : vector<2x256xf32>
    %427 = tpu.matmul %426, %339, %cst_148 {dimension_numbers = #tpu.dot_dimension_numbers<[1], [0], [0], [1], [0, 0, 1, 1], [], []>} : vector<2x192xf32>, vector<192x256xf32>, vector<2x256xf32> -> vector<2x256xf32>
    %428 = vector.broadcast %340 : vector<1x256xf32> to vector<2x256xf32>
    %429 = arith.addf %427, %428 : vector<2x256xf32>
    %430 = vector.extract_strided_slice %429 {offsets = [0, 0], sizes = [2, 128], strides = [1, 1]} : vector<2x256xf32> to vector<2x128xf32>
    %431 = arith.negf %430 : vector<2x128xf32>
    %432 = math.exp %431 : vector<2x128xf32>
    %cst_149 = arith.constant 1.000000e+00 : f32
    %433 = vector.broadcast %cst_149 : f32 to vector<2x128xf32>
    %434 = arith.addf %433, %432 : vector<2x128xf32>
    %435 = arith.divf %433, %434 : vector<2x128xf32>
    %436 = vector.extract_strided_slice %435 {offsets = [0, 0], sizes = [2, 64], strides = [1, 1]} : vector<2x128xf32> to vector<2x64xf32>
    %437 = vector.extract_strided_slice %435 {offsets = [0, 64], sizes = [2, 64], strides = [1, 1]} : vector<2x128xf32> to vector<2x64xf32>
    %438 = vector.extract_strided_slice %429 {offsets = [0, 128], sizes = [2, 64], strides = [1, 1]} : vector<2x256xf32> to vector<2x64xf32>
    %439 = vector.extract_strided_slice %429 {offsets = [0, 192], sizes = [2, 64], strides = [1, 1]} : vector<2x256xf32> to vector<2x64xf32>
    %440 = arith.mulf %436, %439 : vector<2x64xf32>
    %441 = arith.addf %438, %440 : vector<2x64xf32>
    %442 = math.tanh %441 : vector<2x64xf32>
    %cst_150 = arith.constant 1.000000e+00 : f32
    %443 = vector.broadcast %cst_150 : f32 to vector<2x64xf32>
    %444 = arith.subf %443, %437 : vector<2x64xf32>
    %445 = arith.mulf %444, %442 : vector<2x64xf32>
    %446 = arith.mulf %437, %408 : vector<2x64xf32>
    %447 = arith.addf %445, %446 : vector<2x64xf32>
    %448 = vector.extract_strided_slice %447 {offsets = [0, 0], sizes = [2, 32], strides = [1, 1]} : vector<2x64xf32> to vector<2x32xf32>
    %449 = arith.index_cast %c2_i32_142 : i32 to index
    %c0_151 = arith.constant 0 : index
    %c0_152 = arith.constant 0 : index
    %450 = vector.load %arg15[%449, %c0_151, %c0_152] : memref<8x2x64xf32, #tpu.memory_space<vmem>>, vector<1x2x32xf32>
    %451 = vector.shape_cast %450 : vector<1x2x32xf32> to vector<2x32xf32>
    %452 = vector.shape_cast %448 : vector<2x32xf32> to vector<1x2x32xf32>
    tpu.vector_store %arg15[%449, %c0_151, %c0_152], %452 {strides = array<i32>} : memref<8x2x64xf32, #tpu.memory_space<vmem>>, vector<1x2x32xf32>,
    %453 = vector.extract_strided_slice %447 {offsets = [0, 32], sizes = [2, 32], strides = [1, 1]} : vector<2x64xf32> to vector<2x32xf32>
    %454 = arith.index_cast %419 : i32 to index
    %c0_153 = arith.constant 0 : index
    %c32_154 = arith.constant 32 : index
    %455 = vector.load %arg15[%454, %c0_153, %c32_154] : memref<8x2x64xf32, #tpu.memory_space<vmem>>, vector<1x2x32xf32>
    %456 = vector.shape_cast %455 : vector<1x2x32xf32> to vector<2x32xf32>
    %457 = vector.shape_cast %453 : vector<2x32xf32> to vector<1x2x32xf32>
    tpu.vector_store %arg15[%454, %c0_153, %c32_154], %457 {strides = array<i32>} : memref<8x2x64xf32, #tpu.memory_space<vmem>>, vector<1x2x32xf32>,
    %c3_i32_155 = arith.constant 3 : i32
    %c7_i32_156 = arith.constant 7 : i32
    %458 = arith.subi %c7_i32_156, %c3_i32_155 : i32
    %459 = arith.index_cast %c3_i32_155 : i32 to index
    %c0_157 = arith.constant 0 : index
    %c0_158 = arith.constant 0 : index
    %460 = vector.load %arg14[%459, %c0_157, %c0_158] : memref<8x2x64xf32, #tpu.memory_space<vmem>>, vector<1x2x64xf32>
    %461 = vector.shape_cast %460 : vector<1x2x64xf32> to vector<2x64xf32>
    %462 = arith.index_cast %458 : i32 to index
    %c0_159 = arith.constant 0 : index
    %c0_160 = arith.constant 0 : index
    %463 = vector.load %arg14[%462, %c0_159, %c0_160] : memref<8x2x64xf32, #tpu.memory_space<vmem>>, vector<1x2x64xf32>
    %464 = vector.shape_cast %463 : vector<1x2x64xf32> to vector<2x64xf32>
    %465 = tpu.concatenate %461, %464, %447 in 1 : vector<2x64xf32>, vector<2x64xf32>, vector<2x64xf32> -> vector<2x192xf32>
    %cst_161 = arith.constant dense<0.000000e+00> : vector<2x256xf32>
    %466 = tpu.matmul %465, %339, %cst_161 {dimension_numbers = #tpu.dot_dimension_numbers<[1], [0], [0], [1], [0, 0, 1, 1], [], []>} : vector<2x192xf32>, vector<192x256xf32>, vector<2x256xf32> -> vector<2x256xf32>
    %467 = vector.broadcast %340 : vector<1x256xf32> to vector<2x256xf32>
    %468 = arith.addf %466, %467 : vector<2x256xf32>
    %469 = vector.extract_strided_slice %468 {offsets = [0, 0], sizes = [2, 128], strides = [1, 1]} : vector<2x256xf32> to vector<2x128xf32>
    %470 = arith.negf %469 : vector<2x128xf32>
    %471 = math.exp %470 : vector<2x128xf32>
    %cst_162 = arith.constant 1.000000e+00 : f32
    %472 = vector.broadcast %cst_162 : f32 to vector<2x128xf32>
    %473 = arith.addf %472, %471 : vector<2x128xf32>
    %474 = arith.divf %472, %473 : vector<2x128xf32>
    %475 = vector.extract_strided_slice %474 {offsets = [0, 0], sizes = [2, 64], strides = [1, 1]} : vector<2x128xf32> to vector<2x64xf32>
    %476 = vector.extract_strided_slice %474 {offsets = [0, 64], sizes = [2, 64], strides = [1, 1]} : vector<2x128xf32> to vector<2x64xf32>
    %477 = vector.extract_strided_slice %468 {offsets = [0, 128], sizes = [2, 64], strides = [1, 1]} : vector<2x256xf32> to vector<2x64xf32>
    %478 = vector.extract_strided_slice %468 {offsets = [0, 192], sizes = [2, 64], strides = [1, 1]} : vector<2x256xf32> to vector<2x64xf32>
    %479 = arith.mulf %475, %478 : vector<2x64xf32>
    %480 = arith.addf %477, %479 : vector<2x64xf32>
    %481 = math.tanh %480 : vector<2x64xf32>
    %cst_163 = arith.constant 1.000000e+00 : f32
    %482 = vector.broadcast %cst_163 : f32 to vector<2x64xf32>
    %483 = arith.subf %482, %476 : vector<2x64xf32>
    %484 = arith.mulf %483, %481 : vector<2x64xf32>
    %485 = arith.mulf %476, %447 : vector<2x64xf32>
    %486 = arith.addf %484, %485 : vector<2x64xf32>
    %487 = vector.extract_strided_slice %486 {offsets = [0, 0], sizes = [2, 32], strides = [1, 1]} : vector<2x64xf32> to vector<2x32xf32>
    %488 = arith.index_cast %c3_i32_155 : i32 to index
    %c0_164 = arith.constant 0 : index
    %c0_165 = arith.constant 0 : index
    %489 = vector.load %arg15[%488, %c0_164, %c0_165] : memref<8x2x64xf32, #tpu.memory_space<vmem>>, vector<1x2x32xf32>
    %490 = vector.shape_cast %489 : vector<1x2x32xf32> to vector<2x32xf32>
    %491 = vector.shape_cast %487 : vector<2x32xf32> to vector<1x2x32xf32>
    tpu.vector_store %arg15[%488, %c0_164, %c0_165], %491 {strides = array<i32>} : memref<8x2x64xf32, #tpu.memory_space<vmem>>, vector<1x2x32xf32>,
    %492 = vector.extract_strided_slice %486 {offsets = [0, 32], sizes = [2, 32], strides = [1, 1]} : vector<2x64xf32> to vector<2x32xf32>
    %493 = arith.index_cast %458 : i32 to index
    %c0_166 = arith.constant 0 : index
    %c32_167 = arith.constant 32 : index
    %494 = vector.load %arg15[%493, %c0_166, %c32_167] : memref<8x2x64xf32, #tpu.memory_space<vmem>>, vector<1x2x32xf32>
    %495 = vector.shape_cast %494 : vector<1x2x32xf32> to vector<2x32xf32>
    %496 = vector.shape_cast %492 : vector<2x32xf32> to vector<1x2x32xf32>
    tpu.vector_store %arg15[%493, %c0_166, %c32_167], %496 {strides = array<i32>} : memref<8x2x64xf32, #tpu.memory_space<vmem>>, vector<1x2x32xf32>,
    %c4_i32_168 = arith.constant 4 : i32
    %c7_i32_169 = arith.constant 7 : i32
    %497 = arith.subi %c7_i32_169, %c4_i32_168 : i32
    %498 = arith.index_cast %c4_i32_168 : i32 to index
    %c0_170 = arith.constant 0 : index
    %c0_171 = arith.constant 0 : index
    %499 = vector.load %arg14[%498, %c0_170, %c0_171] : memref<8x2x64xf32, #tpu.memory_space<vmem>>, vector<1x2x64xf32>
    %500 = vector.shape_cast %499 : vector<1x2x64xf32> to vector<2x64xf32>
    %501 = arith.index_cast %497 : i32 to index
    %c0_172 = arith.constant 0 : index
    %c0_173 = arith.constant 0 : index
    %502 = vector.load %arg14[%501, %c0_172, %c0_173] : memref<8x2x64xf32, #tpu.memory_space<vmem>>, vector<1x2x64xf32>
    %503 = vector.shape_cast %502 : vector<1x2x64xf32> to vector<2x64xf32>
    %504 = tpu.concatenate %500, %503, %486 in 1 : vector<2x64xf32>, vector<2x64xf32>, vector<2x64xf32> -> vector<2x192xf32>
    %cst_174 = arith.constant dense<0.000000e+00> : vector<2x256xf32>
    %505 = tpu.matmul %504, %339, %cst_174 {dimension_numbers = #tpu.dot_dimension_numbers<[1], [0], [0], [1], [0, 0, 1, 1], [], []>} : vector<2x192xf32>, vector<192x256xf32>, vector<2x256xf32> -> vector<2x256xf32>
    %506 = vector.broadcast %340 : vector<1x256xf32> to vector<2x256xf32>
    %507 = arith.addf %505, %506 : vector<2x256xf32>
    %508 = vector.extract_strided_slice %507 {offsets = [0, 0], sizes = [2, 128], strides = [1, 1]} : vector<2x256xf32> to vector<2x128xf32>
    %509 = arith.negf %508 : vector<2x128xf32>
    %510 = math.exp %509 : vector<2x128xf32>
    %cst_175 = arith.constant 1.000000e+00 : f32
    %511 = vector.broadcast %cst_175 : f32 to vector<2x128xf32>
    %512 = arith.addf %511, %510 : vector<2x128xf32>
    %513 = arith.divf %511, %512 : vector<2x128xf32>
    %514 = vector.extract_strided_slice %513 {offsets = [0, 0], sizes = [2, 64], strides = [1, 1]} : vector<2x128xf32> to vector<2x64xf32>
    %515 = vector.extract_strided_slice %513 {offsets = [0, 64], sizes = [2, 64], strides = [1, 1]} : vector<2x128xf32> to vector<2x64xf32>
    %516 = vector.extract_strided_slice %507 {offsets = [0, 128], sizes = [2, 64], strides = [1, 1]} : vector<2x256xf32> to vector<2x64xf32>
    %517 = vector.extract_strided_slice %507 {offsets = [0, 192], sizes = [2, 64], strides = [1, 1]} : vector<2x256xf32> to vector<2x64xf32>
    %518 = arith.mulf %514, %517 : vector<2x64xf32>
    %519 = arith.addf %516, %518 : vector<2x64xf32>
    %520 = math.tanh %519 : vector<2x64xf32>
    %cst_176 = arith.constant 1.000000e+00 : f32
    %521 = vector.broadcast %cst_176 : f32 to vector<2x64xf32>
    %522 = arith.subf %521, %515 : vector<2x64xf32>
    %523 = arith.mulf %522, %520 : vector<2x64xf32>
    %524 = arith.mulf %515, %486 : vector<2x64xf32>
    %525 = arith.addf %523, %524 : vector<2x64xf32>
    %526 = vector.extract_strided_slice %525 {offsets = [0, 0], sizes = [2, 32], strides = [1, 1]} : vector<2x64xf32> to vector<2x32xf32>
    %527 = arith.index_cast %c4_i32_168 : i32 to index
    %c0_177 = arith.constant 0 : index
    %c0_178 = arith.constant 0 : index
    %528 = vector.load %arg15[%527, %c0_177, %c0_178] : memref<8x2x64xf32, #tpu.memory_space<vmem>>, vector<1x2x32xf32>
    %529 = vector.shape_cast %528 : vector<1x2x32xf32> to vector<2x32xf32>
    %530 = vector.shape_cast %526 : vector<2x32xf32> to vector<1x2x32xf32>
    tpu.vector_store %arg15[%527, %c0_177, %c0_178], %530 {strides = array<i32>} : memref<8x2x64xf32, #tpu.memory_space<vmem>>, vector<1x2x32xf32>,
    %531 = vector.extract_strided_slice %525 {offsets = [0, 32], sizes = [2, 32], strides = [1, 1]} : vector<2x64xf32> to vector<2x32xf32>
    %532 = arith.index_cast %497 : i32 to index
    %c0_179 = arith.constant 0 : index
    %c32_180 = arith.constant 32 : index
    %533 = vector.load %arg15[%532, %c0_179, %c32_180] : memref<8x2x64xf32, #tpu.memory_space<vmem>>, vector<1x2x32xf32>
    %534 = vector.shape_cast %533 : vector<1x2x32xf32> to vector<2x32xf32>
    %535 = vector.shape_cast %531 : vector<2x32xf32> to vector<1x2x32xf32>
    tpu.vector_store %arg15[%532, %c0_179, %c32_180], %535 {strides = array<i32>} : memref<8x2x64xf32, #tpu.memory_space<vmem>>, vector<1x2x32xf32>,
    %c5_i32_181 = arith.constant 5 : i32
    %c7_i32_182 = arith.constant 7 : i32
    %536 = arith.subi %c7_i32_182, %c5_i32_181 : i32
    %537 = arith.index_cast %c5_i32_181 : i32 to index
    %c0_183 = arith.constant 0 : index
    %c0_184 = arith.constant 0 : index
    %538 = vector.load %arg14[%537, %c0_183, %c0_184] : memref<8x2x64xf32, #tpu.memory_space<vmem>>, vector<1x2x64xf32>
    %539 = vector.shape_cast %538 : vector<1x2x64xf32> to vector<2x64xf32>
    %540 = arith.index_cast %536 : i32 to index
    %c0_185 = arith.constant 0 : index
    %c0_186 = arith.constant 0 : index
    %541 = vector.load %arg14[%540, %c0_185, %c0_186] : memref<8x2x64xf32, #tpu.memory_space<vmem>>, vector<1x2x64xf32>
    %542 = vector.shape_cast %541 : vector<1x2x64xf32> to vector<2x64xf32>
    %543 = tpu.concatenate %539, %542, %525 in 1 : vector<2x64xf32>, vector<2x64xf32>, vector<2x64xf32> -> vector<2x192xf32>
    %cst_187 = arith.constant dense<0.000000e+00> : vector<2x256xf32>
    %544 = tpu.matmul %543, %339, %cst_187 {dimension_numbers = #tpu.dot_dimension_numbers<[1], [0], [0], [1], [0, 0, 1, 1], [], []>} : vector<2x192xf32>, vector<192x256xf32>, vector<2x256xf32> -> vector<2x256xf32>
    %545 = vector.broadcast %340 : vector<1x256xf32> to vector<2x256xf32>
    %546 = arith.addf %544, %545 : vector<2x256xf32>
    %547 = vector.extract_strided_slice %546 {offsets = [0, 0], sizes = [2, 128], strides = [1, 1]} : vector<2x256xf32> to vector<2x128xf32>
    %548 = arith.negf %547 : vector<2x128xf32>
    %549 = math.exp %548 : vector<2x128xf32>
    %cst_188 = arith.constant 1.000000e+00 : f32
    %550 = vector.broadcast %cst_188 : f32 to vector<2x128xf32>
    %551 = arith.addf %550, %549 : vector<2x128xf32>
    %552 = arith.divf %550, %551 : vector<2x128xf32>
    %553 = vector.extract_strided_slice %552 {offsets = [0, 0], sizes = [2, 64], strides = [1, 1]} : vector<2x128xf32> to vector<2x64xf32>
    %554 = vector.extract_strided_slice %552 {offsets = [0, 64], sizes = [2, 64], strides = [1, 1]} : vector<2x128xf32> to vector<2x64xf32>
    %555 = vector.extract_strided_slice %546 {offsets = [0, 128], sizes = [2, 64], strides = [1, 1]} : vector<2x256xf32> to vector<2x64xf32>
    %556 = vector.extract_strided_slice %546 {offsets = [0, 192], sizes = [2, 64], strides = [1, 1]} : vector<2x256xf32> to vector<2x64xf32>
    %557 = arith.mulf %553, %556 : vector<2x64xf32>
    %558 = arith.addf %555, %557 : vector<2x64xf32>
    %559 = math.tanh %558 : vector<2x64xf32>
    %cst_189 = arith.constant 1.000000e+00 : f32
    %560 = vector.broadcast %cst_189 : f32 to vector<2x64xf32>
    %561 = arith.subf %560, %554 : vector<2x64xf32>
    %562 = arith.mulf %561, %559 : vector<2x64xf32>
    %563 = arith.mulf %554, %525 : vector<2x64xf32>
    %564 = arith.addf %562, %563 : vector<2x64xf32>
    %565 = vector.extract_strided_slice %564 {offsets = [0, 0], sizes = [2, 32], strides = [1, 1]} : vector<2x64xf32> to vector<2x32xf32>
    %566 = arith.index_cast %c5_i32_181 : i32 to index
    %c0_190 = arith.constant 0 : index
    %c0_191 = arith.constant 0 : index
    %567 = vector.load %arg15[%566, %c0_190, %c0_191] : memref<8x2x64xf32, #tpu.memory_space<vmem>>, vector<1x2x32xf32>
    %568 = vector.shape_cast %567 : vector<1x2x32xf32> to vector<2x32xf32>
    %569 = vector.shape_cast %565 : vector<2x32xf32> to vector<1x2x32xf32>
    tpu.vector_store %arg15[%566, %c0_190, %c0_191], %569 {strides = array<i32>} : memref<8x2x64xf32, #tpu.memory_space<vmem>>, vector<1x2x32xf32>,
    %570 = vector.extract_strided_slice %564 {offsets = [0, 32], sizes = [2, 32], strides = [1, 1]} : vector<2x64xf32> to vector<2x32xf32>
    %571 = arith.index_cast %536 : i32 to index
    %c0_192 = arith.constant 0 : index
    %c32_193 = arith.constant 32 : index
    %572 = vector.load %arg15[%571, %c0_192, %c32_193] : memref<8x2x64xf32, #tpu.memory_space<vmem>>, vector<1x2x32xf32>
    %573 = vector.shape_cast %572 : vector<1x2x32xf32> to vector<2x32xf32>
    %574 = vector.shape_cast %570 : vector<2x32xf32> to vector<1x2x32xf32>
    tpu.vector_store %arg15[%571, %c0_192, %c32_193], %574 {strides = array<i32>} : memref<8x2x64xf32, #tpu.memory_space<vmem>>, vector<1x2x32xf32>,
    %c6_i32_194 = arith.constant 6 : i32
    %c7_i32_195 = arith.constant 7 : i32
    %575 = arith.subi %c7_i32_195, %c6_i32_194 : i32
    %576 = arith.index_cast %c6_i32_194 : i32 to index
    %c0_196 = arith.constant 0 : index
    %c0_197 = arith.constant 0 : index
    %577 = vector.load %arg14[%576, %c0_196, %c0_197] : memref<8x2x64xf32, #tpu.memory_space<vmem>>, vector<1x2x64xf32>
    %578 = vector.shape_cast %577 : vector<1x2x64xf32> to vector<2x64xf32>
    %579 = arith.index_cast %575 : i32 to index
    %c0_198 = arith.constant 0 : index
    %c0_199 = arith.constant 0 : index
    %580 = vector.load %arg14[%579, %c0_198, %c0_199] : memref<8x2x64xf32, #tpu.memory_space<vmem>>, vector<1x2x64xf32>
    %581 = vector.shape_cast %580 : vector<1x2x64xf32> to vector<2x64xf32>
    %582 = tpu.concatenate %578, %581, %564 in 1 : vector<2x64xf32>, vector<2x64xf32>, vector<2x64xf32> -> vector<2x192xf32>
    %cst_200 = arith.constant dense<0.000000e+00> : vector<2x256xf32>
    %583 = tpu.matmul %582, %339, %cst_200 {dimension_numbers = #tpu.dot_dimension_numbers<[1], [0], [0], [1], [0, 0, 1, 1], [], []>} : vector<2x192xf32>, vector<192x256xf32>, vector<2x256xf32> -> vector<2x256xf32>
    %584 = vector.broadcast %340 : vector<1x256xf32> to vector<2x256xf32>
    %585 = arith.addf %583, %584 : vector<2x256xf32>
    %586 = vector.extract_strided_slice %585 {offsets = [0, 0], sizes = [2, 128], strides = [1, 1]} : vector<2x256xf32> to vector<2x128xf32>
    %587 = arith.negf %586 : vector<2x128xf32>
    %588 = math.exp %587 : vector<2x128xf32>
    %cst_201 = arith.constant 1.000000e+00 : f32
    %589 = vector.broadcast %cst_201 : f32 to vector<2x128xf32>
    %590 = arith.addf %589, %588 : vector<2x128xf32>
    %591 = arith.divf %589, %590 : vector<2x128xf32>
    %592 = vector.extract_strided_slice %591 {offsets = [0, 0], sizes = [2, 64], strides = [1, 1]} : vector<2x128xf32> to vector<2x64xf32>
    %593 = vector.extract_strided_slice %591 {offsets = [0, 64], sizes = [2, 64], strides = [1, 1]} : vector<2x128xf32> to vector<2x64xf32>
    %594 = vector.extract_strided_slice %585 {offsets = [0, 128], sizes = [2, 64], strides = [1, 1]} : vector<2x256xf32> to vector<2x64xf32>
    %595 = vector.extract_strided_slice %585 {offsets = [0, 192], sizes = [2, 64], strides = [1, 1]} : vector<2x256xf32> to vector<2x64xf32>
    %596 = arith.mulf %592, %595 : vector<2x64xf32>
    %597 = arith.addf %594, %596 : vector<2x64xf32>
    %598 = math.tanh %597 : vector<2x64xf32>
    %cst_202 = arith.constant 1.000000e+00 : f32
    %599 = vector.broadcast %cst_202 : f32 to vector<2x64xf32>
    %600 = arith.subf %599, %593 : vector<2x64xf32>
    %601 = arith.mulf %600, %598 : vector<2x64xf32>
    %602 = arith.mulf %593, %564 : vector<2x64xf32>
    %603 = arith.addf %601, %602 : vector<2x64xf32>
    %604 = vector.extract_strided_slice %603 {offsets = [0, 0], sizes = [2, 32], strides = [1, 1]} : vector<2x64xf32> to vector<2x32xf32>
    %605 = arith.index_cast %c6_i32_194 : i32 to index
    %c0_203 = arith.constant 0 : index
    %c0_204 = arith.constant 0 : index
    %606 = vector.load %arg15[%605, %c0_203, %c0_204] : memref<8x2x64xf32, #tpu.memory_space<vmem>>, vector<1x2x32xf32>
    %607 = vector.shape_cast %606 : vector<1x2x32xf32> to vector<2x32xf32>
    %608 = vector.shape_cast %604 : vector<2x32xf32> to vector<1x2x32xf32>
    tpu.vector_store %arg15[%605, %c0_203, %c0_204], %608 {strides = array<i32>} : memref<8x2x64xf32, #tpu.memory_space<vmem>>, vector<1x2x32xf32>,
    %609 = vector.extract_strided_slice %603 {offsets = [0, 32], sizes = [2, 32], strides = [1, 1]} : vector<2x64xf32> to vector<2x32xf32>
    %610 = arith.index_cast %575 : i32 to index
    %c0_205 = arith.constant 0 : index
    %c32_206 = arith.constant 32 : index
    %611 = vector.load %arg15[%610, %c0_205, %c32_206] : memref<8x2x64xf32, #tpu.memory_space<vmem>>, vector<1x2x32xf32>
    %612 = vector.shape_cast %611 : vector<1x2x32xf32> to vector<2x32xf32>
    %613 = vector.shape_cast %609 : vector<2x32xf32> to vector<1x2x32xf32>
    tpu.vector_store %arg15[%610, %c0_205, %c32_206], %613 {strides = array<i32>} : memref<8x2x64xf32, #tpu.memory_space<vmem>>, vector<1x2x32xf32>,
    %c7_i32_207 = arith.constant 7 : i32
    %c7_i32_208 = arith.constant 7 : i32
    %614 = arith.subi %c7_i32_208, %c7_i32_207 : i32
    %615 = arith.index_cast %c7_i32_207 : i32 to index
    %c0_209 = arith.constant 0 : index
    %c0_210 = arith.constant 0 : index
    %616 = vector.load %arg14[%615, %c0_209, %c0_210] : memref<8x2x64xf32, #tpu.memory_space<vmem>>, vector<1x2x64xf32>
    %617 = vector.shape_cast %616 : vector<1x2x64xf32> to vector<2x64xf32>
    %618 = arith.index_cast %614 : i32 to index
    %c0_211 = arith.constant 0 : index
    %c0_212 = arith.constant 0 : index
    %619 = vector.load %arg14[%618, %c0_211, %c0_212] : memref<8x2x64xf32, #tpu.memory_space<vmem>>, vector<1x2x64xf32>
    %620 = vector.shape_cast %619 : vector<1x2x64xf32> to vector<2x64xf32>
    %621 = tpu.concatenate %617, %620, %603 in 1 : vector<2x64xf32>, vector<2x64xf32>, vector<2x64xf32> -> vector<2x192xf32>
    %cst_213 = arith.constant dense<0.000000e+00> : vector<2x256xf32>
    %622 = tpu.matmul %621, %339, %cst_213 {dimension_numbers = #tpu.dot_dimension_numbers<[1], [0], [0], [1], [0, 0, 1, 1], [], []>} : vector<2x192xf32>, vector<192x256xf32>, vector<2x256xf32> -> vector<2x256xf32>
    %623 = vector.broadcast %340 : vector<1x256xf32> to vector<2x256xf32>
    %624 = arith.addf %622, %623 : vector<2x256xf32>
    %625 = vector.extract_strided_slice %624 {offsets = [0, 0], sizes = [2, 128], strides = [1, 1]} : vector<2x256xf32> to vector<2x128xf32>
    %626 = arith.negf %625 : vector<2x128xf32>
    %627 = math.exp %626 : vector<2x128xf32>
    %cst_214 = arith.constant 1.000000e+00 : f32
    %628 = vector.broadcast %cst_214 : f32 to vector<2x128xf32>
    %629 = arith.addf %628, %627 : vector<2x128xf32>
    %630 = arith.divf %628, %629 : vector<2x128xf32>
    %631 = vector.extract_strided_slice %630 {offsets = [0, 0], sizes = [2, 64], strides = [1, 1]} : vector<2x128xf32> to vector<2x64xf32>
    %632 = vector.extract_strided_slice %630 {offsets = [0, 64], sizes = [2, 64], strides = [1, 1]} : vector<2x128xf32> to vector<2x64xf32>
    %633 = vector.extract_strided_slice %624 {offsets = [0, 128], sizes = [2, 64], strides = [1, 1]} : vector<2x256xf32> to vector<2x64xf32>
    %634 = vector.extract_strided_slice %624 {offsets = [0, 192], sizes = [2, 64], strides = [1, 1]} : vector<2x256xf32> to vector<2x64xf32>
    %635 = arith.mulf %631, %634 : vector<2x64xf32>
    %636 = arith.addf %633, %635 : vector<2x64xf32>
    %637 = math.tanh %636 : vector<2x64xf32>
    %cst_215 = arith.constant 1.000000e+00 : f32
    %638 = vector.broadcast %cst_215 : f32 to vector<2x64xf32>
    %639 = arith.subf %638, %632 : vector<2x64xf32>
    %640 = arith.mulf %639, %637 : vector<2x64xf32>
    %641 = arith.mulf %632, %603 : vector<2x64xf32>
    %642 = arith.addf %640, %641 : vector<2x64xf32>
    %643 = vector.extract_strided_slice %642 {offsets = [0, 0], sizes = [2, 32], strides = [1, 1]} : vector<2x64xf32> to vector<2x32xf32>
    %644 = arith.index_cast %c7_i32_207 : i32 to index
    %c0_216 = arith.constant 0 : index
    %c0_217 = arith.constant 0 : index
    %645 = vector.load %arg15[%644, %c0_216, %c0_217] : memref<8x2x64xf32, #tpu.memory_space<vmem>>, vector<1x2x32xf32>
    %646 = vector.shape_cast %645 : vector<1x2x32xf32> to vector<2x32xf32>
    %647 = vector.shape_cast %643 : vector<2x32xf32> to vector<1x2x32xf32>
    tpu.vector_store %arg15[%644, %c0_216, %c0_217], %647 {strides = array<i32>} : memref<8x2x64xf32, #tpu.memory_space<vmem>>, vector<1x2x32xf32>,
    %648 = vector.extract_strided_slice %642 {offsets = [0, 32], sizes = [2, 32], strides = [1, 1]} : vector<2x64xf32> to vector<2x32xf32>
    %649 = arith.index_cast %614 : i32 to index
    %c0_218 = arith.constant 0 : index
    %c32_219 = arith.constant 32 : index
    %650 = vector.load %arg15[%649, %c0_218, %c32_219] : memref<8x2x64xf32, #tpu.memory_space<vmem>>, vector<1x2x32xf32>
    %651 = vector.shape_cast %650 : vector<1x2x32xf32> to vector<2x32xf32>
    %652 = vector.shape_cast %648 : vector<2x32xf32> to vector<1x2x32xf32>
    tpu.vector_store %arg15[%649, %c0_218, %c32_219], %652 {strides = array<i32>} : memref<8x2x64xf32, #tpu.memory_space<vmem>>, vector<1x2x32xf32>,
    %c8_i32_220 = arith.constant 8 : i32
    %c0_221 = arith.constant 0 : index
    %c0_222 = arith.constant 0 : index
    %c0_223 = arith.constant 0 : index
    %653 = vector.load %arg15[%c0_221, %c0_222, %c0_223] : memref<8x2x64xf32, #tpu.memory_space<vmem>>, vector<8x2x64xf32>
    %c0_224 = arith.constant 0 : index
    %c0_225 = arith.constant 0 : index
    %654 = vector.load %arg6[%c0_224, %c0_225] : memref<1x64xf32, #tpu.memory_space<vmem>>, vector<1x64xf32>
    %655 = vector.shape_cast %654 : vector<1x64xf32> to vector<1x1x64xf32>
    %656 = vector.broadcast %655 : vector<1x1x64xf32> to vector<8x2x64xf32>
    %657 = arith.mulf %653, %656 : vector<8x2x64xf32>
    %cst_226 = arith.constant dense<0.000000e+00> : vector<8x2xf32>
    %658 = vector.multi_reduction <add>, %657, %cst_226 [2] : vector<8x2x64xf32> to vector<8x2xf32>
    %659 = vector.shape_cast %658 : vector<8x2xf32> to vector<8x2x1xf32>
    %c0_227 = arith.constant 0 : index
    %c0_228 = arith.constant 0 : index
    %c0_229 = arith.constant 0 : index
    %660 = vector.load %arg7[%c0_227, %c0_228, %c0_229] : memref<8x1x1xf32, #tpu.memory_space<vmem>>, vector<8x1x1xf32>
    %661 = vector.broadcast %660 : vector<8x1x1xf32> to vector<8x2x1xf32>
    %662 = arith.addf %659, %661 : vector<8x2x1xf32>
    %663 = math.tanh %662 : vector<8x2x1xf32>
    %664 = math.exp %663 : vector<8x2x1xf32>
    %cst_230 = arith.constant dense<0.000000e+00> : vector<2x1xf32>
    %665 = vector.multi_reduction <add>, %664, %cst_230 [0] : vector<8x2x1xf32> to vector<2x1xf32>
    %666 = vector.shape_cast %665 : vector<2x1xf32> to vector<1x2x1xf32>
    %667 = tpu.reciprocal %666 {approx = true} : vector<1x2x1xf32> -> vector<1x2x1xf32>
    %668 = vector.broadcast %667 : vector<1x2x1xf32> to vector<8x2x1xf32>
    %669 = arith.mulf %664, %668 : vector<8x2x1xf32>
    %cst_231 = arith.constant 1.000000e-10 : f32
    %670 = vector.broadcast %cst_231 : f32 to vector<8x2x1xf32>
    %671 = arith.addf %669, %670 : vector<8x2x1xf32>
    %672 = vector.broadcast %671 : vector<8x2x1xf32> to vector<8x2x64xf32>
    %673 = arith.mulf %653, %672 : vector<8x2x64xf32>
    %cst_232 = arith.constant dense<0.000000e+00> : vector<2x64xf32>
    %674 = vector.multi_reduction <add>, %673, %cst_232 [0] : vector<8x2x64xf32> to vector<2x64xf32>
    %c0_233 = arith.constant 0 : index
    %c0_234 = arith.constant 0 : index
    %675 = vector.load %arg8[%c0_233, %c0_234] : memref<64x32xf32, #tpu.memory_space<vmem>>, vector<64x32xf32>
    %cst_235 = arith.constant dense<0.000000e+00> : vector<2x32xf32>
    %676 = tpu.matmul %674, %675, %cst_235 {dimension_numbers = #tpu.dot_dimension_numbers<[1], [0], [0], [1], [0, 0, 1, 1], [], []>} : vector<2x64xf32>, vector<64x32xf32>, vector<2x32xf32> -> vector<2x32xf32>
    %c0_236 = arith.constant 0 : index
    %c0_237 = arith.constant 0 : index
    %677 = vector.load %arg9[%c0_236, %c0_237] : memref<1x32xf32, #tpu.memory_space<vmem>>, vector<1x32xf32>
    %678 = vector.broadcast %677 : vector<1x32xf32> to vector<2x32xf32>
    %679 = arith.addf %676, %678 : vector<2x32xf32>
    %cst_238 = arith.constant 0.000000e+00 : f32
    %680 = vector.broadcast %cst_238 : f32 to vector<2x32xf32>
    %681 = arith.maximumf %679, %680 : vector<2x32xf32>
    %c0_239 = arith.constant 0 : index
    %c0_240 = arith.constant 0 : index
    %682 = vector.load %arg10[%c0_239, %c0_240] : memref<32x9xf32, #tpu.memory_space<vmem>>, vector<32x9xf32>
    %cst_241 = arith.constant dense<0.000000e+00> : vector<2x9xf32>
    %683 = tpu.matmul %681, %682, %cst_241 {dimension_numbers = #tpu.dot_dimension_numbers<[1], [0], [0], [1], [0, 0, 1, 1], [], []>} : vector<2x32xf32>, vector<32x9xf32>, vector<2x9xf32> -> vector<2x9xf32>
    %c0_242 = arith.constant 0 : index
    %c0_243 = arith.constant 0 : index
    %684 = vector.load %arg11[%c0_242, %c0_243] : memref<1x9xf32, #tpu.memory_space<vmem>>, vector<1x9xf32>
    %685 = vector.broadcast %684 : vector<1x9xf32> to vector<2x9xf32>
    %686 = arith.addf %683, %685 : vector<2x9xf32>
    %c0_244 = arith.constant 0 : index
    %c0_245 = arith.constant 0 : index
    %687 = vector.load %arg12[%c0_244, %c0_245] : memref<2x9xf32, #tpu.memory_space<vmem>>, vector<2x9xf32>
    tpu.vector_store %arg12[%c0_244, %c0_245], %686 {strides = array<i32>} : memref<2x9xf32, #tpu.memory_space<vmem>>, vector<2x9xf32>,
    return
  }
}

</mosaic_0001>

<llo_original>
// kernel: neural_net_forward.1
$region0: #{neural_net_forward.1}
  #allocation0 [shape = 'u32[]', space=smem, size = 0x4, offset = 0x4, fixed_abs, tag = 'smem constant byte address 0x4 - core index']
  #allocation1 [shape = 'u32[144,128]{1,0:T(1,128)}', space=vmem, size = 0x12000, scoped, tag = 'internal scratch']
  #allocation2 [shape = 'f32[8,2,32]{2,1,0:T(2,128)}', space=vmem, size = 0x2000, scoped, tag = 'scratch operand']
  #allocation3 [shape = 'f32[8,2,64]{2,1,0:T(2,128)}', space=vmem, size = 0x2000, scoped, tag = 'scratch operand']
  #allocation4 [shape = 'f32[8,2,64]{2,1,0:T(2,128)}', space=vmem, size = 0x2000, scoped, tag = 'scratch operand']
  %s0 = inlined_call_operand.vmem [shape: s32[16,1], index: 0, kind: input, shape index: {}]
  %s1 = inlined_call_operand.vmem [shape: f32[128,32], index: 1, kind: input, shape index: {}]
  %s2 = inlined_call_operand.vmem [shape: f32[128,256], index: 2, kind: input, shape index: {}]
  %s3 = inlined_call_operand.vmem [shape: f32[1,256], index: 3, kind: input, shape index: {}]
  %s4 = inlined_call_operand.hbm [shape: f32[192,256], index: 4, kind: input, shape index: {}]
  %s5 = inlined_call_operand.vmem [shape: f32[1,256], index: 5, kind: input, shape index: {}]
  %s6 = inlined_call_operand.vmem [shape: f32[1,64], index: 6, kind: input, shape index: {}]
  %s7 = inlined_call_operand.vmem [shape: f32[8,1,1], index: 7, kind: input, shape index: {}]
  %s8 = inlined_call_operand.vmem [shape: f32[64,32], index: 8, kind: input, shape index: {}]
  %s9 = inlined_call_operand.vmem [shape: f32[1,32], index: 9, kind: input, shape index: {}]
  %s10 = inlined_call_operand.vmem [shape: f32[32,9], index: 10, kind: input, shape index: {}]
  %s11 = inlined_call_operand.vmem [shape: f32[1,9], index: 11, kind: input, shape index: {}]
  %s12 = inlined_call_operand.hbm [shape: f32[2,9], index: 12, kind: output, shape index: {}]
  %s13 = sld [smem:[#allocation0]]
  $region62: #{neural_net_forward.1} parent=0
    _
  %s15 = ssub.s32 1, %s13
  %s16 = scalar_select 0, %s15, %s13
  $region1: #{neural_net_forward.1} parent=0
    #allocation5 [shape = 'u8[196608]{0}', space=vmem, size = 0x30000, scoped, tag = 'input window, operand 4, single buffered']
    #allocation6 [shape = 's32[1]{0}', space=sflag, size = 0x4, scoped, tag = 'scoped memory for neural_net_forward.1']
    #allocation7 [shape = 's32[1]{0}', space=sflag, size = 0x4, scoped, tag = 'scoped memory for neural_net_forward.1']
    #allocation8 [shape = 'u8[1024]{0}', space=vmem, size = 0x400, scoped, tag = 'output window, operand 0, single buffered']
    %17 = vsyncpa [#allocation6], 0
    %18 = vsyncpa [#allocation7], 0
    // Predicated region
    $region2: #{neural_net_forward.1} parent=1 // pred_check
      _
    $region3: #{neural_net_forward.1} parent=1 // pred_check_branch
      %20 = sbr.rel (0) target = $region5
    $region4: #{neural_net_forward.1} parent=1 // pred_region
      _
    $region5: #{neural_net_forward.1} parent=1 // pred_fallthru
      _
    // Predicated region
    $region6: #{neural_net_forward.1} parent=1 // pred_check
      _
    $region7: #{neural_net_forward.1} parent=1 // pred_check_branch
      %22 = sbr.rel (0) target = $region9
    $region8: #{neural_net_forward.1} parent=1 // pred_region
      _
    $region9: #{neural_net_forward.1} parent=1 // pred_fallthru
      _
    // Predicated region
    $region10: #{neural_net_forward.1} parent=1 // pred_check
      _
    $region11: #{neural_net_forward.1} parent=1 // pred_check_branch
      %24 = sbr.rel (0) target = $region13
    $region12: #{neural_net_forward.1} parent=1 // pred_region
      _
    $region13: #{neural_net_forward.1} parent=1 // pred_fallthru
      _
    // Predicated region
    $region14: #{neural_net_forward.1} parent=1 // pred_check
      _
    $region15: #{neural_net_forward.1} parent=1 // pred_check_branch
      %26 = sbr.rel (0) target = $region17
    $region16: #{neural_net_forward.1} parent=1 // pred_region
      _
    $region17: #{neural_net_forward.1} parent=1 // pred_fallthru
      _
    // Predicated region
    $region18: #{neural_net_forward.1} parent=1 // pred_check
      _
    $region19: #{neural_net_forward.1} parent=1 // pred_check_branch
      %28 = sbr.rel (0) target = $region21
    $region20: #{neural_net_forward.1} parent=1 // pred_region
      %s30 = ssub.s32 6144, 6144
      %31 = vsyncadd [#allocation6], %s30
      %s32 = sshll.u32 [#allocation5], 4
      %s33 = int_to_ptr.vmem [resolvable:$true] %s32
      %38 = dma.hbm_to_vmem [thread:$0]  %s4, 6144, %s33, [#allocation6], 256, 256, 16
    $region21: #{neural_net_forward.1} parent=1 // pred_fallthru
      _
    // Predicated region
    $region22: #{neural_net_forward.1} parent=1 // pred_check
      _
    $region23: #{neural_net_forward.1} parent=1 // pred_check_branch
      %40 = sbr.rel (0) target = $region25
    $region24: #{neural_net_forward.1} parent=1 // pred_region
      _
    $region25: #{neural_net_forward.1} parent=1 // pred_fallthru
      _
    // Predicated region
    $region26: #{neural_net_forward.1} parent=1 // pred_check
      _
    $region27: #{neural_net_forward.1} parent=1 // pred_check_branch
      %42 = sbr.rel (0) target = $region29
    $region28: #{neural_net_forward.1} parent=1 // pred_region
      _
    $region29: #{neural_net_forward.1} parent=1 // pred_fallthru
      _
    // Predicated region
    $region30: #{neural_net_forward.1} parent=1 // pred_check
      _
    $region31: #{neural_net_forward.1} parent=1 // pred_check_branch
      %44 = sbr.rel (0) target = $region33
    $region32: #{neural_net_forward.1} parent=1 // pred_region
      _
    $region33: #{neural_net_forward.1} parent=1 // pred_fallthru
      _
    // Predicated region
    $region34: #{neural_net_forward.1} parent=1 // pred_check
      _
    $region35: #{neural_net_forward.1} parent=1 // pred_check_branch
      %46 = sbr.rel (0) target = $region37
    $region36: #{neural_net_forward.1} parent=1 // pred_region
      _
    $region37: #{neural_net_forward.1} parent=1 // pred_fallthru
      _
    // Predicated region
    $region38: #{neural_net_forward.1} parent=1 // pred_check
      _
    $region39: #{neural_net_forward.1} parent=1 // pred_check_branch
      %48 = sbr.rel (0) target = $region41
    $region40: #{neural_net_forward.1} parent=1 // pred_region
      _
    $region41: #{neural_net_forward.1} parent=1 // pred_fallthru
      _
    // Predicated region
    $region42: #{neural_net_forward.1} parent=1 // pred_check
      _
    $region43: #{neural_net_forward.1} parent=1 // pred_check_branch
      %50 = sbr.rel (0) target = $region45
    $region44: #{neural_net_forward.1} parent=1 // pred_region
      _
    $region45: #{neural_net_forward.1} parent=1 // pred_fallthru
      _
    // Predicated region
    $region46: #{neural_net_forward.1} parent=1 // pred_check
      _
    $region47: #{neural_net_forward.1} parent=1 // pred_check_branch
      %52 = sbr.rel (0) target = $region49
    $region48: #{neural_net_forward.1} parent=1 // pred_region
      _
    $region49: #{neural_net_forward.1} parent=1 // pred_fallthru
      _
    // Predicated region
    $region50: #{neural_net_forward.1} parent=1 // pred_check
      _
    $region51: #{neural_net_forward.1} parent=1 // pred_check_branch
      %54 = sbr.rel (0) target = $region53
    $region52: #{neural_net_forward.1} parent=1 // pred_region
      %55 = dma.done [#allocation6], 6144
    $region53: #{neural_net_forward.1} parent=1 // pred_fallthru
      _
    %v56 = vld [vmem:[%s0] sm:$0xff]
    %v57 = vld [vmem:[%s0 + $0x8] sm:$0xff]
    %v58 = vlaneseq
    %v59 = vand.u32 %v58, 127
    %60 = vset.pattern.permute.xlu0 0
    %61 = vperm.xlu0 %60, %v56
    %v62 = vpop.permute.xlu0 %61
    %63 = vset.pattern.permute.xlu0 0
    %64 = vperm.xlu0 %63, %v57
    %v65 = vpop.permute.xlu0 %64
    %vm66 = vcmp.eq.s32.totalorder %v59, %v62
    %vm67 = vcmp.eq.s32.totalorder %v59, %v65
    %v68 = vsel %vm66, 1, 0
    %v69 = vsel %vm67, 1, 0
    %v70 = vcvt.s32.f32 %v68
    %v71 = vcvt.s32.f32 %v69
    %v72 = vld [vmem:[%s1] sm:$0xff]
    %v73 = vld [vmem:[%s1 + $0x8] sm:$0xff]
    %v74 = vld [vmem:[%s1 + $0x10] sm:$0xff]
    %v75 = vld [vmem:[%s1 + $0x18] sm:$0xff]
    %v76 = vld [vmem:[%s1 + $0x20] sm:$0xff]
    %v77 = vld [vmem:[%s1 + $0x28] sm:$0xff]
    %v78 = vld [vmem:[%s1 + $0x30] sm:$0xff]
    %v79 = vld [vmem:[%s1 + $0x38] sm:$0xff]
    %v80 = vld [vmem:[%s1 + $0x40] sm:$0xff]
    %v81 = vld [vmem:[%s1 + $0x48] sm:$0xff]
    %v82 = vld [vmem:[%s1 + $0x50] sm:$0xff]
    %v83 = vld [vmem:[%s1 + $0x58] sm:$0xff]
    %v84 = vld [vmem:[%s1 + $0x60] sm:$0xff]
    %v85 = vld [vmem:[%s1 + $0x68] sm:$0xff]
    %v86 = vld [vmem:[%s1 + $0x70] sm:$0xff]
    %v87 = vld [vmem:[%s1 + $0x78] sm:$0xff]
    %88 = vmatprep.subr.mxu0 0.0
    %89 = vmatpush1.msra.mxu0 %v87
    %90 = vmatprep.subr.mxu0 0.0
    %91 = vmatpush1.msra.mxu0 %v86
    %92 = vmatprep.subr.mxu0 0.0
    %93 = vmatpush1.msra.mxu0 %v85
    %94 = vmatprep.subr.mxu0 0.0
    %95 = vmatpush1.msra.mxu0 %v84
    %96 = vmatprep.subr.mxu0 0.0
    %97 = vmatpush1.msra.mxu0 %v83
    %98 = vmatprep.subr.mxu0 0.0
    %99 = vmatpush1.msra.mxu0 %v82
    %100 = vmatprep.subr.mxu0 0.0
    %101 = vmatpush1.msra.mxu0 %v81
    %102 = vmatprep.subr.mxu0 0.0
    %103 = vmatpush1.msra.mxu0 %v80
    %104 = vmatprep.subr.mxu0 0.0
    %105 = vmatpush1.msra.mxu0 %v79
    %106 = vmatprep.subr.mxu0 0.0
    %107 = vmatpush1.msra.mxu0 %v78
    %108 = vmatprep.subr.mxu0 0.0
    %109 = vmatpush1.msra.mxu0 %v77
    %110 = vmatprep.subr.mxu0 0.0
    %111 = vmatpush1.msra.mxu0 %v76
    %112 = vmatprep.subr.mxu0 0.0
    %113 = vmatpush1.msra.mxu0 %v75
    %114 = vmatprep.subr.mxu0 0.0
    %115 = vmatpush1.msra.mxu0 %v74
    %116 = vmatprep.subr.mxu0 0.0
    %117 = vmatpush1.msra.mxu0 %v73
    %118 = vmatprep.subr.mxu0 0.0
    %119 = vmatpush1.msra.mxu0 %v72
    %120 = vmatprep.subr.mxu0 0.0
    %121 = vmatpush2.msra.mxu0 0.0
    %122 = vmatprep.subr.mxu0 0.0
    %123 = vmatpush2.msra.mxu0 0.0
    %124 = vmatprep.subr.mxu0 0.0
    %125 = vmatpush2.msra.mxu0 0.0
    %126 = vmatprep.subr.mxu0 0.0
    %127 = vmatpush2.msra.mxu0 0.0
    %128 = vmatprep.subr.mxu0 0.0
    %129 = vmatpush2.msra.mxu0 0.0
    %130 = vmatprep.subr.mxu0 0.0
    %131 = vmatpush2.msra.mxu0 0.0
    %132 = vmatprep.subr.mxu0 0.0
    %133 = vmatpush2.msra.mxu0 0.0
    %134 = vmatprep.subr.mxu0 0.0
    %135 = vmatpush2.msra.mxu0 0.0
    %136 = vmatprep.subr.mxu0 0.0
    %137 = vmatpush2.msra.mxu0 0.0
    %138 = vmatprep.subr.mxu0 0.0
    %139 = vmatpush2.msra.mxu0 0.0
    %140 = vmatprep.subr.mxu0 0.0
    %141 = vmatpush2.msra.mxu0 0.0
    %142 = vmatprep.subr.mxu0 0.0
    %143 = vmatpush2.msra.mxu0 0.0
    %144 = vmatprep.subr.mxu0 0.0
    %145 = vmatpush2.msra.mxu0 0.0
    %146 = vmatprep.subr.mxu0 0.0
    %147 = vmatpush2.msra.mxu0 0.0
    %148 = vmatprep.subr.mxu0 0.0
    %149 = vmatpush2.msra.mxu0 0.0
    %150 = vmatprep.subr.mxu0 0.0
    %151 = vmatpush2.msra.mxu0 0.0
    %152 = vmatprep.mubr.f32.mxu0 0.0
    %153 = vmatmul.mubr.f32.gmra.mxu0 %v70
    %v154 = vpop.f32.mrf.mxu0
    %v155 = vadd.f32 0.0, %v154
    %v156 = vpop.f32.mrf.mxu0
    %157 = vmatprep.mubr.f32.mxu0 0.0
    %158 = vmatmul.mubr.f32.gmra.mxu0 %v71
    %v159 = vpop.f32.mrf.mxu0
    %v160 = vadd.f32 0.0, %v159
    %v161 = vpop.f32.mrf.mxu0
    %162 = vdwg.mxu0
    %vm163 = vcmask 254976
    %164 = vst.msk [vmem:[#allocation2] sm:$0x3] %vm163, %v155
    %s165 = scalar_lea.vmem [#allocation2], 2
    %vm166 = vcmask 257026
    %167 = vst.msk [vmem:[%s165 - $0x2] sm:$0xc] %vm166, %v155
    %s168 = scalar_lea.vmem [#allocation2], 4
    %vm169 = vcmask 259076
    %170 = vst.msk [vmem:[%s168 - $0x4] sm:$0x30] %vm169, %v155
    %s171 = scalar_lea.vmem [#allocation2], 6
    %vm172 = vcmask 261126
    %173 = vst.msk [vmem:[%s171 - $0x6] sm:$0xc0] %vm172, %v155
    %s174 = scalar_lea.vmem [#allocation2], 8
    %175 = vst.msk [vmem:[%s174] sm:$0x3] %vm163, %v160
    %s176 = scalar_lea.vmem [#allocation2], 10
    %177 = vst.msk [vmem:[%s176 - $0x2] sm:$0xc] %vm166, %v160
    %s178 = scalar_lea.vmem [#allocation2], 12
    %179 = vst.msk [vmem:[%s178 - $0x4] sm:$0x30] %vm169, %v160
    %s180 = scalar_lea.vmem [#allocation2], 14
    %181 = vst.msk [vmem:[%s180 - $0x6] sm:$0xc0] %vm172, %v160
    %v182 = vld [vmem:[%s2] sm:$0xff]
    %v183 = vld [vmem:[%s2 + $0x8] sm:$0xff]
    %v184 = vld [vmem:[%s2 + $0x10] sm:$0xff]
    %v185 = vld [vmem:[%s2 + $0x18] sm:$0xff]
    %v186 = vld [vmem:[%s2 + $0x20] sm:$0xff]
    %v187 = vld [vmem:[%s2 + $0x28] sm:$0xff]
    %v188 = vld [vmem:[%s2 + $0x30] sm:$0xff]
    %v189 = vld [vmem:[%s2 + $0x38] sm:$0xff]
    %v190 = vld [vmem:[%s2 + $0x40] sm:$0xff]
    %v191 = vld [vmem:[%s2 + $0x48] sm:$0xff]
    %v192 = vld [vmem:[%s2 + $0x50] sm:$0xff]
    %v193 = vld [vmem:[%s2 + $0x58] sm:$0xff]
    %v194 = vld [vmem:[%s2 + $0x60] sm:$0xff]
    %v195 = vld [vmem:[%s2 + $0x68] sm:$0xff]
    %v196 = vld [vmem:[%s2 + $0x70] sm:$0xff]
    %v197 = vld [vmem:[%s2 + $0x78] sm:$0xff]
    %v198 = vld [vmem:[%s2 + $0x80] sm:$0xff]
    %v199 = vld [vmem:[%s2 + $0x88] sm:$0xff]
    %v200 = vld [vmem:[%s2 + $0x90] sm:$0xff]
    %v201 = vld [vmem:[%s2 + $0x98] sm:$0xff]
    %v202 = vld [vmem:[%s2 + $0xa0] sm:$0xff]
    %v203 = vld [vmem:[%s2 + $0xa8] sm:$0xff]
    %v204 = vld [vmem:[%s2 + $0xb0] sm:$0xff]
    %v205 = vld [vmem:[%s2 + $0xb8] sm:$0xff]
    %v206 = vld [vmem:[%s2 + $0xc0] sm:$0xff]
    %v207 = vld [vmem:[%s2 + $0xc8] sm:$0xff]
    %v208 = vld [vmem:[%s2 + $0xd0] sm:$0xff]
    %v209 = vld [vmem:[%s2 + $0xd8] sm:$0xff]
    %v210 = vld [vmem:[%s2 + $0xe0] sm:$0xff]
    %v211 = vld [vmem:[%s2 + $0xe8] sm:$0xff]
    %v212 = vld [vmem:[%s2 + $0xf0] sm:$0xff]
    %v213 = vld [vmem:[%s2 + $0xf8] sm:$0xff]
    %v214 = vld [vmem:[%s3] sm:$0x3]
    %v215 = vld [vmem:[#allocation2] sm:$0x3]
    %v216 = vld [vmem:[%s180] sm:$0x3]
    %218 = vrot.lane.b32.xlu0 %v216, 32
    %v219 = vpop.permute.xlu0 %218
    %vm221 = vcmask 261120
    %v222 = vsel %vm221, %v215, %v219
    %vm223 = vcmask 523264
    %v224 = vsel %vm223, %v222, 0.0
    %v226 = vlaneseq
    %v227 = vshrl.u32 %v226, 7
    %v228 = vsub.s32 0, %v227
    %v229 = vrot.slane %v214, %v228
    %v230 = vlaneseq
    %v231 = vshrl.u32 %v230, 7
    %v232 = vsub.s32 1, %v231
    %v233 = vrot.slane %v214, %v232
    %236 = vmatprep.subr.mxu0 %v213
    %237 = vmatpush1.msra.mxu0 %v212
    %238 = vmatprep.subr.mxu0 %v211
    %239 = vmatpush1.msra.mxu0 %v210
    %240 = vmatprep.subr.mxu0 %v209
    %241 = vmatpush1.msra.mxu0 %v208
    %242 = vmatprep.subr.mxu0 %v207
    %243 = vmatpush1.msra.mxu0 %v206
    %244 = vmatprep.subr.mxu0 %v205
    %245 = vmatpush1.msra.mxu0 %v204
    %246 = vmatprep.subr.mxu0 %v203
    %247 = vmatpush1.msra.mxu0 %v202
    %248 = vmatprep.subr.mxu0 %v201
    %249 = vmatpush1.msra.mxu0 %v200
    %250 = vmatprep.subr.mxu0 %v199
    %251 = vmatpush1.msra.mxu0 %v198
    %252 = vmatprep.subr.mxu0 %v197
    %253 = vmatpush1.msra.mxu0 %v196
    %254 = vmatprep.subr.mxu0 %v195
    %255 = vmatpush1.msra.mxu0 %v194
    %256 = vmatprep.subr.mxu0 %v193
    %257 = vmatpush1.msra.mxu0 %v192
    %258 = vmatprep.subr.mxu0 %v191
    %259 = vmatpush1.msra.mxu0 %v190
    %260 = vmatprep.subr.mxu0 %v189
    %261 = vmatpush1.msra.mxu0 %v188
    %262 = vmatprep.subr.mxu0 %v187
    %263 = vmatpush1.msra.mxu0 %v186
    %264 = vmatprep.subr.mxu0 %v185
    %265 = vmatpush1.msra.mxu0 %v184
    %266 = vmatprep.subr.mxu0 %v183
    %267 = vmatpush1.msra.mxu0 %v182
    %268 = vmatprep.subr.mxu0 0.0
    %269 = vmatpush2.msra.mxu0 0.0
    %270 = vmatprep.subr.mxu0 0.0
    %271 = vmatpush2.msra.mxu0 0.0
    %272 = vmatprep.subr.mxu0 0.0
    %273 = vmatpush2.msra.mxu0 0.0
    %274 = vmatprep.subr.mxu0 0.0
    %275 = vmatpush2.msra.mxu0 0.0
    %276 = vmatprep.subr.mxu0 0.0
    %277 = vmatpush2.msra.mxu0 0.0
    %278 = vmatprep.subr.mxu0 0.0
    %279 = vmatpush2.msra.mxu0 0.0
    %280 = vmatprep.subr.mxu0 0.0
    %281 = vmatpush2.msra.mxu0 0.0
    %282 = vmatprep.subr.mxu0 0.0
    %283 = vmatpush2.msra.mxu0 0.0
    %284 = vmatprep.subr.mxu0 0.0
    %285 = vmatpush2.msra.mxu0 0.0
    %286 = vmatprep.subr.mxu0 0.0
    %287 = vmatpush2.msra.mxu0 0.0
    %288 = vmatprep.subr.mxu0 0.0
    %289 = vmatpush2.msra.mxu0 0.0
    %290 = vmatprep.subr.mxu0 0.0
    %291 = vmatpush2.msra.mxu0 0.0
    %292 = vmatprep.subr.mxu0 0.0
    %293 = vmatpush2.msra.mxu0 0.0
    %294 = vmatprep.subr.mxu0 0.0
    %295 = vmatpush2.msra.mxu0 0.0
    %296 = vmatprep.subr.mxu0 0.0
    %297 = vmatpush2.msra.mxu0 0.0
    %298 = vmatprep.subr.mxu0 0.0
    %299 = vmatpush2.msra.mxu0 0.0
    %300 = vmatprep.mubr.f32.mxu0 0.0
    %301 = vmatmul.mubr.f32.gmra.mxu0 %v224
    %v302 = vpop.f32.mrf.mxu0
    %v303 = vadd.f32 %v229, %v302
    %v304 = vpop.f32.mrf.mxu0
    %v305 = vadd.f32 %v233, %v304
    %306 = vdwg.mxu0
    %v307 = vxor.u32 %v303, 2147483648
    %v308 = vxor.u32 %v305, 2147483648
    %v309 = vmul.f32 %v307, 1.442695
    %v310 = vpow.pop %v309
    %v311 = vmul.f32 %v308, 1.442695
    %v312 = vpow.pop %v311
    %v313 = vadd.f32 %v310, 1.0
    %v314 = vadd.f32 %v312, 1.0
    %v315 = vrcp.pop %v313
    %v316 = vmul.f32 1.0, %v315
    %v317 = vrcp.pop %v314
    %v318 = vmul.f32 1.0, %v317
    %v319 = vtanh.pop %v305
    %v320 = vmul.f32 %v316, 0.0
    %322 = vrot.lane.b32.xlu0 %v319, 64
    %v323 = vpop.permute.xlu0 %322
    %v325 = vmul.f32 %v316, %v323
    %327 = vrot.lane.b32.xlu0 %v325, 64
    %v328 = vpop.permute.xlu0 %327
    %v330 = vadd.f32 %v320, %v328
    %v331 = vtanh.pop %v330
    %333 = vrot.lane.b32.xlu0 %v331, 64
    %v334 = vpop.permute.xlu0 %333
    %v336 = vmul.f32 %v318, %v334
    %337 = vst.msk [vmem:[#allocation3] sm:$0x3] %vm163, %v336
    %s338 = scalar_lea.vmem [#allocation3], 14
    %vm339 = vcmask 517376
    %340 = vst.msk [vmem:[%s338] sm:$0x3] %vm339, %v336
    %v341 = vld [vmem:[%s165] sm:$0x3]
    %v342 = vld [vmem:[%s178] sm:$0x3]
    %344 = vrot.lane.b32.xlu0 %v342, 32
    %v345 = vpop.permute.xlu0 %344
    %348 = vrot.lane.b32.xlu0 %v336, 64
    %v349 = vpop.permute.xlu0 %348
    %v351 = vsel %vm221, %v341, %v345
    %v352 = vsel %vm223, %v351, %v349
    %353 = vmatprep.subr.mxu0 %v213
    %354 = vmatpush1.msra.mxu0 %v212
    %355 = vmatprep.subr.mxu0 %v211
    %356 = vmatpush1.msra.mxu0 %v210
    %357 = vmatprep.subr.mxu0 %v209
    %358 = vmatpush1.msra.mxu0 %v208
    %359 = vmatprep.subr.mxu0 %v207
    %360 = vmatpush1.msra.mxu0 %v206
    %361 = vmatprep.subr.mxu0 %v205
    %362 = vmatpush1.msra.mxu0 %v204
    %363 = vmatprep.subr.mxu0 %v203
    %364 = vmatpush1.msra.mxu0 %v202
    %365 = vmatprep.subr.mxu0 %v201
    %366 = vmatpush1.msra.mxu0 %v200
    %367 = vmatprep.subr.mxu0 %v199
    %368 = vmatpush1.msra.mxu0 %v198
    %369 = vmatprep.subr.mxu0 %v197
    %370 = vmatpush1.msra.mxu0 %v196
    %371 = vmatprep.subr.mxu0 %v195
    %372 = vmatpush1.msra.mxu0 %v194
    %373 = vmatprep.subr.mxu0 %v193
    %374 = vmatpush1.msra.mxu0 %v192
    %375 = vmatprep.subr.mxu0 %v191
    %376 = vmatpush1.msra.mxu0 %v190
    %377 = vmatprep.subr.mxu0 %v189
    %378 = vmatpush1.msra.mxu0 %v188
    %379 = vmatprep.subr.mxu0 %v187
    %380 = vmatpush1.msra.mxu0 %v186
    %381 = vmatprep.subr.mxu0 %v185
    %382 = vmatpush1.msra.mxu0 %v184
    %383 = vmatprep.subr.mxu0 %v183
    %384 = vmatpush1.msra.mxu0 %v182
    %385 = vmatprep.subr.mxu0 0.0
    %386 = vmatpush2.msra.mxu0 0.0
    %387 = vmatprep.subr.mxu0 0.0
    %388 = vmatpush2.msra.mxu0 0.0
    %389 = vmatprep.subr.mxu0 0.0
    %390 = vmatpush2.msra.mxu0 0.0
    %391 = vmatprep.subr.mxu0 0.0
    %392 = vmatpush2.msra.mxu0 0.0
    %393 = vmatprep.subr.mxu0 0.0
    %394 = vmatpush2.msra.mxu0 0.0
    %395 = vmatprep.subr.mxu0 0.0
    %396 = vmatpush2.msra.mxu0 0.0
    %397 = vmatprep.subr.mxu0 0.0
    %398 = vmatpush2.msra.mxu0 0.0
    %399 = vmatprep.subr.mxu0 0.0
    %400 = vmatpush2.msra.mxu0 0.0
    %401 = vmatprep.subr.mxu0 0.0
    %402 = vmatpush2.msra.mxu0 0.0
    %403 = vmatprep.subr.mxu0 0.0
    %404 = vmatpush2.msra.mxu0 0.0
    %405 = vmatprep.subr.mxu0 0.0
    %406 = vmatpush2.msra.mxu0 0.0
    %407 = vmatprep.subr.mxu0 0.0
    %408 = vmatpush2.msra.mxu0 0.0
    %409 = vmatprep.subr.mxu0 0.0
    %410 = vmatpush2.msra.mxu0 0.0
    %411 = vmatprep.subr.mxu0 0.0
    %412 = vmatpush2.msra.mxu0 0.0
    %413 = vmatprep.subr.mxu0 0.0
    %414 = vmatpush2.msra.mxu0 0.0
    %415 = vmatprep.subr.mxu0 0.0
    %416 = vmatpush2.msra.mxu0 0.0
    %417 = vmatprep.mubr.f32.mxu0 0.0
    %418 = vmatmul.mubr.f32.gmra.mxu0 %v352
    %v419 = vpop.f32.mrf.mxu0
    %v420 = vadd.f32 %v229, %v419
    %v421 = vpop.f32.mrf.mxu0
    %v422 = vadd.f32 %v233, %v421
    %423 = vdwg.mxu0
    %v424 = vxor.u32 %v420, 2147483648
    %v425 = vxor.u32 %v422, 2147483648
    %v426 = vmul.f32 %v424, 1.442695
    %v427 = vpow.pop %v426
    %v428 = vmul.f32 %v425, 1.442695
    %v429 = vpow.pop %v428
    %v430 = vadd.f32 %v427, 1.0
    %v431 = vadd.f32 %v429, 1.0
    %v432 = vrcp.pop %v430
    %v433 = vmul.f32 1.0, %v432
    %v434 = vrcp.pop %v431
    %v435 = vmul.f32 1.0, %v434
    %v436 = vtanh.pop %v422
    %v437 = vmul.f32 %v433, %v330
    %439 = vrot.lane.b32.xlu0 %v436, 64
    %v440 = vpop.permute.xlu0 %439
    %v442 = vmul.f32 %v433, %v440
    %444 = vrot.lane.b32.xlu0 %v442, 64
    %v445 = vpop.permute.xlu0 %444
    %v447 = vadd.f32 %v437, %v445
    %v448 = vtanh.pop %v447
    %450 = vrot.lane.b32.xlu0 %v448, 64
    %v451 = vpop.permute.xlu0 %450
    %v453 = vmul.f32 %v435, %v451
    %s454 = scalar_lea.vmem [#allocation3], 2
    %455 = vst.msk [vmem:[%s454] sm:$0x3] %vm163, %v453
    %s456 = scalar_lea.vmem [#allocation3], 12
    %457 = vst.msk [vmem:[%s456] sm:$0x3] %vm339, %v453
    %v458 = vld [vmem:[%s168] sm:$0x3]
    %v459 = vld [vmem:[%s176] sm:$0x3]
    %461 = vrot.lane.b32.xlu0 %v459, 32
    %v462 = vpop.permute.xlu0 %461
    %465 = vrot.lane.b32.xlu0 %v453, 64
    %v466 = vpop.permute.xlu0 %465
    %v468 = vsel %vm221, %v458, %v462
    %v469 = vsel %vm223, %v468, %v466
    %470 = vmatprep.subr.mxu0 %v213
    %471 = vmatpush1.msra.mxu0 %v212
    %472 = vmatprep.subr.mxu0 %v211
    %473 = vmatpush1.msra.mxu0 %v210
    %474 = vmatprep.subr.mxu0 %v209
    %475 = vmatpush1.msra.mxu0 %v208
    %476 = vmatprep.subr.mxu0 %v207
    %477 = vmatpush1.msra.mxu0 %v206
    %478 = vmatprep.subr.mxu0 %v205
    %479 = vmatpush1.msra.mxu0 %v204
    %480 = vmatprep.subr.mxu0 %v203
    %481 = vmatpush1.msra.mxu0 %v202
    %482 = vmatprep.subr.mxu0 %v201
    %483 = vmatpush1.msra.mxu0 %v200
    %484 = vmatprep.subr.mxu0 %v199
    %485 = vmatpush1.msra.mxu0 %v198
    %486 = vmatprep.subr.mxu0 %v197
    %487 = vmatpush1.msra.mxu0 %v196
    %488 = vmatprep.subr.mxu0 %v195
    %489 = vmatpush1.msra.mxu0 %v194
    %490 = vmatprep.subr.mxu0 %v193
    %491 = vmatpush1.msra.mxu0 %v192
    %492 = vmatprep.subr.mxu0 %v191
    %493 = vmatpush1.msra.mxu0 %v190
    %494 = vmatprep.subr.mxu0 %v189
    %495 = vmatpush1.msra.mxu0 %v188
    %496 = vmatprep.subr.mxu0 %v187
    %497 = vmatpush1.msra.mxu0 %v186
    %498 = vmatprep.subr.mxu0 %v185
    %499 = vmatpush1.msra.mxu0 %v184
    %500 = vmatprep.subr.mxu0 %v183
    %501 = vmatpush1.msra.mxu0 %v182
    %502 = vmatprep.subr.mxu0 0.0
    %503 = vmatpush2.msra.mxu0 0.0
    %504 = vmatprep.subr.mxu0 0.0
    %505 = vmatpush2.msra.mxu0 0.0
    %506 = vmatprep.subr.mxu0 0.0
    %507 = vmatpush2.msra.mxu0 0.0
    %508 = vmatprep.subr.mxu0 0.0
    %509 = vmatpush2.msra.mxu0 0.0
    %510 = vmatprep.subr.mxu0 0.0
    %511 = vmatpush2.msra.mxu0 0.0
    %512 = vmatprep.subr.mxu0 0.0
    %513 = vmatpush2.msra.mxu0 0.0
    %514 = vmatprep.subr.mxu0 0.0
    %515 = vmatpush2.msra.mxu0 0.0
    %516 = vmatprep.subr.mxu0 0.0
    %517 = vmatpush2.msra.mxu0 0.0
    %518 = vmatprep.subr.mxu0 0.0
    %519 = vmatpush2.msra.mxu0 0.0
    %520 = vmatprep.subr.mxu0 0.0
    %521 = vmatpush2.msra.mxu0 0.0
    %522 = vmatprep.subr.mxu0 0.0
    %523 = vmatpush2.msra.mxu0 0.0
    %524 = vmatprep.subr.mxu0 0.0
    %525 = vmatpush2.msra.mxu0 0.0
    %526 = vmatprep.subr.mxu0 0.0
    %527 = vmatpush2.msra.mxu0 0.0
    %528 = vmatprep.subr.mxu0 0.0
    %529 = vmatpush2.msra.mxu0 0.0
    %530 = vmatprep.subr.mxu0 0.0
    %531 = vmatpush2.msra.mxu0 0.0
    %532 = vmatprep.subr.mxu0 0.0
    %533 = vmatpush2.msra.mxu0 0.0
    %534 = vmatprep.mubr.f32.mxu0 0.0
    %535 = vmatmul.mubr.f32.gmra.mxu0 %v469
    %v536 = vpop.f32.mrf.mxu0
    %v537 = vadd.f32 %v229, %v536
    %v538 = vpop.f32.mrf.mxu0
    %v539 = vadd.f32 %v233, %v538
    %540 = vdwg.mxu0
    %v541 = vxor.u32 %v537, 2147483648
    %v542 = vxor.u32 %v539, 2147483648
    %v543 = vmul.f32 %v541, 1.442695
    %v544 = vpow.pop %v543
    %v545 = vmul.f32 %v542, 1.442695
    %v546 = vpow.pop %v545
    %v547 = vadd.f32 %v544, 1.0
    %v548 = vadd.f32 %v546, 1.0
    %v549 = vrcp.pop %v547
    %v550 = vmul.f32 1.0, %v549
    %v551 = vrcp.pop %v548
    %v552 = vmul.f32 1.0, %v551
    %v553 = vtanh.pop %v539
    %v554 = vmul.f32 %v550, %v447
    %556 = vrot.lane.b32.xlu0 %v553, 64
    %v557 = vpop.permute.xlu0 %556
    %v559 = vmul.f32 %v550, %v557
    %561 = vrot.lane.b32.xlu0 %v559, 64
    %v562 = vpop.permute.xlu0 %561
    %v564 = vadd.f32 %v554, %v562
    %v565 = vtanh.pop %v564
    %567 = vrot.lane.b32.xlu0 %v565, 64
    %v568 = vpop.permute.xlu0 %567
    %v570 = vmul.f32 %v552, %v568
    %s571 = scalar_lea.vmem [#allocation3], 4
    %572 = vst.msk [vmem:[%s571] sm:$0x3] %vm163, %v570
    %s573 = scalar_lea.vmem [#allocation3], 10
    %574 = vst.msk [vmem:[%s573] sm:$0x3] %vm339, %v570
    %v575 = vld [vmem:[%s171] sm:$0x3]
    %v576 = vld [vmem:[%s174] sm:$0x3]
    %578 = vrot.lane.b32.xlu0 %v576, 32
    %v579 = vpop.permute.xlu0 %578
    %582 = vrot.lane.b32.xlu0 %v570, 64
    %v583 = vpop.permute.xlu0 %582
    %v585 = vsel %vm221, %v575, %v579
    %v586 = vsel %vm223, %v585, %v583
    %587 = vmatprep.subr.mxu0 %v213
    %588 = vmatpush1.msra.mxu0 %v212
    %589 = vmatprep.subr.mxu0 %v211
    %590 = vmatpush1.msra.mxu0 %v210
    %591 = vmatprep.subr.mxu0 %v209
    %592 = vmatpush1.msra.mxu0 %v208
    %593 = vmatprep.subr.mxu0 %v207
    %594 = vmatpush1.msra.mxu0 %v206
    %595 = vmatprep.subr.mxu0 %v205
    %596 = vmatpush1.msra.mxu0 %v204
    %597 = vmatprep.subr.mxu0 %v203
    %598 = vmatpush1.msra.mxu0 %v202
    %599 = vmatprep.subr.mxu0 %v201
    %600 = vmatpush1.msra.mxu0 %v200
    %601 = vmatprep.subr.mxu0 %v199
    %602 = vmatpush1.msra.mxu0 %v198
    %603 = vmatprep.subr.mxu0 %v197
    %604 = vmatpush1.msra.mxu0 %v196
    %605 = vmatprep.subr.mxu0 %v195
    %606 = vmatpush1.msra.mxu0 %v194
    %607 = vmatprep.subr.mxu0 %v193
    %608 = vmatpush1.msra.mxu0 %v192
    %609 = vmatprep.subr.mxu0 %v191
    %610 = vmatpush1.msra.mxu0 %v190
    %611 = vmatprep.subr.mxu0 %v189
    %612 = vmatpush1.msra.mxu0 %v188
    %613 = vmatprep.subr.mxu0 %v187
    %614 = vmatpush1.msra.mxu0 %v186
    %615 = vmatprep.subr.mxu0 %v185
    %616 = vmatpush1.msra.mxu0 %v184
    %617 = vmatprep.subr.mxu0 %v183
    %618 = vmatpush1.msra.mxu0 %v182
    %619 = vmatprep.subr.mxu0 0.0
    %620 = vmatpush2.msra.mxu0 0.0
    %621 = vmatprep.subr.mxu0 0.0
    %622 = vmatpush2.msra.mxu0 0.0
    %623 = vmatprep.subr.mxu0 0.0
    %624 = vmatpush2.msra.mxu0 0.0
    %625 = vmatprep.subr.mxu0 0.0
    %626 = vmatpush2.msra.mxu0 0.0
    %627 = vmatprep.subr.mxu0 0.0
    %628 = vmatpush2.msra.mxu0 0.0
    %629 = vmatprep.subr.mxu0 0.0
    %630 = vmatpush2.msra.mxu0 0.0
    %631 = vmatprep.subr.mxu0 0.0
    %632 = vmatpush2.msra.mxu0 0.0
    %633 = vmatprep.subr.mxu0 0.0
    %634 = vmatpush2.msra.mxu0 0.0
    %635 = vmatprep.subr.mxu0 0.0
    %636 = vmatpush2.msra.mxu0 0.0
    %637 = vmatprep.subr.mxu0 0.0
    %638 = vmatpush2.msra.mxu0 0.0
    %639 = vmatprep.subr.mxu0 0.0
    %640 = vmatpush2.msra.mxu0 0.0
    %641 = vmatprep.subr.mxu0 0.0
    %642 = vmatpush2.msra.mxu0 0.0
    %643 = vmatprep.subr.mxu0 0.0
    %644 = vmatpush2.msra.mxu0 0.0
    %645 = vmatprep.subr.mxu0 0.0
    %646 = vmatpush2.msra.mxu0 0.0
    %647 = vmatprep.subr.mxu0 0.0
    %648 = vmatpush2.msra.mxu0 0.0
    %649 = vmatprep.subr.mxu0 0.0
    %650 = vmatpush2.msra.mxu0 0.0
    %651 = vmatprep.mubr.f32.mxu0 0.0
    %652 = vmatmul.mubr.f32.gmra.mxu0 %v586
    %v653 = vpop.f32.mrf.mxu0
    %v654 = vadd.f32 %v229, %v653
    %v655 = vpop.f32.mrf.mxu0
    %v656 = vadd.f32 %v233, %v655
    %657 = vdwg.mxu0
    %v658 = vxor.u32 %v654, 2147483648
    %v659 = vxor.u32 %v656, 2147483648
    %v660 = vmul.f32 %v658, 1.442695
    %v661 = vpow.pop %v660
    %v662 = vmul.f32 %v659, 1.442695
    %v663 = vpow.pop %v662
    %v664 = vadd.f32 %v661, 1.0
    %v665 = vadd.f32 %v663, 1.0
    %v666 = vrcp.pop %v664
    %v667 = vmul.f32 1.0, %v666
    %v668 = vrcp.pop %v665
    %v669 = vmul.f32 1.0, %v668
    %v670 = vtanh.pop %v656
    %v671 = vmul.f32 %v667, %v564
    %673 = vrot.lane.b32.xlu0 %v670, 64
    %v674 = vpop.permute.xlu0 %673
    %v676 = vmul.f32 %v667, %v674
    %678 = vrot.lane.b32.xlu0 %v676, 64
    %v679 = vpop.permute.xlu0 %678
    %v681 = vadd.f32 %v671, %v679
    %v682 = vtanh.pop %v681
    %684 = vrot.lane.b32.xlu0 %v682, 64
    %v685 = vpop.permute.xlu0 %684
    %v687 = vmul.f32 %v669, %v685
    %s688 = scalar_lea.vmem [#allocation3], 6
    %689 = vst.msk [vmem:[%s688] sm:$0x3] %vm163, %v687
    %s690 = scalar_lea.vmem [#allocation3], 8
    %691 = vst.msk [vmem:[%s690] sm:$0x3] %vm339, %v687
    %v692 = vld [vmem:[%s174] sm:$0x3]
    %v693 = vld [vmem:[%s171] sm:$0x3]
    %695 = vrot.lane.b32.xlu0 %v693, 32
    %v696 = vpop.permute.xlu0 %695
    %699 = vrot.lane.b32.xlu0 %v687, 64
    %v700 = vpop.permute.xlu0 %699
    %v702 = vsel %vm221, %v692, %v696
    %v703 = vsel %vm223, %v702, %v700
    %704 = vmatprep.subr.mxu0 %v213
    %705 = vmatpush1.msra.mxu0 %v212
    %706 = vmatprep.subr.mxu0 %v211
    %707 = vmatpush1.msra.mxu0 %v210
    %708 = vmatprep.subr.mxu0 %v209
    %709 = vmatpush1.msra.mxu0 %v208
    %710 = vmatprep.subr.mxu0 %v207
    %711 = vmatpush1.msra.mxu0 %v206
    %712 = vmatprep.subr.mxu0 %v205
    %713 = vmatpush1.msra.mxu0 %v204
    %714 = vmatprep.subr.mxu0 %v203
    %715 = vmatpush1.msra.mxu0 %v202
    %716 = vmatprep.subr.mxu0 %v201
    %717 = vmatpush1.msra.mxu0 %v200
    %718 = vmatprep.subr.mxu0 %v199
    %719 = vmatpush1.msra.mxu0 %v198
    %720 = vmatprep.subr.mxu0 %v197
    %721 = vmatpush1.msra.mxu0 %v196
    %722 = vmatprep.subr.mxu0 %v195
    %723 = vmatpush1.msra.mxu0 %v194
    %724 = vmatprep.subr.mxu0 %v193
    %725 = vmatpush1.msra.mxu0 %v192
    %726 = vmatprep.subr.mxu0 %v191
    %727 = vmatpush1.msra.mxu0 %v190
    %728 = vmatprep.subr.mxu0 %v189
    %729 = vmatpush1.msra.mxu0 %v188
    %730 = vmatprep.subr.mxu0 %v187
    %731 = vmatpush1.msra.mxu0 %v186
    %732 = vmatprep.subr.mxu0 %v185
    %733 = vmatpush1.msra.mxu0 %v184
    %734 = vmatprep.subr.mxu0 %v183
    %735 = vmatpush1.msra.mxu0 %v182
    %736 = vmatprep.subr.mxu0 0.0
    %737 = vmatpush2.msra.mxu0 0.0
    %738 = vmatprep.subr.mxu0 0.0
    %739 = vmatpush2.msra.mxu0 0.0
    %740 = vmatprep.subr.mxu0 0.0
    %741 = vmatpush2.msra.mxu0 0.0
    %742 = vmatprep.subr.mxu0 0.0
    %743 = vmatpush2.msra.mxu0 0.0
    %744 = vmatprep.subr.mxu0 0.0
    %745 = vmatpush2.msra.mxu0 0.0
    %746 = vmatprep.subr.mxu0 0.0
    %747 = vmatpush2.msra.mxu0 0.0
    %748 = vmatprep.subr.mxu0 0.0
    %749 = vmatpush2.msra.mxu0 0.0
    %750 = vmatprep.subr.mxu0 0.0
    %751 = vmatpush2.msra.mxu0 0.0
    %752 = vmatprep.subr.mxu0 0.0
    %753 = vmatpush2.msra.mxu0 0.0
    %754 = vmatprep.subr.mxu0 0.0
    %755 = vmatpush2.msra.mxu0 0.0
    %756 = vmatprep.subr.mxu0 0.0
    %757 = vmatpush2.msra.mxu0 0.0
    %758 = vmatprep.subr.mxu0 0.0
    %759 = vmatpush2.msra.mxu0 0.0
    %760 = vmatprep.subr.mxu0 0.0
    %761 = vmatpush2.msra.mxu0 0.0
    %762 = vmatprep.subr.mxu0 0.0
    %763 = vmatpush2.msra.mxu0 0.0
    %764 = vmatprep.subr.mxu0 0.0
    %765 = vmatpush2.msra.mxu0 0.0
    %766 = vmatprep.subr.mxu0 0.0
    %767 = vmatpush2.msra.mxu0 0.0
    %768 = vmatprep.mubr.f32.mxu0 0.0
    %769 = vmatmul.mubr.f32.gmra.mxu0 %v703
    %v770 = vpop.f32.mrf.mxu0
    %v771 = vadd.f32 %v229, %v770
    %v772 = vpop.f32.mrf.mxu0
    %v773 = vadd.f32 %v233, %v772
    %774 = vdwg.mxu0
    %v775 = vxor.u32 %v771, 2147483648
    %v776 = vxor.u32 %v773, 2147483648
    %v777 = vmul.f32 %v775, 1.442695
    %v778 = vpow.pop %v777
    %v779 = vmul.f32 %v776, 1.442695
    %v780 = vpow.pop %v779
    %v781 = vadd.f32 %v778, 1.0
    %v782 = vadd.f32 %v780, 1.0
    %v783 = vrcp.pop %v781
    %v784 = vmul.f32 1.0, %v783
    %v785 = vrcp.pop %v782
    %v786 = vmul.f32 1.0, %v785
    %v787 = vtanh.pop %v773
    %v788 = vmul.f32 %v784, %v681
    %790 = vrot.lane.b32.xlu0 %v787, 64
    %v791 = vpop.permute.xlu0 %790
    %v793 = vmul.f32 %v784, %v791
    %795 = vrot.lane.b32.xlu0 %v793, 64
    %v796 = vpop.permute.xlu0 %795
    %v798 = vadd.f32 %v788, %v796
    %v799 = vtanh.pop %v798
    %801 = vrot.lane.b32.xlu0 %v799, 64
    %v802 = vpop.permute.xlu0 %801
    %v804 = vmul.f32 %v786, %v802
    %805 = vst.msk [vmem:[%s690] sm:$0x3] %vm163, %v804
    %806 = vst.msk [vmem:[%s688] sm:$0x3] %vm339, %v804
    %v807 = vld [vmem:[%s176] sm:$0x3]
    %v808 = vld [vmem:[%s168] sm:$0x3]
    %810 = vrot.lane.b32.xlu0 %v808, 32
    %v811 = vpop.permute.xlu0 %810
    %814 = vrot.lane.b32.xlu0 %v804, 64
    %v815 = vpop.permute.xlu0 %814
    %v817 = vsel %vm221, %v807, %v811
    %v818 = vsel %vm223, %v817, %v815
    %819 = vmatprep.subr.mxu0 %v213
    %820 = vmatpush1.msra.mxu0 %v212
    %821 = vmatprep.subr.mxu0 %v211
    %822 = vmatpush1.msra.mxu0 %v210
    %823 = vmatprep.subr.mxu0 %v209
    %824 = vmatpush1.msra.mxu0 %v208
    %825 = vmatprep.subr.mxu0 %v207
    %826 = vmatpush1.msra.mxu0 %v206
    %827 = vmatprep.subr.mxu0 %v205
    %828 = vmatpush1.msra.mxu0 %v204
    %829 = vmatprep.subr.mxu0 %v203
    %830 = vmatpush1.msra.mxu0 %v202
    %831 = vmatprep.subr.mxu0 %v201
    %832 = vmatpush1.msra.mxu0 %v200
    %833 = vmatprep.subr.mxu0 %v199
    %834 = vmatpush1.msra.mxu0 %v198
    %835 = vmatprep.subr.mxu0 %v197
    %836 = vmatpush1.msra.mxu0 %v196
    %837 = vmatprep.subr.mxu0 %v195
    %838 = vmatpush1.msra.mxu0 %v194
    %839 = vmatprep.subr.mxu0 %v193
    %840 = vmatpush1.msra.mxu0 %v192
    %841 = vmatprep.subr.mxu0 %v191
    %842 = vmatpush1.msra.mxu0 %v190
    %843 = vmatprep.subr.mxu0 %v189
    %844 = vmatpush1.msra.mxu0 %v188
    %845 = vmatprep.subr.mxu0 %v187
    %846 = vmatpush1.msra.mxu0 %v186
    %847 = vmatprep.subr.mxu0 %v185
    %848 = vmatpush1.msra.mxu0 %v184
    %849 = vmatprep.subr.mxu0 %v183
    %850 = vmatpush1.msra.mxu0 %v182
    %851 = vmatprep.subr.mxu0 0.0
    %852 = vmatpush2.msra.mxu0 0.0
    %853 = vmatprep.subr.mxu0 0.0
    %854 = vmatpush2.msra.mxu0 0.0
    %855 = vmatprep.subr.mxu0 0.0
    %856 = vmatpush2.msra.mxu0 0.0
    %857 = vmatprep.subr.mxu0 0.0
    %858 = vmatpush2.msra.mxu0 0.0
    %859 = vmatprep.subr.mxu0 0.0
    %860 = vmatpush2.msra.mxu0 0.0
    %861 = vmatprep.subr.mxu0 0.0
    %862 = vmatpush2.msra.mxu0 0.0
    %863 = vmatprep.subr.mxu0 0.0
    %864 = vmatpush2.msra.mxu0 0.0
    %865 = vmatprep.subr.mxu0 0.0
    %866 = vmatpush2.msra.mxu0 0.0
    %867 = vmatprep.subr.mxu0 0.0
    %868 = vmatpush2.msra.mxu0 0.0
    %869 = vmatprep.subr.mxu0 0.0
    %870 = vmatpush2.msra.mxu0 0.0
    %871 = vmatprep.subr.mxu0 0.0
    %872 = vmatpush2.msra.mxu0 0.0
    %873 = vmatprep.subr.mxu0 0.0
    %874 = vmatpush2.msra.mxu0 0.0
    %875 = vmatprep.subr.mxu0 0.0
    %876 = vmatpush2.msra.mxu0 0.0
    %877 = vmatprep.subr.mxu0 0.0
    %878 = vmatpush2.msra.mxu0 0.0
    %879 = vmatprep.subr.mxu0 0.0
    %880 = vmatpush2.msra.mxu0 0.0
    %881 = vmatprep.subr.mxu0 0.0
    %882 = vmatpush2.msra.mxu0 0.0
    %883 = vmatprep.mubr.f32.mxu0 0.0
    %884 = vmatmul.mubr.f32.gmra.mxu0 %v818
    %v885 = vpop.f32.mrf.mxu0
    %v886 = vadd.f32 %v229, %v885
    %v887 = vpop.f32.mrf.mxu0
    %v888 = vadd.f32 %v233, %v887
    %889 = vdwg.mxu0
    %v890 = vxor.u32 %v886, 2147483648
    %v891 = vxor.u32 %v888, 2147483648
    %v892 = vmul.f32 %v890, 1.442695
    %v893 = vpow.pop %v892
    %v894 = vmul.f32 %v891, 1.442695
    %v895 = vpow.pop %v894
    %v896 = vadd.f32 %v893, 1.0
    %v897 = vadd.f32 %v895, 1.0
    %v898 = vrcp.pop %v896
    %v899 = vmul.f32 1.0, %v898
    %v900 = vrcp.pop %v897
    %v901 = vmul.f32 1.0, %v900
    %v902 = vtanh.pop %v888
    %v903 = vmul.f32 %v899, %v798
    %905 = vrot.lane.b32.xlu0 %v902, 64
    %v906 = vpop.permute.xlu0 %905
    %v908 = vmul.f32 %v899, %v906
    %910 = vrot.lane.b32.xlu0 %v908, 64
    %v911 = vpop.permute.xlu0 %910
    %v913 = vadd.f32 %v903, %v911
    %v914 = vtanh.pop %v913
    %916 = vrot.lane.b32.xlu0 %v914, 64
    %v917 = vpop.permute.xlu0 %916
    %v919 = vmul.f32 %v901, %v917
    %920 = vst.msk [vmem:[%s573] sm:$0x3] %vm163, %v919
    %921 = vst.msk [vmem:[%s571] sm:$0x3] %vm339, %v919
    %v922 = vld [vmem:[%s178] sm:$0x3]
    %v923 = vld [vmem:[%s165] sm:$0x3]
    %925 = vrot.lane.b32.xlu0 %v923, 32
    %v926 = vpop.permute.xlu0 %925
    %929 = vrot.lane.b32.xlu0 %v919, 64
    %v930 = vpop.permute.xlu0 %929
    %v932 = vsel %vm221, %v922, %v926
    %v933 = vsel %vm223, %v932, %v930
    %934 = vmatprep.subr.mxu0 %v213
    %935 = vmatpush1.msra.mxu0 %v212
    %936 = vmatprep.subr.mxu0 %v211
    %937 = vmatpush1.msra.mxu0 %v210
    %938 = vmatprep.subr.mxu0 %v209
    %939 = vmatpush1.msra.mxu0 %v208
    %940 = vmatprep.subr.mxu0 %v207
    %941 = vmatpush1.msra.mxu0 %v206
    %942 = vmatprep.subr.mxu0 %v205
    %943 = vmatpush1.msra.mxu0 %v204
    %944 = vmatprep.subr.mxu0 %v203
    %945 = vmatpush1.msra.mxu0 %v202
    %946 = vmatprep.subr.mxu0 %v201
    %947 = vmatpush1.msra.mxu0 %v200
    %948 = vmatprep.subr.mxu0 %v199
    %949 = vmatpush1.msra.mxu0 %v198
    %950 = vmatprep.subr.mxu0 %v197
    %951 = vmatpush1.msra.mxu0 %v196
    %952 = vmatprep.subr.mxu0 %v195
    %953 = vmatpush1.msra.mxu0 %v194
    %954 = vmatprep.subr.mxu0 %v193
    %955 = vmatpush1.msra.mxu0 %v192
    %956 = vmatprep.subr.mxu0 %v191
    %957 = vmatpush1.msra.mxu0 %v190
    %958 = vmatprep.subr.mxu0 %v189
    %959 = vmatpush1.msra.mxu0 %v188
    %960 = vmatprep.subr.mxu0 %v187
    %961 = vmatpush1.msra.mxu0 %v186
    %962 = vmatprep.subr.mxu0 %v185
    %963 = vmatpush1.msra.mxu0 %v184
    %964 = vmatprep.subr.mxu0 %v183
    %965 = vmatpush1.msra.mxu0 %v182
    %966 = vmatprep.subr.mxu0 0.0
    %967 = vmatpush2.msra.mxu0 0.0
    %968 = vmatprep.subr.mxu0 0.0
    %969 = vmatpush2.msra.mxu0 0.0
    %970 = vmatprep.subr.mxu0 0.0
    %971 = vmatpush2.msra.mxu0 0.0
    %972 = vmatprep.subr.mxu0 0.0
    %973 = vmatpush2.msra.mxu0 0.0
    %974 = vmatprep.subr.mxu0 0.0
    %975 = vmatpush2.msra.mxu0 0.0
    %976 = vmatprep.subr.mxu0 0.0
    %977 = vmatpush2.msra.mxu0 0.0
    %978 = vmatprep.subr.mxu0 0.0
    %979 = vmatpush2.msra.mxu0 0.0
    %980 = vmatprep.subr.mxu0 0.0
    %981 = vmatpush2.msra.mxu0 0.0
    %982 = vmatprep.subr.mxu0 0.0
    %983 = vmatpush2.msra.mxu0 0.0
    %984 = vmatprep.subr.mxu0 0.0
    %985 = vmatpush2.msra.mxu0 0.0
    %986 = vmatprep.subr.mxu0 0.0
    %987 = vmatpush2.msra.mxu0 0.0
    %988 = vmatprep.subr.mxu0 0.0
    %989 = vmatpush2.msra.mxu0 0.0
    %990 = vmatprep.subr.mxu0 0.0
    %991 = vmatpush2.msra.mxu0 0.0
    %992 = vmatprep.subr.mxu0 0.0
    %993 = vmatpush2.msra.mxu0 0.0
    %994 = vmatprep.subr.mxu0 0.0
    %995 = vmatpush2.msra.mxu0 0.0
    %996 = vmatprep.subr.mxu0 0.0
    %997 = vmatpush2.msra.mxu0 0.0
    %998 = vmatprep.mubr.f32.mxu0 0.0
    %999 = vmatmul.mubr.f32.gmra.mxu0 %v933
    %v1000 = vpop.f32.mrf.mxu0
    %v1001 = vadd.f32 %v229, %v1000
    %v1002 = vpop.f32.mrf.mxu0
    %v1003 = vadd.f32 %v233, %v1002
    %1004 = vdwg.mxu0
    %v1005 = vxor.u32 %v1001, 2147483648
    %v1006 = vxor.u32 %v1003, 2147483648
    %v1007 = vmul.f32 %v1005, 1.442695
    %v1008 = vpow.pop %v1007
    %v1009 = vmul.f32 %v1006, 1.442695
    %v1010 = vpow.pop %v1009
    %v1011 = vadd.f32 %v1008, 1.0
    %v1012 = vadd.f32 %v1010, 1.0
    %v1013 = vrcp.pop %v1011
    %v1014 = vmul.f32 1.0, %v1013
    %v1015 = vrcp.pop %v1012
    %v1016 = vmul.f32 1.0, %v1015
    %v1017 = vtanh.pop %v1003
    %v1018 = vmul.f32 %v1014, %v913
    %1020 = vrot.lane.b32.xlu0 %v1017, 64
    %v1021 = vpop.permute.xlu0 %1020
    %v1023 = vmul.f32 %v1014, %v1021
    %1025 = vrot.lane.b32.xlu0 %v1023, 64
    %v1026 = vpop.permute.xlu0 %1025
    %v1028 = vadd.f32 %v1018, %v1026
    %v1029 = vtanh.pop %v1028
    %1031 = vrot.lane.b32.xlu0 %v1029, 64
    %v1032 = vpop.permute.xlu0 %1031
    %v1034 = vmul.f32 %v1016, %v1032
    %1035 = vst.msk [vmem:[%s456] sm:$0x3] %vm163, %v1034
    %1036 = vst.msk [vmem:[%s454] sm:$0x3] %vm339, %v1034
    %v1037 = vld [vmem:[%s180] sm:$0x3]
    %v1038 = vld [vmem:[#allocation2] sm:$0x3]
    %1040 = vrot.lane.b32.xlu0 %v1038, 32
    %v1041 = vpop.permute.xlu0 %1040
    %1044 = vrot.lane.b32.xlu0 %v1034, 64
    %v1045 = vpop.permute.xlu0 %1044
    %v1047 = vsel %vm221, %v1037, %v1041
    %v1048 = vsel %vm223, %v1047, %v1045
    %1049 = vmatprep.subr.mxu0 %v213
    %1050 = vmatpush1.msra.mxu0 %v212
    %1051 = vmatprep.subr.mxu0 %v211
    %1052 = vmatpush1.msra.mxu0 %v210
    %1053 = vmatprep.subr.mxu0 %v209
    %1054 = vmatpush1.msra.mxu0 %v208
    %1055 = vmatprep.subr.mxu0 %v207
    %1056 = vmatpush1.msra.mxu0 %v206
    %1057 = vmatprep.subr.mxu0 %v205
    %1058 = vmatpush1.msra.mxu0 %v204
    %1059 = vmatprep.subr.mxu0 %v203
    %1060 = vmatpush1.msra.mxu0 %v202
    %1061 = vmatprep.subr.mxu0 %v201
    %1062 = vmatpush1.msra.mxu0 %v200
    %1063 = vmatprep.subr.mxu0 %v199
    %1064 = vmatpush1.msra.mxu0 %v198
    %1065 = vmatprep.subr.mxu0 %v197
    %1066 = vmatpush1.msra.mxu0 %v196
    %1067 = vmatprep.subr.mxu0 %v195
    %1068 = vmatpush1.msra.mxu0 %v194
    %1069 = vmatprep.subr.mxu0 %v193
    %1070 = vmatpush1.msra.mxu0 %v192
    %1071 = vmatprep.subr.mxu0 %v191
    %1072 = vmatpush1.msra.mxu0 %v190
    %1073 = vmatprep.subr.mxu0 %v189
    %1074 = vmatpush1.msra.mxu0 %v188
    %1075 = vmatprep.subr.mxu0 %v187
    %1076 = vmatpush1.msra.mxu0 %v186
    %1077 = vmatprep.subr.mxu0 %v185
    %1078 = vmatpush1.msra.mxu0 %v184
    %1079 = vmatprep.subr.mxu0 %v183
    %1080 = vmatpush1.msra.mxu0 %v182
    %1081 = vmatprep.subr.mxu0 0.0
    %1082 = vmatpush2.msra.mxu0 0.0
    %1083 = vmatprep.subr.mxu0 0.0
    %1084 = vmatpush2.msra.mxu0 0.0
    %1085 = vmatprep.subr.mxu0 0.0
    %1086 = vmatpush2.msra.mxu0 0.0
    %1087 = vmatprep.subr.mxu0 0.0
    %1088 = vmatpush2.msra.mxu0 0.0
    %1089 = vmatprep.subr.mxu0 0.0
    %1090 = vmatpush2.msra.mxu0 0.0
    %1091 = vmatprep.subr.mxu0 0.0
    %1092 = vmatpush2.msra.mxu0 0.0
    %1093 = vmatprep.subr.mxu0 0.0
    %1094 = vmatpush2.msra.mxu0 0.0
    %1095 = vmatprep.subr.mxu0 0.0
    %1096 = vmatpush2.msra.mxu0 0.0
    %1097 = vmatprep.subr.mxu0 0.0
    %1098 = vmatpush2.msra.mxu0 0.0
    %1099 = vmatprep.subr.mxu0 0.0
    %1100 = vmatpush2.msra.mxu0 0.0
    %1101 = vmatprep.subr.mxu0 0.0
    %1102 = vmatpush2.msra.mxu0 0.0
    %1103 = vmatprep.subr.mxu0 0.0
    %1104 = vmatpush2.msra.mxu0 0.0
    %1105 = vmatprep.subr.mxu0 0.0
    %1106 = vmatpush2.msra.mxu0 0.0
    %1107 = vmatprep.subr.mxu0 0.0
    %1108 = vmatpush2.msra.mxu0 0.0
    %1109 = vmatprep.subr.mxu0 0.0
    %1110 = vmatpush2.msra.mxu0 0.0
    %1111 = vmatprep.subr.mxu0 0.0
    %1112 = vmatpush2.msra.mxu0 0.0
    %1113 = vmatprep.mubr.f32.mxu0 0.0
    %1114 = vmatmul.mubr.f32.gmra.mxu0 %v1048
    %v1115 = vpop.f32.mrf.mxu0
    %v1116 = vadd.f32 %v229, %v1115
    %v1117 = vpop.f32.mrf.mxu0
    %v1118 = vadd.f32 %v233, %v1117
    %1119 = vdwg.mxu0
    %v1120 = vxor.u32 %v1116, 2147483648
    %v1121 = vxor.u32 %v1118, 2147483648
    %v1122 = vmul.f32 %v1120, 1.442695
    %v1123 = vpow.pop %v1122
    %v1124 = vmul.f32 %v1121, 1.442695
    %v1125 = vpow.pop %v1124
    %v1126 = vadd.f32 %v1123, 1.0
    %v1127 = vadd.f32 %v1125, 1.0
    %v1128 = vrcp.pop %v1126
    %v1129 = vmul.f32 1.0, %v1128
    %v1130 = vrcp.pop %v1127
    %v1131 = vmul.f32 1.0, %v1130
    %v1132 = vtanh.pop %v1118
    %v1133 = vmul.f32 %v1129, %v1028
    %1135 = vrot.lane.b32.xlu0 %v1132, 64
    %v1136 = vpop.permute.xlu0 %1135
    %v1138 = vmul.f32 %v1129, %v1136
    %1140 = vrot.lane.b32.xlu0 %v1138, 64
    %v1141 = vpop.permute.xlu0 %1140
    %v1143 = vadd.f32 %v1133, %v1141
    %v1144 = vtanh.pop %v1143
    %1146 = vrot.lane.b32.xlu0 %v1144, 64
    %v1147 = vpop.permute.xlu0 %1146
    %v1149 = vmul.f32 %v1131, %v1147
    %1150 = vst.msk [vmem:[%s338] sm:$0x3] %vm163, %v1149
    %1151 = vst.msk [vmem:[#allocation3] sm:$0x3] %vm339, %v1149
    %v1152 = vld [vmem:[#allocation5] sm:$0xff]
    %v1153 = vld [vmem:[#allocation5 + $0x8] sm:$0xff]
    %v1154 = vld [vmem:[#allocation5 + $0x10] sm:$0xff]
    %v1155 = vld [vmem:[#allocation5 + $0x18] sm:$0xff]
    %v1156 = vld [vmem:[#allocation5 + $0x20] sm:$0xff]
    %v1157 = vld [vmem:[#allocation5 + $0x28] sm:$0xff]
    %v1158 = vld [vmem:[#allocation5 + $0x30] sm:$0xff]
    %v1159 = vld [vmem:[#allocation5 + $0x38] sm:$0xff]
    %v1160 = vld [vmem:[#allocation5 + $0x40] sm:$0xff]
    %v1161 = vld [vmem:[#allocation5 + $0x48] sm:$0xff]
    %v1162 = vld [vmem:[#allocation5 + $0x50] sm:$0xff]
    %v1163 = vld [vmem:[#allocation5 + $0x58] sm:$0xff]
    %v1164 = vld [vmem:[#allocation5 + $0x60] sm:$0xff]
    %v1165 = vld [vmem:[#allocation5 + $0x68] sm:$0xff]
    %v1166 = vld [vmem:[#allocation5 + $0x70] sm:$0xff]
    %v1167 = vld [vmem:[#allocation5 + $0x78] sm:$0xff]
    %v1168 = vld [vmem:[#allocation5 + $0x80] sm:$0xff]
    %v1169 = vld [vmem:[#allocation5 + $0x88] sm:$0xff]
    %v1170 = vld [vmem:[#allocation5 + $0x90] sm:$0xff]
    %v1171 = vld [vmem:[#allocation5 + $0x98] sm:$0xff]
    %v1172 = vld [vmem:[#allocation5 + $0xa0] sm:$0xff]
    %v1173 = vld [vmem:[#allocation5 + $0xa8] sm:$0xff]
    %v1174 = vld [vmem:[#allocation5 + $0xb0] sm:$0xff]
    %v1175 = vld [vmem:[#allocation5 + $0xb8] sm:$0xff]
    %v1176 = vld [vmem:[#allocation5 + $0xc0] sm:$0xff]
    %v1177 = vld [vmem:[#allocation5 + $0xc8] sm:$0xff]
    %v1178 = vld [vmem:[#allocation5 + $0xd0] sm:$0xff]
    %v1179 = vld [vmem:[#allocation5 + $0xd8] sm:$0xff]
    %v1180 = vld [vmem:[#allocation5 + $0xe0] sm:$0xff]
    %v1181 = vld [vmem:[#allocation5 + $0xe8] sm:$0xff]
    %v1182 = vld [vmem:[#allocation5 + $0xf0] sm:$0xff]
    %v1183 = vld [vmem:[#allocation5 + $0xf8] sm:$0xff]
    %v1184 = vld [vmem:[#allocation5 + $0x100] sm:$0xff]
    %v1185 = vld [vmem:[#allocation5 + $0x108] sm:$0xff]
    %v1186 = vld [vmem:[#allocation5 + $0x110] sm:$0xff]
    %v1187 = vld [vmem:[#allocation5 + $0x118] sm:$0xff]
    %v1188 = vld [vmem:[#allocation5 + $0x120] sm:$0xff]
    %v1189 = vld [vmem:[#allocation5 + $0x128] sm:$0xff]
    %v1190 = vld [vmem:[#allocation5 + $0x130] sm:$0xff]
    %v1191 = vld [vmem:[#allocation5 + $0x138] sm:$0xff]
    %v1192 = vld [vmem:[#allocation5 + $0x140] sm:$0xff]
    %v1193 = vld [vmem:[#allocation5 + $0x148] sm:$0xff]
    %v1194 = vld [vmem:[#allocation5 + $0x150] sm:$0xff]
    %v1195 = vld [vmem:[#allocation5 + $0x158] sm:$0xff]
    %v1196 = vld [vmem:[#allocation5 + $0x160] sm:$0xff]
    %v1197 = vld [vmem:[#allocation5 + $0x168] sm:$0xff]
    %v1198 = vld [vmem:[#allocation5 + $0x170] sm:$0xff]
    %v1199 = vld [vmem:[#allocation5 + $0x178] sm:$0xff]
    %v1200 = vld [vmem:[%s5] sm:$0x3]
    %v1201 = vld [vmem:[#allocation3] sm:$0x3]
    %v1202 = vld [vmem:[%s338] sm:$0x3]
    %1204 = vrot.lane.b32.xlu0 %v1202, 64
    %v1205 = vpop.permute.xlu0 %1204
    %v1207 = vsel %vm223, %v1201, %v1205
    %v1209 = vlaneseq
    %v1210 = vshrl.u32 %v1209, 7
    %v1211 = vsub.s32 0, %v1210
    %v1212 = vrot.slane %v1200, %v1211
    %v1213 = vlaneseq
    %v1214 = vshrl.u32 %v1213, 7
    %v1215 = vsub.s32 1, %v1214
    %v1216 = vrot.slane %v1200, %v1215
    %v1220 = vsel %vm223, 0.0, 0
    %1222 = vmatprep.subr.mxu0 %v1183
    %1223 = vmatpush1.msra.mxu0 %v1182
    %1224 = vmatprep.subr.mxu0 %v1181
    %1225 = vmatpush1.msra.mxu0 %v1180
    %1226 = vmatprep.subr.mxu0 %v1179
    %1227 = vmatpush1.msra.mxu0 %v1178
    %1228 = vmatprep.subr.mxu0 %v1177
    %1229 = vmatpush1.msra.mxu0 %v1176
    %1230 = vmatprep.subr.mxu0 %v1175
    %1231 = vmatpush1.msra.mxu0 %v1174
    %1232 = vmatprep.subr.mxu0 %v1173
    %1233 = vmatpush1.msra.mxu0 %v1172
    %1234 = vmatprep.subr.mxu0 %v1171
    %1235 = vmatpush1.msra.mxu0 %v1170
    %1236 = vmatprep.subr.mxu0 %v1169
    %1237 = vmatpush1.msra.mxu0 %v1168
    %1238 = vmatprep.subr.mxu0 %v1167
    %1239 = vmatpush1.msra.mxu0 %v1166
    %1240 = vmatprep.subr.mxu0 %v1165
    %1241 = vmatpush1.msra.mxu0 %v1164
    %1242 = vmatprep.subr.mxu0 %v1163
    %1243 = vmatpush1.msra.mxu0 %v1162
    %1244 = vmatprep.subr.mxu0 %v1161
    %1245 = vmatpush1.msra.mxu0 %v1160
    %1246 = vmatprep.subr.mxu0 %v1159
    %1247 = vmatpush1.msra.mxu0 %v1158
    %1248 = vmatprep.subr.mxu0 %v1157
    %1249 = vmatpush1.msra.mxu0 %v1156
    %1250 = vmatprep.subr.mxu0 %v1155
    %1251 = vmatpush1.msra.mxu0 %v1154
    %1252 = vmatprep.subr.mxu0 %v1153
    %1253 = vmatpush1.msra.mxu0 %v1152
    %1254 = vmatprep.subr.mxu0 0.0
    %1255 = vmatpush2.msra.mxu0 0.0
    %1256 = vmatprep.subr.mxu0 0.0
    %1257 = vmatpush2.msra.mxu0 0.0
    %1258 = vmatprep.subr.mxu0 0.0
    %1259 = vmatpush2.msra.mxu0 0.0
    %1260 = vmatprep.subr.mxu0 0.0
    %1261 = vmatpush2.msra.mxu0 0.0
    %1262 = vmatprep.subr.mxu0 0.0
    %1263 = vmatpush2.msra.mxu0 0.0
    %1264 = vmatprep.subr.mxu0 0.0
    %1265 = vmatpush2.msra.mxu0 0.0
    %1266 = vmatprep.subr.mxu0 0.0
    %1267 = vmatpush2.msra.mxu0 0.0
    %1268 = vmatprep.subr.mxu0 0.0
    %1269 = vmatpush2.msra.mxu0 0.0
    %1270 = vmatprep.subr.mxu0 %v1199
    %1271 = vmatpush2.msra.mxu0 %v1198
    %1272 = vmatprep.subr.mxu0 %v1197
    %1273 = vmatpush2.msra.mxu0 %v1196
    %1274 = vmatprep.subr.mxu0 %v1195
    %1275 = vmatpush2.msra.mxu0 %v1194
    %1276 = vmatprep.subr.mxu0 %v1193
    %1277 = vmatpush2.msra.mxu0 %v1192
    %1278 = vmatprep.subr.mxu0 %v1191
    %1279 = vmatpush2.msra.mxu0 %v1190
    %1280 = vmatprep.subr.mxu0 %v1189
    %1281 = vmatpush2.msra.mxu0 %v1188
    %1282 = vmatprep.subr.mxu0 %v1187
    %1283 = vmatpush2.msra.mxu0 %v1186
    %1284 = vmatprep.subr.mxu0 %v1185
    %1285 = vmatpush2.msra.mxu0 %v1184
    %1286 = vmatprep.mubr.f32.mxu0 %v1220
    %1287 = vmatmul.mubr.f32.gmra.mxu0 %v1207
    %v1288 = vpop.f32.mrf.mxu0
    %v1289 = vadd.f32 %v1212, %v1288
    %v1290 = vpop.f32.mrf.mxu0
    %v1291 = vadd.f32 %v1216, %v1290
    %1292 = vdwg.mxu0
    %v1293 = vxor.u32 %v1289, 2147483648
    %v1294 = vmul.f32 %v1293, 1.442695
    %v1295 = vpow.pop %v1294
    %v1296 = vadd.f32 %v1295, 1.0
    %v1297 = vrcp.pop %v1296
    %v1298 = vmul.f32 1.0, %v1297
    %1300 = vrot.lane.b32.xlu0 %v1291, 64
    %v1301 = vpop.permute.xlu0 %1300
    %v1303 = vmul.f32 %v1298, %v1301
    %v1304 = vadd.f32 %v1291, %v1303
    %v1305 = vtanh.pop %v1304
    %v1306 = vsub.f32 1.0, %v1298
    %1308 = vrot.lane.b32.xlu0 %v1305, 64
    %v1309 = vpop.permute.xlu0 %1308
    %v1311 = vmul.f32 %v1306, %v1309
    %v1312 = vmul.f32 %v1298, 0.0
    %v1313 = vadd.f32 %v1311, %v1312
    %1315 = vrot.lane.b32.xlu0 %v1313, 64
    %v1316 = vpop.permute.xlu0 %1315
    %1318 = vst.msk [vmem:[#allocation4] sm:$0x3] %vm163, %v1316
    %s1319 = scalar_lea.vmem [#allocation4], 14
    %1320 = vst.msk [vmem:[%s1319] sm:$0x3] %vm339, %v1316
    %v1321 = vld [vmem:[%s454] sm:$0x3]
    %v1322 = vld [vmem:[%s456] sm:$0x3]
    %1324 = vrot.lane.b32.xlu0 %v1322, 64
    %v1325 = vpop.permute.xlu0 %1324
    %v1327 = vsel %vm223, %v1321, %v1325
    %v1328 = vsel %vm223, %v1316, 0
    %1330 = vmatprep.subr.mxu0 %v1183
    %1331 = vmatpush1.msra.mxu0 %v1182
    %1332 = vmatprep.subr.mxu0 %v1181
    %1333 = vmatpush1.msra.mxu0 %v1180
    %1334 = vmatprep.subr.mxu0 %v1179
    %1335 = vmatpush1.msra.mxu0 %v1178
    %1336 = vmatprep.subr.mxu0 %v1177
    %1337 = vmatpush1.msra.mxu0 %v1176
    %1338 = vmatprep.subr.mxu0 %v1175
    %1339 = vmatpush1.msra.mxu0 %v1174
    %1340 = vmatprep.subr.mxu0 %v1173
    %1341 = vmatpush1.msra.mxu0 %v1172
    %1342 = vmatprep.subr.mxu0 %v1171
    %1343 = vmatpush1.msra.mxu0 %v1170
    %1344 = vmatprep.subr.mxu0 %v1169
    %1345 = vmatpush1.msra.mxu0 %v1168
    %1346 = vmatprep.subr.mxu0 %v1167
    %1347 = vmatpush1.msra.mxu0 %v1166
    %1348 = vmatprep.subr.mxu0 %v1165
    %1349 = vmatpush1.msra.mxu0 %v1164
    %1350 = vmatprep.subr.mxu0 %v1163
    %1351 = vmatpush1.msra.mxu0 %v1162
    %1352 = vmatprep.subr.mxu0 %v1161
    %1353 = vmatpush1.msra.mxu0 %v1160
    %1354 = vmatprep.subr.mxu0 %v1159
    %1355 = vmatpush1.msra.mxu0 %v1158
    %1356 = vmatprep.subr.mxu0 %v1157
    %1357 = vmatpush1.msra.mxu0 %v1156
    %1358 = vmatprep.subr.mxu0 %v1155
    %1359 = vmatpush1.msra.mxu0 %v1154
    %1360 = vmatprep.subr.mxu0 %v1153
    %1361 = vmatpush1.msra.mxu0 %v1152
    %1362 = vmatprep.subr.mxu0 0.0
    %1363 = vmatpush2.msra.mxu0 0.0
    %1364 = vmatprep.subr.mxu0 0.0
    %1365 = vmatpush2.msra.mxu0 0.0
    %1366 = vmatprep.subr.mxu0 0.0
    %1367 = vmatpush2.msra.mxu0 0.0
    %1368 = vmatprep.subr.mxu0 0.0
    %1369 = vmatpush2.msra.mxu0 0.0
    %1370 = vmatprep.subr.mxu0 0.0
    %1371 = vmatpush2.msra.mxu0 0.0
    %1372 = vmatprep.subr.mxu0 0.0
    %1373 = vmatpush2.msra.mxu0 0.0
    %1374 = vmatprep.subr.mxu0 0.0
    %1375 = vmatpush2.msra.mxu0 0.0
    %1376 = vmatprep.subr.mxu0 0.0
    %1377 = vmatpush2.msra.mxu0 0.0
    %1378 = vmatprep.subr.mxu0 %v1199
    %1379 = vmatpush2.msra.mxu0 %v1198
    %1380 = vmatprep.subr.mxu0 %v1197
    %1381 = vmatpush2.msra.mxu0 %v1196
    %1382 = vmatprep.subr.mxu0 %v1195
    %1383 = vmatpush2.msra.mxu0 %v1194
    %1384 = vmatprep.subr.mxu0 %v1193
    %1385 = vmatpush2.msra.mxu0 %v1192
    %1386 = vmatprep.subr.mxu0 %v1191
    %1387 = vmatpush2.msra.mxu0 %v1190
    %1388 = vmatprep.subr.mxu0 %v1189
    %1389 = vmatpush2.msra.mxu0 %v1188
    %1390 = vmatprep.subr.mxu0 %v1187
    %1391 = vmatpush2.msra.mxu0 %v1186
    %1392 = vmatprep.subr.mxu0 %v1185
    %1393 = vmatpush2.msra.mxu0 %v1184
    %1394 = vmatprep.mubr.f32.mxu0 %v1328
    %1395 = vmatmul.mubr.f32.gmra.mxu0 %v1327
    %v1396 = vpop.f32.mrf.mxu0
    %v1397 = vadd.f32 %v1212, %v1396
    %v1398 = vpop.f32.mrf.mxu0
    %v1399 = vadd.f32 %v1216, %v1398
    %1400 = vdwg.mxu0
    %v1401 = vxor.u32 %v1397, 2147483648
    %v1402 = vmul.f32 %v1401, 1.442695
    %v1403 = vpow.pop %v1402
    %v1404 = vadd.f32 %v1403, 1.0
    %v1405 = vrcp.pop %v1404
    %v1406 = vmul.f32 1.0, %v1405
    %1408 = vrot.lane.b32.xlu0 %v1399, 64
    %v1409 = vpop.permute.xlu0 %1408
    %v1411 = vmul.f32 %v1406, %v1409
    %v1412 = vadd.f32 %v1399, %v1411
    %v1413 = vtanh.pop %v1412
    %v1414 = vsub.f32 1.0, %v1406
    %1416 = vrot.lane.b32.xlu0 %v1413, 64
    %v1417 = vpop.permute.xlu0 %1416
    %v1419 = vmul.f32 %v1414, %v1417
    %v1420 = vmul.f32 %v1406, %v1313
    %v1421 = vadd.f32 %v1419, %v1420
    %1423 = vrot.lane.b32.xlu0 %v1421, 64
    %v1424 = vpop.permute.xlu0 %1423
    %s1426 = scalar_lea.vmem [#allocation4], 2
    %1427 = vst.msk [vmem:[%s1426] sm:$0x3] %vm163, %v1424
    %s1428 = scalar_lea.vmem [#allocation4], 12
    %1429 = vst.msk [vmem:[%s1428] sm:$0x3] %vm339, %v1424
    %v1430 = vld [vmem:[%s571] sm:$0x3]
    %v1431 = vld [vmem:[%s573] sm:$0x3]
    %1433 = vrot.lane.b32.xlu0 %v1431, 64
    %v1434 = vpop.permute.xlu0 %1433
    %v1436 = vsel %vm223, %v1430, %v1434
    %v1437 = vsel %vm223, %v1424, 0
    %1439 = vmatprep.subr.mxu0 %v1183
    %1440 = vmatpush1.msra.mxu0 %v1182
    %1441 = vmatprep.subr.mxu0 %v1181
    %1442 = vmatpush1.msra.mxu0 %v1180
    %1443 = vmatprep.subr.mxu0 %v1179
    %1444 = vmatpush1.msra.mxu0 %v1178
    %1445 = vmatprep.subr.mxu0 %v1177
    %1446 = vmatpush1.msra.mxu0 %v1176
    %1447 = vmatprep.subr.mxu0 %v1175
    %1448 = vmatpush1.msra.mxu0 %v1174
    %1449 = vmatprep.subr.mxu0 %v1173
    %1450 = vmatpush1.msra.mxu0 %v1172
    %1451 = vmatprep.subr.mxu0 %v1171
    %1452 = vmatpush1.msra.mxu0 %v1170
    %1453 = vmatprep.subr.mxu0 %v1169
    %1454 = vmatpush1.msra.mxu0 %v1168
    %1455 = vmatprep.subr.mxu0 %v1167
    %1456 = vmatpush1.msra.mxu0 %v1166
    %1457 = vmatprep.subr.mxu0 %v1165
    %1458 = vmatpush1.msra.mxu0 %v1164
    %1459 = vmatprep.subr.mxu0 %v1163
    %1460 = vmatpush1.msra.mxu0 %v1162
    %1461 = vmatprep.subr.mxu0 %v1161
    %1462 = vmatpush1.msra.mxu0 %v1160
    %1463 = vmatprep.subr.mxu0 %v1159
    %1464 = vmatpush1.msra.mxu0 %v1158
    %1465 = vmatprep.subr.mxu0 %v1157
    %1466 = vmatpush1.msra.mxu0 %v1156
    %1467 = vmatprep.subr.mxu0 %v1155
    %1468 = vmatpush1.msra.mxu0 %v1154
    %1469 = vmatprep.subr.mxu0 %v1153
    %1470 = vmatpush1.msra.mxu0 %v1152
    %1471 = vmatprep.subr.mxu0 0.0
    %1472 = vmatpush2.msra.mxu0 0.0
    %1473 = vmatprep.subr.mxu0 0.0
    %1474 = vmatpush2.msra.mxu0 0.0
    %1475 = vmatprep.subr.mxu0 0.0
    %1476 = vmatpush2.msra.mxu0 0.0
    %1477 = vmatprep.subr.mxu0 0.0
    %1478 = vmatpush2.msra.mxu0 0.0
    %1479 = vmatprep.subr.mxu0 0.0
    %1480 = vmatpush2.msra.mxu0 0.0
    %1481 = vmatprep.subr.mxu0 0.0
    %1482 = vmatpush2.msra.mxu0 0.0
    %1483 = vmatprep.subr.mxu0 0.0
    %1484 = vmatpush2.msra.mxu0 0.0
    %1485 = vmatprep.subr.mxu0 0.0
    %1486 = vmatpush2.msra.mxu0 0.0
    %1487 = vmatprep.subr.mxu0 %v1199
    %1488 = vmatpush2.msra.mxu0 %v1198
    %1489 = vmatprep.subr.mxu0 %v1197
    %1490 = vmatpush2.msra.mxu0 %v1196
    %1491 = vmatprep.subr.mxu0 %v1195
    %1492 = vmatpush2.msra.mxu0 %v1194
    %1493 = vmatprep.subr.mxu0 %v1193
    %1494 = vmatpush2.msra.mxu0 %v1192
    %1495 = vmatprep.subr.mxu0 %v1191
    %1496 = vmatpush2.msra.mxu0 %v1190
    %1497 = vmatprep.subr.mxu0 %v1189
    %1498 = vmatpush2.msra.mxu0 %v1188
    %1499 = vmatprep.subr.mxu0 %v1187
    %1500 = vmatpush2.msra.mxu0 %v1186
    %1501 = vmatprep.subr.mxu0 %v1185
    %1502 = vmatpush2.msra.mxu0 %v1184
    %1503 = vmatprep.mubr.f32.mxu0 %v1437
    %1504 = vmatmul.mubr.f32.gmra.mxu0 %v1436
    %v1505 = vpop.f32.mrf.mxu0
    %v1506 = vadd.f32 %v1212, %v1505
    %v1507 = vpop.f32.mrf.mxu0
    %v1508 = vadd.f32 %v1216, %v1507
    %1509 = vdwg.mxu0
    %v1510 = vxor.u32 %v1506, 2147483648
    %v1511 = vmul.f32 %v1510, 1.442695
    %v1512 = vpow.pop %v1511
    %v1513 = vadd.f32 %v1512, 1.0
    %v1514 = vrcp.pop %v1513
    %v1515 = vmul.f32 1.0, %v1514
    %1517 = vrot.lane.b32.xlu0 %v1508, 64
    %v1518 = vpop.permute.xlu0 %1517
    %v1520 = vmul.f32 %v1515, %v1518
    %v1521 = vadd.f32 %v1508, %v1520
    %v1522 = vtanh.pop %v1521
    %v1523 = vsub.f32 1.0, %v1515
    %1525 = vrot.lane.b32.xlu0 %v1522, 64
    %v1526 = vpop.permute.xlu0 %1525
    %v1528 = vmul.f32 %v1523, %v1526
    %v1529 = vmul.f32 %v1515, %v1421
    %v1530 = vadd.f32 %v1528, %v1529
    %1532 = vrot.lane.b32.xlu0 %v1530, 64
    %v1533 = vpop.permute.xlu0 %1532
    %s1535 = scalar_lea.vmem [#allocation4], 4
    %1536 = vst.msk [vmem:[%s1535] sm:$0x3] %vm163, %v1533
    %s1537 = scalar_lea.vmem [#allocation4], 10
    %1538 = vst.msk [vmem:[%s1537] sm:$0x3] %vm339, %v1533
    %v1539 = vld [vmem:[%s688] sm:$0x3]
    %v1540 = vld [vmem:[%s690] sm:$0x3]
    %1542 = vrot.lane.b32.xlu0 %v1540, 64
    %v1543 = vpop.permute.xlu0 %1542
    %v1545 = vsel %vm223, %v1539, %v1543
    %v1546 = vsel %vm223, %v1533, 0
    %1548 = vmatprep.subr.mxu0 %v1183
    %1549 = vmatpush1.msra.mxu0 %v1182
    %1550 = vmatprep.subr.mxu0 %v1181
    %1551 = vmatpush1.msra.mxu0 %v1180
    %1552 = vmatprep.subr.mxu0 %v1179
    %1553 = vmatpush1.msra.mxu0 %v1178
    %1554 = vmatprep.subr.mxu0 %v1177
    %1555 = vmatpush1.msra.mxu0 %v1176
    %1556 = vmatprep.subr.mxu0 %v1175
    %1557 = vmatpush1.msra.mxu0 %v1174
    %1558 = vmatprep.subr.mxu0 %v1173
    %1559 = vmatpush1.msra.mxu0 %v1172
    %1560 = vmatprep.subr.mxu0 %v1171
    %1561 = vmatpush1.msra.mxu0 %v1170
    %1562 = vmatprep.subr.mxu0 %v1169
    %1563 = vmatpush1.msra.mxu0 %v1168
    %1564 = vmatprep.subr.mxu0 %v1167
    %1565 = vmatpush1.msra.mxu0 %v1166
    %1566 = vmatprep.subr.mxu0 %v1165
    %1567 = vmatpush1.msra.mxu0 %v1164
    %1568 = vmatprep.subr.mxu0 %v1163
    %1569 = vmatpush1.msra.mxu0 %v1162
    %1570 = vmatprep.subr.mxu0 %v1161
    %1571 = vmatpush1.msra.mxu0 %v1160
    %1572 = vmatprep.subr.mxu0 %v1159
    %1573 = vmatpush1.msra.mxu0 %v1158
    %1574 = vmatprep.subr.mxu0 %v1157
    %1575 = vmatpush1.msra.mxu0 %v1156
    %1576 = vmatprep.subr.mxu0 %v1155
    %1577 = vmatpush1.msra.mxu0 %v1154
    %1578 = vmatprep.subr.mxu0 %v1153
    %1579 = vmatpush1.msra.mxu0 %v1152
    %1580 = vmatprep.subr.mxu0 0.0
    %1581 = vmatpush2.msra.mxu0 0.0
    %1582 = vmatprep.subr.mxu0 0.0
    %1583 = vmatpush2.msra.mxu0 0.0
    %1584 = vmatprep.subr.mxu0 0.0
    %1585 = vmatpush2.msra.mxu0 0.0
    %1586 = vmatprep.subr.mxu0 0.0
    %1587 = vmatpush2.msra.mxu0 0.0
    %1588 = vmatprep.subr.mxu0 0.0
    %1589 = vmatpush2.msra.mxu0 0.0
    %1590 = vmatprep.subr.mxu0 0.0
    %1591 = vmatpush2.msra.mxu0 0.0
    %1592 = vmatprep.subr.mxu0 0.0
    %1593 = vmatpush2.msra.mxu0 0.0
    %1594 = vmatprep.subr.mxu0 0.0
    %1595 = vmatpush2.msra.mxu0 0.0
    %1596 = vmatprep.subr.mxu0 %v1199
    %1597 = vmatpush2.msra.mxu0 %v1198
    %1598 = vmatprep.subr.mxu0 %v1197
    %1599 = vmatpush2.msra.mxu0 %v1196
    %1600 = vmatprep.subr.mxu0 %v1195
    %1601 = vmatpush2.msra.mxu0 %v1194
    %1602 = vmatprep.subr.mxu0 %v1193
    %1603 = vmatpush2.msra.mxu0 %v1192
    %1604 = vmatprep.subr.mxu0 %v1191
    %1605 = vmatpush2.msra.mxu0 %v1190
    %1606 = vmatprep.subr.mxu0 %v1189
    %1607 = vmatpush2.msra.mxu0 %v1188
    %1608 = vmatprep.subr.mxu0 %v1187
    %1609 = vmatpush2.msra.mxu0 %v1186
    %1610 = vmatprep.subr.mxu0 %v1185
    %1611 = vmatpush2.msra.mxu0 %v1184
    %1612 = vmatprep.mubr.f32.mxu0 %v1546
    %1613 = vmatmul.mubr.f32.gmra.mxu0 %v1545
    %v1614 = vpop.f32.mrf.mxu0
    %v1615 = vadd.f32 %v1212, %v1614
    %v1616 = vpop.f32.mrf.mxu0
    %v1617 = vadd.f32 %v1216, %v1616
    %1618 = vdwg.mxu0
    %v1619 = vxor.u32 %v1615, 2147483648
    %v1620 = vmul.f32 %v1619, 1.442695
    %v1621 = vpow.pop %v1620
    %v1622 = vadd.f32 %v1621, 1.0
    %v1623 = vrcp.pop %v1622
    %v1624 = vmul.f32 1.0, %v1623
    %1626 = vrot.lane.b32.xlu0 %v1617, 64
    %v1627 = vpop.permute.xlu0 %1626
    %v1629 = vmul.f32 %v1624, %v1627
    %v1630 = vadd.f32 %v1617, %v1629
    %v1631 = vtanh.pop %v1630
    %v1632 = vsub.f32 1.0, %v1624
    %1634 = vrot.lane.b32.xlu0 %v1631, 64
    %v1635 = vpop.permute.xlu0 %1634
    %v1637 = vmul.f32 %v1632, %v1635
    %v1638 = vmul.f32 %v1624, %v1530
    %v1639 = vadd.f32 %v1637, %v1638
    %1641 = vrot.lane.b32.xlu0 %v1639, 64
    %v1642 = vpop.permute.xlu0 %1641
    %s1644 = scalar_lea.vmem [#allocation4], 6
    %1645 = vst.msk [vmem:[%s1644] sm:$0x3] %vm163, %v1642
    %s1646 = scalar_lea.vmem [#allocation4], 8
    %1647 = vst.msk [vmem:[%s1646] sm:$0x3] %vm339, %v1642
    %v1648 = vld [vmem:[%s690] sm:$0x3]
    %v1649 = vld [vmem:[%s688] sm:$0x3]
    %1651 = vrot.lane.b32.xlu0 %v1649, 64
    %v1652 = vpop.permute.xlu0 %1651
    %v1654 = vsel %vm223, %v1648, %v1652
    %v1655 = vsel %vm223, %v1642, 0
    %1657 = vmatprep.subr.mxu0 %v1183
    %1658 = vmatpush1.msra.mxu0 %v1182
    %1659 = vmatprep.subr.mxu0 %v1181
    %1660 = vmatpush1.msra.mxu0 %v1180
    %1661 = vmatprep.subr.mxu0 %v1179
    %1662 = vmatpush1.msra.mxu0 %v1178
    %1663 = vmatprep.subr.mxu0 %v1177
    %1664 = vmatpush1.msra.mxu0 %v1176
    %1665 = vmatprep.subr.mxu0 %v1175
    %1666 = vmatpush1.msra.mxu0 %v1174
    %1667 = vmatprep.subr.mxu0 %v1173
    %1668 = vmatpush1.msra.mxu0 %v1172
    %1669 = vmatprep.subr.mxu0 %v1171
    %1670 = vmatpush1.msra.mxu0 %v1170
    %1671 = vmatprep.subr.mxu0 %v1169
    %1672 = vmatpush1.msra.mxu0 %v1168
    %1673 = vmatprep.subr.mxu0 %v1167
    %1674 = vmatpush1.msra.mxu0 %v1166
    %1675 = vmatprep.subr.mxu0 %v1165
    %1676 = vmatpush1.msra.mxu0 %v1164
    %1677 = vmatprep.subr.mxu0 %v1163
    %1678 = vmatpush1.msra.mxu0 %v1162
    %1679 = vmatprep.subr.mxu0 %v1161
    %1680 = vmatpush1.msra.mxu0 %v1160
    %1681 = vmatprep.subr.mxu0 %v1159
    %1682 = vmatpush1.msra.mxu0 %v1158
    %1683 = vmatprep.subr.mxu0 %v1157
    %1684 = vmatpush1.msra.mxu0 %v1156
    %1685 = vmatprep.subr.mxu0 %v1155
    %1686 = vmatpush1.msra.mxu0 %v1154
    %1687 = vmatprep.subr.mxu0 %v1153
    %1688 = vmatpush1.msra.mxu0 %v1152
    %1689 = vmatprep.subr.mxu0 0.0
    %1690 = vmatpush2.msra.mxu0 0.0
    %1691 = vmatprep.subr.mxu0 0.0
    %1692 = vmatpush2.msra.mxu0 0.0
    %1693 = vmatprep.subr.mxu0 0.0
    %1694 = vmatpush2.msra.mxu0 0.0
    %1695 = vmatprep.subr.mxu0 0.0
    %1696 = vmatpush2.msra.mxu0 0.0
    %1697 = vmatprep.subr.mxu0 0.0
    %1698 = vmatpush2.msra.mxu0 0.0
    %1699 = vmatprep.subr.mxu0 0.0
    %1700 = vmatpush2.msra.mxu0 0.0
    %1701 = vmatprep.subr.mxu0 0.0
    %1702 = vmatpush2.msra.mxu0 0.0
    %1703 = vmatprep.subr.mxu0 0.0
    %1704 = vmatpush2.msra.mxu0 0.0
    %1705 = vmatprep.subr.mxu0 %v1199
    %1706 = vmatpush2.msra.mxu0 %v1198
    %1707 = vmatprep.subr.mxu0 %v1197
    %1708 = vmatpush2.msra.mxu0 %v1196
    %1709 = vmatprep.subr.mxu0 %v1195
    %1710 = vmatpush2.msra.mxu0 %v1194
    %1711 = vmatprep.subr.mxu0 %v1193
    %1712 = vmatpush2.msra.mxu0 %v1192
    %1713 = vmatprep.subr.mxu0 %v1191
    %1714 = vmatpush2.msra.mxu0 %v1190
    %1715 = vmatprep.subr.mxu0 %v1189
    %1716 = vmatpush2.msra.mxu0 %v1188
    %1717 = vmatprep.subr.mxu0 %v1187
    %1718 = vmatpush2.msra.mxu0 %v1186
    %1719 = vmatprep.subr.mxu0 %v1185
    %1720 = vmatpush2.msra.mxu0 %v1184
    %1721 = vmatprep.mubr.f32.mxu0 %v1655
    %1722 = vmatmul.mubr.f32.gmra.mxu0 %v1654
    %v1723 = vpop.f32.mrf.mxu0
    %v1724 = vadd.f32 %v1212, %v1723
    %v1725 = vpop.f32.mrf.mxu0
    %v1726 = vadd.f32 %v1216, %v1725
    %1727 = vdwg.mxu0
    %v1728 = vxor.u32 %v1724, 2147483648
    %v1729 = vmul.f32 %v1728, 1.442695
    %v1730 = vpow.pop %v1729
    %v1731 = vadd.f32 %v1730, 1.0
    %v1732 = vrcp.pop %v1731
    %v1733 = vmul.f32 1.0, %v1732
    %1735 = vrot.lane.b32.xlu0 %v1726, 64
    %v1736 = vpop.permute.xlu0 %1735
    %v1738 = vmul.f32 %v1733, %v1736
    %v1739 = vadd.f32 %v1726, %v1738
    %v1740 = vtanh.pop %v1739
    %v1741 = vsub.f32 1.0, %v1733
    %1743 = vrot.lane.b32.xlu0 %v1740, 64
    %v1744 = vpop.permute.xlu0 %1743
    %v1746 = vmul.f32 %v1741, %v1744
    %v1747 = vmul.f32 %v1733, %v1639
    %v1748 = vadd.f32 %v1746, %v1747
    %1750 = vrot.lane.b32.xlu0 %v1748, 64
    %v1751 = vpop.permute.xlu0 %1750
    %1753 = vst.msk [vmem:[%s1646] sm:$0x3] %vm163, %v1751
    %1754 = vst.msk [vmem:[%s1644] sm:$0x3] %vm339, %v1751
    %v1755 = vld [vmem:[%s573] sm:$0x3]
    %v1756 = vld [vmem:[%s571] sm:$0x3]
    %1758 = vrot.lane.b32.xlu0 %v1756, 64
    %v1759 = vpop.permute.xlu0 %1758
    %v1761 = vsel %vm223, %v1755, %v1759
    %v1762 = vsel %vm223, %v1751, 0
    %1764 = vmatprep.subr.mxu0 %v1183
    %1765 = vmatpush1.msra.mxu0 %v1182
    %1766 = vmatprep.subr.mxu0 %v1181
    %1767 = vmatpush1.msra.mxu0 %v1180
    %1768 = vmatprep.subr.mxu0 %v1179
    %1769 = vmatpush1.msra.mxu0 %v1178
    %1770 = vmatprep.subr.mxu0 %v1177
    %1771 = vmatpush1.msra.mxu0 %v1176
    %1772 = vmatprep.subr.mxu0 %v1175
    %1773 = vmatpush1.msra.mxu0 %v1174
    %1774 = vmatprep.subr.mxu0 %v1173
    %1775 = vmatpush1.msra.mxu0 %v1172
    %1776 = vmatprep.subr.mxu0 %v1171
    %1777 = vmatpush1.msra.mxu0 %v1170
    %1778 = vmatprep.subr.mxu0 %v1169
    %1779 = vmatpush1.msra.mxu0 %v1168
    %1780 = vmatprep.subr.mxu0 %v1167
    %1781 = vmatpush1.msra.mxu0 %v1166
    %1782 = vmatprep.subr.mxu0 %v1165
    %1783 = vmatpush1.msra.mxu0 %v1164
    %1784 = vmatprep.subr.mxu0 %v1163
    %1785 = vmatpush1.msra.mxu0 %v1162
    %1786 = vmatprep.subr.mxu0 %v1161
    %1787 = vmatpush1.msra.mxu0 %v1160
    %1788 = vmatprep.subr.mxu0 %v1159
    %1789 = vmatpush1.msra.mxu0 %v1158
    %1790 = vmatprep.subr.mxu0 %v1157
    %1791 = vmatpush1.msra.mxu0 %v1156
    %1792 = vmatprep.subr.mxu0 %v1155
    %1793 = vmatpush1.msra.mxu0 %v1154
    %1794 = vmatprep.subr.mxu0 %v1153
    %1795 = vmatpush1.msra.mxu0 %v1152
    %1796 = vmatprep.subr.mxu0 0.0
    %1797 = vmatpush2.msra.mxu0 0.0
    %1798 = vmatprep.subr.mxu0 0.0
    %1799 = vmatpush2.msra.mxu0 0.0
    %1800 = vmatprep.subr.mxu0 0.0
    %1801 = vmatpush2.msra.mxu0 0.0
    %1802 = vmatprep.subr.mxu0 0.0
    %1803 = vmatpush2.msra.mxu0 0.0
    %1804 = vmatprep.subr.mxu0 0.0
    %1805 = vmatpush2.msra.mxu0 0.0
    %1806 = vmatprep.subr.mxu0 0.0
    %1807 = vmatpush2.msra.mxu0 0.0
    %1808 = vmatprep.subr.mxu0 0.0
    %1809 = vmatpush2.msra.mxu0 0.0
    %1810 = vmatprep.subr.mxu0 0.0
    %1811 = vmatpush2.msra.mxu0 0.0
    %1812 = vmatprep.subr.mxu0 %v1199
    %1813 = vmatpush2.msra.mxu0 %v1198
    %1814 = vmatprep.subr.mxu0 %v1197
    %1815 = vmatpush2.msra.mxu0 %v1196
    %1816 = vmatprep.subr.mxu0 %v1195
    %1817 = vmatpush2.msra.mxu0 %v1194
    %1818 = vmatprep.subr.mxu0 %v1193
    %1819 = vmatpush2.msra.mxu0 %v1192
    %1820 = vmatprep.subr.mxu0 %v1191
    %1821 = vmatpush2.msra.mxu0 %v1190
    %1822 = vmatprep.subr.mxu0 %v1189
    %1823 = vmatpush2.msra.mxu0 %v1188
    %1824 = vmatprep.subr.mxu0 %v1187
    %1825 = vmatpush2.msra.mxu0 %v1186
    %1826 = vmatprep.subr.mxu0 %v1185
    %1827 = vmatpush2.msra.mxu0 %v1184
    %1828 = vmatprep.mubr.f32.mxu0 %v1762
    %1829 = vmatmul.mubr.f32.gmra.mxu0 %v1761
    %v1830 = vpop.f32.mrf.mxu0
    %v1831 = vadd.f32 %v1212, %v1830
    %v1832 = vpop.f32.mrf.mxu0
    %v1833 = vadd.f32 %v1216, %v1832
    %1834 = vdwg.mxu0
    %v1835 = vxor.u32 %v1831, 2147483648
    %v1836 = vmul.f32 %v1835, 1.442695
    %v1837 = vpow.pop %v1836
    %v1838 = vadd.f32 %v1837, 1.0
    %v1839 = vrcp.pop %v1838
    %v1840 = vmul.f32 1.0, %v1839
    %1842 = vrot.lane.b32.xlu0 %v1833, 64
    %v1843 = vpop.permute.xlu0 %1842
    %v1845 = vmul.f32 %v1840, %v1843
    %v1846 = vadd.f32 %v1833, %v1845
    %v1847 = vtanh.pop %v1846
    %v1848 = vsub.f32 1.0, %v1840
    %1850 = vrot.lane.b32.xlu0 %v1847, 64
    %v1851 = vpop.permute.xlu0 %1850
    %v1853 = vmul.f32 %v1848, %v1851
    %v1854 = vmul.f32 %v1840, %v1748
    %v1855 = vadd.f32 %v1853, %v1854
    %1857 = vrot.lane.b32.xlu0 %v1855, 64
    %v1858 = vpop.permute.xlu0 %1857
    %1860 = vst.msk [vmem:[%s1537] sm:$0x3] %vm163, %v1858
    %1861 = vst.msk [vmem:[%s1535] sm:$0x3] %vm339, %v1858
    %v1862 = vld [vmem:[%s456] sm:$0x3]
    %v1863 = vld [vmem:[%s454] sm:$0x3]
    %1865 = vrot.lane.b32.xlu0 %v1863, 64
    %v1866 = vpop.permute.xlu0 %1865
    %v1868 = vsel %vm223, %v1862, %v1866
    %v1869 = vsel %vm223, %v1858, 0
    %1871 = vmatprep.subr.mxu0 %v1183
    %1872 = vmatpush1.msra.mxu0 %v1182
    %1873 = vmatprep.subr.mxu0 %v1181
    %1874 = vmatpush1.msra.mxu0 %v1180
    %1875 = vmatprep.subr.mxu0 %v1179
    %1876 = vmatpush1.msra.mxu0 %v1178
    %1877 = vmatprep.subr.mxu0 %v1177
    %1878 = vmatpush1.msra.mxu0 %v1176
    %1879 = vmatprep.subr.mxu0 %v1175
    %1880 = vmatpush1.msra.mxu0 %v1174
    %1881 = vmatprep.subr.mxu0 %v1173
    %1882 = vmatpush1.msra.mxu0 %v1172
    %1883 = vmatprep.subr.mxu0 %v1171
    %1884 = vmatpush1.msra.mxu0 %v1170
    %1885 = vmatprep.subr.mxu0 %v1169
    %1886 = vmatpush1.msra.mxu0 %v1168
    %1887 = vmatprep.subr.mxu0 %v1167
    %1888 = vmatpush1.msra.mxu0 %v1166
    %1889 = vmatprep.subr.mxu0 %v1165
    %1890 = vmatpush1.msra.mxu0 %v1164
    %1891 = vmatprep.subr.mxu0 %v1163
    %1892 = vmatpush1.msra.mxu0 %v1162
    %1893 = vmatprep.subr.mxu0 %v1161
    %1894 = vmatpush1.msra.mxu0 %v1160
    %1895 = vmatprep.subr.mxu0 %v1159
    %1896 = vmatpush1.msra.mxu0 %v1158
    %1897 = vmatprep.subr.mxu0 %v1157
    %1898 = vmatpush1.msra.mxu0 %v1156
    %1899 = vmatprep.subr.mxu0 %v1155
    %1900 = vmatpush1.msra.mxu0 %v1154
    %1901 = vmatprep.subr.mxu0 %v1153
    %1902 = vmatpush1.msra.mxu0 %v1152
    %1903 = vmatprep.subr.mxu0 0.0
    %1904 = vmatpush2.msra.mxu0 0.0
    %1905 = vmatprep.subr.mxu0 0.0
    %1906 = vmatpush2.msra.mxu0 0.0
    %1907 = vmatprep.subr.mxu0 0.0
    %1908 = vmatpush2.msra.mxu0 0.0
    %1909 = vmatprep.subr.mxu0 0.0
    %1910 = vmatpush2.msra.mxu0 0.0
    %1911 = vmatprep.subr.mxu0 0.0
    %1912 = vmatpush2.msra.mxu0 0.0
    %1913 = vmatprep.subr.mxu0 0.0
    %1914 = vmatpush2.msra.mxu0 0.0
    %1915 = vmatprep.subr.mxu0 0.0
    %1916 = vmatpush2.msra.mxu0 0.0
    %1917 = vmatprep.subr.mxu0 0.0
    %1918 = vmatpush2.msra.mxu0 0.0
    %1919 = vmatprep.subr.mxu0 %v1199
    %1920 = vmatpush2.msra.mxu0 %v1198
    %1921 = vmatprep.subr.mxu0 %v1197
    %1922 = vmatpush2.msra.mxu0 %v1196
    %1923 = vmatprep.subr.mxu0 %v1195
    %1924 = vmatpush2.msra.mxu0 %v1194
    %1925 = vmatprep.subr.mxu0 %v1193
    %1926 = vmatpush2.msra.mxu0 %v1192
    %1927 = vmatprep.subr.mxu0 %v1191
    %1928 = vmatpush2.msra.mxu0 %v1190
    %1929 = vmatprep.subr.mxu0 %v1189
    %1930 = vmatpush2.msra.mxu0 %v1188
    %1931 = vmatprep.subr.mxu0 %v1187
    %1932 = vmatpush2.msra.mxu0 %v1186
    %1933 = vmatprep.subr.mxu0 %v1185
    %1934 = vmatpush2.msra.mxu0 %v1184
    %1935 = vmatprep.mubr.f32.mxu0 %v1869
    %1936 = vmatmul.mubr.f32.gmra.mxu0 %v1868
    %v1937 = vpop.f32.mrf.mxu0
    %v1938 = vadd.f32 %v1212, %v1937
    %v1939 = vpop.f32.mrf.mxu0
    %v1940 = vadd.f32 %v1216, %v1939
    %1941 = vdwg.mxu0
    %v1942 = vxor.u32 %v1938, 2147483648
    %v1943 = vmul.f32 %v1942, 1.442695
    %v1944 = vpow.pop %v1943
    %v1945 = vadd.f32 %v1944, 1.0
    %v1946 = vrcp.pop %v1945
    %v1947 = vmul.f32 1.0, %v1946
    %1949 = vrot.lane.b32.xlu0 %v1940, 64
    %v1950 = vpop.permute.xlu0 %1949
    %v1952 = vmul.f32 %v1947, %v1950
    %v1953 = vadd.f32 %v1940, %v1952
    %v1954 = vtanh.pop %v1953
    %v1955 = vsub.f32 1.0, %v1947
    %1957 = vrot.lane.b32.xlu0 %v1954, 64
    %v1958 = vpop.permute.xlu0 %1957
    %v1960 = vmul.f32 %v1955, %v1958
    %v1961 = vmul.f32 %v1947, %v1855
    %v1962 = vadd.f32 %v1960, %v1961
    %1964 = vrot.lane.b32.xlu0 %v1962, 64
    %v1965 = vpop.permute.xlu0 %1964
    %1967 = vst.msk [vmem:[%s1428] sm:$0x3] %vm163, %v1965
    %1968 = vst.msk [vmem:[%s1426] sm:$0x3] %vm339, %v1965
    %v1969 = vld [vmem:[%s338] sm:$0x3]
    %v1970 = vld [vmem:[#allocation3] sm:$0x3]
    %1972 = vrot.lane.b32.xlu0 %v1970, 64
    %v1973 = vpop.permute.xlu0 %1972
    %v1975 = vsel %vm223, %v1969, %v1973
    %v1976 = vsel %vm223, %v1965, 0
    %1978 = vmatprep.subr.mxu0 %v1183
    %1979 = vmatpush1.msra.mxu0 %v1182
    %1980 = vmatprep.subr.mxu0 %v1181
    %1981 = vmatpush1.msra.mxu0 %v1180
    %1982 = vmatprep.subr.mxu0 %v1179
    %1983 = vmatpush1.msra.mxu0 %v1178
    %1984 = vmatprep.subr.mxu0 %v1177
    %1985 = vmatpush1.msra.mxu0 %v1176
    %1986 = vmatprep.subr.mxu0 %v1175
    %1987 = vmatpush1.msra.mxu0 %v1174
    %1988 = vmatprep.subr.mxu0 %v1173
    %1989 = vmatpush1.msra.mxu0 %v1172
    %1990 = vmatprep.subr.mxu0 %v1171
    %1991 = vmatpush1.msra.mxu0 %v1170
    %1992 = vmatprep.subr.mxu0 %v1169
    %1993 = vmatpush1.msra.mxu0 %v1168
    %1994 = vmatprep.subr.mxu0 %v1167
    %1995 = vmatpush1.msra.mxu0 %v1166
    %1996 = vmatprep.subr.mxu0 %v1165
    %1997 = vmatpush1.msra.mxu0 %v1164
    %1998 = vmatprep.subr.mxu0 %v1163
    %1999 = vmatpush1.msra.mxu0 %v1162
    %2000 = vmatprep.subr.mxu0 %v1161
    %2001 = vmatpush1.msra.mxu0 %v1160
    %2002 = vmatprep.subr.mxu0 %v1159
    %2003 = vmatpush1.msra.mxu0 %v1158
    %2004 = vmatprep.subr.mxu0 %v1157
    %2005 = vmatpush1.msra.mxu0 %v1156
    %2006 = vmatprep.subr.mxu0 %v1155
    %2007 = vmatpush1.msra.mxu0 %v1154
    %2008 = vmatprep.subr.mxu0 %v1153
    %2009 = vmatpush1.msra.mxu0 %v1152
    %2010 = vmatprep.subr.mxu0 0.0
    %2011 = vmatpush2.msra.mxu0 0.0
    %2012 = vmatprep.subr.mxu0 0.0
    %2013 = vmatpush2.msra.mxu0 0.0
    %2014 = vmatprep.subr.mxu0 0.0
    %2015 = vmatpush2.msra.mxu0 0.0
    %2016 = vmatprep.subr.mxu0 0.0
    %2017 = vmatpush2.msra.mxu0 0.0
    %2018 = vmatprep.subr.mxu0 0.0
    %2019 = vmatpush2.msra.mxu0 0.0
    %2020 = vmatprep.subr.mxu0 0.0
    %2021 = vmatpush2.msra.mxu0 0.0
    %2022 = vmatprep.subr.mxu0 0.0
    %2023 = vmatpush2.msra.mxu0 0.0
    %2024 = vmatprep.subr.mxu0 0.0
    %2025 = vmatpush2.msra.mxu0 0.0
    %2026 = vmatprep.subr.mxu0 %v1199
    %2027 = vmatpush2.msra.mxu0 %v1198
    %2028 = vmatprep.subr.mxu0 %v1197
    %2029 = vmatpush2.msra.mxu0 %v1196
    %2030 = vmatprep.subr.mxu0 %v1195
    %2031 = vmatpush2.msra.mxu0 %v1194
    %2032 = vmatprep.subr.mxu0 %v1193
    %2033 = vmatpush2.msra.mxu0 %v1192
    %2034 = vmatprep.subr.mxu0 %v1191
    %2035 = vmatpush2.msra.mxu0 %v1190
    %2036 = vmatprep.subr.mxu0 %v1189
    %2037 = vmatpush2.msra.mxu0 %v1188
    %2038 = vmatprep.subr.mxu0 %v1187
    %2039 = vmatpush2.msra.mxu0 %v1186
    %2040 = vmatprep.subr.mxu0 %v1185
    %2041 = vmatpush2.msra.mxu0 %v1184
    %2042 = vmatprep.mubr.f32.mxu0 %v1976
    %2043 = vmatmul.mubr.f32.gmra.mxu0 %v1975
    %v2044 = vpop.f32.mrf.mxu0
    %v2045 = vadd.f32 %v1212, %v2044
    %v2046 = vpop.f32.mrf.mxu0
    %v2047 = vadd.f32 %v1216, %v2046
    %2048 = vdwg.mxu0
    %v2049 = vxor.u32 %v2045, 2147483648
    %v2050 = vmul.f32 %v2049, 1.442695
    %v2051 = vpow.pop %v2050
    %v2052 = vadd.f32 %v2051, 1.0
    %v2053 = vrcp.pop %v2052
    %v2054 = vmul.f32 1.0, %v2053
    %2056 = vrot.lane.b32.xlu0 %v2047, 64
    %v2057 = vpop.permute.xlu0 %2056
    %v2059 = vmul.f32 %v2054, %v2057
    %v2060 = vadd.f32 %v2047, %v2059
    %v2061 = vtanh.pop %v2060
    %v2062 = vsub.f32 1.0, %v2054
    %2064 = vrot.lane.b32.xlu0 %v2061, 64
    %v2065 = vpop.permute.xlu0 %2064
    %v2067 = vmul.f32 %v2062, %v2065
    %v2068 = vmul.f32 %v2054, %v1962
    %v2069 = vadd.f32 %v2067, %v2068
    %2071 = vrot.lane.b32.xlu0 %v2069, 64
    %v2072 = vpop.permute.xlu0 %2071
    %2074 = vst.msk [vmem:[%s1319] sm:$0x3] %vm163, %v2072
    %2075 = vst.msk [vmem:[#allocation4] sm:$0x3] %vm339, %v2072
    %v2076 = vld [vmem:[#allocation4] sm:$0x3]
    %v2077 = vld [vmem:[#allocation4 + $0x2] sm:$0x3]
    %v2078 = vld [vmem:[#allocation4 + $0x4] sm:$0x3]
    %v2079 = vld [vmem:[#allocation4 + $0x6] sm:$0x3]
    %v2080 = vld [vmem:[#allocation4 + $0x8] sm:$0x3]
    %v2081 = vld [vmem:[#allocation4 + $0xa] sm:$0x3]
    %v2082 = vld [vmem:[#allocation4 + $0xc] sm:$0x3]
    %v2083 = vld [vmem:[#allocation4 + $0xe] sm:$0x3]
    %v2084 = vld [vmem:[%s6] sm:$0x1]
    %v2086 = vlaneseq
    %v2087 = vshrl.u32 %v2086, 7
    %v2088 = vsub.s32 0, %v2087
    %v2089 = vrot.slane %v2084, %v2088
    %v2091 = vmul.f32 %v2076, %v2089
    %v2092 = vmul.f32 %v2077, %v2089
    %v2093 = vmul.f32 %v2078, %v2089
    %v2094 = vmul.f32 %v2079, %v2089
    %v2095 = vmul.f32 %v2080, %v2089
    %v2096 = vmul.f32 %v2081, %v2089
    %v2097 = vmul.f32 %v2082, %v2089
    %v2098 = vmul.f32 %v2083, %v2089
    %vm2099 = vcmask 517120
    %v2100 = vsel %vm2099, %v2091, 0.0
    %2101 = vadd.xlane.f32.xlu0 %v2100
    %v2102 = vpop.xlane.xlu0 %2101
    %v2103 = vsel %vm2099, %v2092, 0.0
    %2104 = vadd.xlane.f32.xlu0 %v2103
    %v2105 = vpop.xlane.xlu0 %2104
    %v2106 = vsel %vm2099, %v2093, 0.0
    %2107 = vadd.xlane.f32.xlu0 %v2106
    %v2108 = vpop.xlane.xlu0 %2107
    %v2109 = vsel %vm2099, %v2094, 0.0
    %2110 = vadd.xlane.f32.xlu0 %v2109
    %v2111 = vpop.xlane.xlu0 %2110
    %v2112 = vsel %vm2099, %v2095, 0.0
    %2113 = vadd.xlane.f32.xlu0 %v2112
    %v2114 = vpop.xlane.xlu0 %2113
    %v2115 = vsel %vm2099, %v2096, 0.0
    %2116 = vadd.xlane.f32.xlu0 %v2115
    %v2117 = vpop.xlane.xlu0 %2116
    %v2118 = vsel %vm2099, %v2097, 0.0
    %2119 = vadd.xlane.f32.xlu0 %v2118
    %v2120 = vpop.xlane.xlu0 %2119
    %v2121 = vsel %vm2099, %v2098, 0.0
    %2122 = vadd.xlane.f32.xlu0 %v2121
    %v2123 = vpop.xlane.xlu0 %2122
    %v2124 = vld [vmem:[%s7] sm:$0x1]
    %v2125 = vld [vmem:[%s7 + $0x1] sm:$0x1]
    %v2126 = vld [vmem:[%s7 + $0x2] sm:$0x1]
    %v2127 = vld [vmem:[%s7 + $0x3] sm:$0x1]
    %v2128 = vld [vmem:[%s7 + $0x4] sm:$0x1]
    %v2129 = vld [vmem:[%s7 + $0x5] sm:$0x1]
    %v2130 = vld [vmem:[%s7 + $0x6] sm:$0x1]
    %v2131 = vld [vmem:[%s7 + $0x7] sm:$0x1]
    %v2140 = vlaneseq
    %v2141 = vshrl.u32 %v2140, 7
    %v2142 = vsub.s32 0, %v2141
    %v2143 = vrot.slane %v2124, %v2142
    %v2144 = vlaneseq
    %v2145 = vshrl.u32 %v2144, 7
    %v2146 = vsub.s32 0, %v2145
    %v2147 = vrot.slane %v2125, %v2146
    %v2148 = vlaneseq
    %v2149 = vshrl.u32 %v2148, 7
    %v2150 = vsub.s32 0, %v2149
    %v2151 = vrot.slane %v2126, %v2150
    %v2152 = vlaneseq
    %v2153 = vshrl.u32 %v2152, 7
    %v2154 = vsub.s32 0, %v2153
    %v2155 = vrot.slane %v2127, %v2154
    %v2156 = vlaneseq
    %v2157 = vshrl.u32 %v2156, 7
    %v2158 = vsub.s32 0, %v2157
    %v2159 = vrot.slane %v2128, %v2158
    %v2160 = vlaneseq
    %v2161 = vshrl.u32 %v2160, 7
    %v2162 = vsub.s32 0, %v2161
    %v2163 = vrot.slane %v2129, %v2162
    %v2164 = vlaneseq
    %v2165 = vshrl.u32 %v2164, 7
    %v2166 = vsub.s32 0, %v2165
    %v2167 = vrot.slane %v2130, %v2166
    %v2168 = vlaneseq
    %v2169 = vshrl.u32 %v2168, 7
    %v2170 = vsub.s32 0, %v2169
    %v2171 = vrot.slane %v2131, %v2170
    %v2180 = vadd.f32 %v2102, %v2143
    %v2181 = vadd.f32 %v2105, %v2147
    %v2182 = vadd.f32 %v2108, %v2151
    %v2183 = vadd.f32 %v2111, %v2155
    %v2184 = vadd.f32 %v2114, %v2159
    %v2185 = vadd.f32 %v2117, %v2163
    %v2186 = vadd.f32 %v2120, %v2167
    %v2187 = vadd.f32 %v2123, %v2171
    %v2188 = vtanh.pop %v2180
    %v2189 = vtanh.pop %v2181
    %v2190 = vtanh.pop %v2182
    %v2191 = vtanh.pop %v2183
    %v2192 = vtanh.pop %v2184
    %v2193 = vtanh.pop %v2185
    %v2194 = vtanh.pop %v2186
    %v2195 = vtanh.pop %v2187
    %v2196 = vmul.f32 %v2188, 1.442695
    %v2197 = vpow.pop %v2196
    %v2198 = vmul.f32 %v2189, 1.442695
    %v2199 = vpow.pop %v2198
    %v2200 = vmul.f32 %v2190, 1.442695
    %v2201 = vpow.pop %v2200
    %v2202 = vmul.f32 %v2191, 1.442695
    %v2203 = vpow.pop %v2202
    %v2204 = vmul.f32 %v2192, 1.442695
    %v2205 = vpow.pop %v2204
    %v2206 = vmul.f32 %v2193, 1.442695
    %v2207 = vpow.pop %v2206
    %v2208 = vmul.f32 %v2194, 1.442695
    %v2209 = vpow.pop %v2208
    %v2210 = vmul.f32 %v2195, 1.442695
    %v2211 = vpow.pop %v2210
    %vm2212 = vcmask 1024
    %v2213 = vsel %vm2212, %v2197, 0.0
    %v2214 = vsel %vm2212, %v2199, 0.0
    %v2215 = vadd.f32 %v2213, %v2214
    %v2216 = vsel %vm2212, %v2201, 0.0
    %v2217 = vadd.f32 %v2215, %v2216
    %v2218 = vsel %vm2212, %v2203, 0.0
    %v2219 = vadd.f32 %v2217, %v2218
    %v2220 = vsel %vm2212, %v2205, 0.0
    %v2221 = vadd.f32 %v2219, %v2220
    %v2222 = vsel %vm2212, %v2207, 0.0
    %v2223 = vadd.f32 %v2221, %v2222
    %v2224 = vsel %vm2212, %v2209, 0.0
    %v2225 = vadd.f32 %v2223, %v2224
    %v2226 = vsel %vm2212, %v2211, 0.0
    %v2227 = vadd.f32 %v2225, %v2226
    %v2228 = vrcp.pop %v2227
    %v2229 = vmul.f32 %v2197, %v2228
    %v2230 = vmul.f32 %v2199, %v2228
    %v2231 = vmul.f32 %v2201, %v2228
    %v2232 = vmul.f32 %v2203, %v2228
    %v2233 = vmul.f32 %v2205, %v2228
    %v2234 = vmul.f32 %v2207, %v2228
    %v2235 = vmul.f32 %v2209, %v2228
    %v2236 = vmul.f32 %v2211, %v2228
    %v2237 = vadd.f32 %v2229, 1e-10
    %v2238 = vadd.f32 %v2230, 1e-10
    %v2239 = vadd.f32 %v2231, 1e-10
    %v2240 = vadd.f32 %v2232, 1e-10
    %v2241 = vadd.f32 %v2233, 1e-10
    %v2242 = vadd.f32 %v2234, 1e-10
    %v2243 = vadd.f32 %v2235, 1e-10
    %v2244 = vadd.f32 %v2236, 1e-10
    %2246 = vset.pattern.permute.xlu0 0
    %2247 = vperm.xlu0 %2246, %v2237
    %v2248 = vpop.permute.xlu0 %2247
    %2251 = vset.pattern.permute.xlu0 0
    %2252 = vperm.xlu0 %2251, %v2238
    %v2253 = vpop.permute.xlu0 %2252
    %2256 = vset.pattern.permute.xlu0 0
    %2257 = vperm.xlu0 %2256, %v2239
    %v2258 = vpop.permute.xlu0 %2257
    %2261 = vset.pattern.permute.xlu0 0
    %2262 = vperm.xlu0 %2261, %v2240
    %v2263 = vpop.permute.xlu0 %2262
    %2266 = vset.pattern.permute.xlu0 0
    %2267 = vperm.xlu0 %2266, %v2241
    %v2268 = vpop.permute.xlu0 %2267
    %2271 = vset.pattern.permute.xlu0 0
    %2272 = vperm.xlu0 %2271, %v2242
    %v2273 = vpop.permute.xlu0 %2272
    %2276 = vset.pattern.permute.xlu0 0
    %2277 = vperm.xlu0 %2276, %v2243
    %v2278 = vpop.permute.xlu0 %2277
    %2281 = vset.pattern.permute.xlu0 0
    %2282 = vperm.xlu0 %2281, %v2244
    %v2283 = vpop.permute.xlu0 %2282
    %v2285 = vmul.f32 %v2076, %v2248
    %v2286 = vmul.f32 %v2077, %v2253
    %v2287 = vmul.f32 %v2078, %v2258
    %v2288 = vmul.f32 %v2079, %v2263
    %v2289 = vmul.f32 %v2080, %v2268
    %v2290 = vmul.f32 %v2081, %v2273
    %v2291 = vmul.f32 %v2082, %v2278
    %v2292 = vmul.f32 %v2083, %v2283
    %v2293 = vsel %vm2099, %v2285, 0.0
    %v2294 = vsel %vm2099, %v2286, 0.0
    %v2295 = vadd.f32 %v2293, %v2294
    %v2296 = vsel %vm2099, %v2287, 0.0
    %v2297 = vadd.f32 %v2295, %v2296
    %v2298 = vsel %vm2099, %v2288, 0.0
    %v2299 = vadd.f32 %v2297, %v2298
    %v2300 = vsel %vm2099, %v2289, 0.0
    %v2301 = vadd.f32 %v2299, %v2300
    %v2302 = vsel %vm2099, %v2290, 0.0
    %v2303 = vadd.f32 %v2301, %v2302
    %v2304 = vsel %vm2099, %v2291, 0.0
    %v2305 = vadd.f32 %v2303, %v2304
    %v2306 = vsel %vm2099, %v2292, 0.0
    %v2307 = vadd.f32 %v2305, %v2306
    %v2308 = vld [vmem:[%s8] sm:$0xff]
    %v2309 = vld [vmem:[%s8 + $0x8] sm:$0xff]
    %v2310 = vld [vmem:[%s8 + $0x10] sm:$0xff]
    %v2311 = vld [vmem:[%s8 + $0x18] sm:$0xff]
    %v2312 = vld [vmem:[%s8 + $0x20] sm:$0xff]
    %v2313 = vld [vmem:[%s8 + $0x28] sm:$0xff]
    %v2314 = vld [vmem:[%s8 + $0x30] sm:$0xff]
    %v2315 = vld [vmem:[%s8 + $0x38] sm:$0xff]
    %v2316 = vld [vmem:[%s9] sm:$0x1]
    %v2318 = vlaneseq
    %v2319 = vshrl.u32 %v2318, 7
    %v2320 = vsub.s32 0, %v2319
    %v2321 = vrot.slane %v2316, %v2320
    %v2324 = vsel %vm223, %v2307, 0
    %2326 = vmatprep.subr.mxu0 0.0
    %2327 = vmatpush1.msra.mxu0 0.0
    %2328 = vmatprep.subr.mxu0 0.0
    %2329 = vmatpush1.msra.mxu0 0.0
    %2330 = vmatprep.subr.mxu0 0.0
    %2331 = vmatpush1.msra.mxu0 0.0
    %2332 = vmatprep.subr.mxu0 0.0
    %2333 = vmatpush1.msra.mxu0 0.0
    %2334 = vmatprep.subr.mxu0 0.0
    %2335 = vmatpush1.msra.mxu0 0.0
    %2336 = vmatprep.subr.mxu0 0.0
    %2337 = vmatpush1.msra.mxu0 0.0
    %2338 = vmatprep.subr.mxu0 0.0
    %2339 = vmatpush1.msra.mxu0 0.0
    %2340 = vmatprep.subr.mxu0 0.0
    %2341 = vmatpush1.msra.mxu0 0.0
    %2342 = vmatprep.subr.mxu0 0.0
    %2343 = vmatpush1.msra.mxu0 %v2315
    %2344 = vmatprep.subr.mxu0 0.0
    %2345 = vmatpush1.msra.mxu0 %v2314
    %2346 = vmatprep.subr.mxu0 0.0
    %2347 = vmatpush1.msra.mxu0 %v2313
    %2348 = vmatprep.subr.mxu0 0.0
    %2349 = vmatpush1.msra.mxu0 %v2312
    %2350 = vmatprep.subr.mxu0 0.0
    %2351 = vmatpush1.msra.mxu0 %v2311
    %2352 = vmatprep.subr.mxu0 0.0
    %2353 = vmatpush1.msra.mxu0 %v2310
    %2354 = vmatprep.subr.mxu0 0.0
    %2355 = vmatpush1.msra.mxu0 %v2309
    %2356 = vmatprep.subr.mxu0 0.0
    %2357 = vmatpush1.msra.mxu0 %v2308
    %2358 = vmatprep.subr.mxu0 0.0
    %2359 = vmatpush2.msra.mxu0 0.0
    %2360 = vmatprep.subr.mxu0 0.0
    %2361 = vmatpush2.msra.mxu0 0.0
    %2362 = vmatprep.subr.mxu0 0.0
    %2363 = vmatpush2.msra.mxu0 0.0
    %2364 = vmatprep.subr.mxu0 0.0
    %2365 = vmatpush2.msra.mxu0 0.0
    %2366 = vmatprep.subr.mxu0 0.0
    %2367 = vmatpush2.msra.mxu0 0.0
    %2368 = vmatprep.subr.mxu0 0.0
    %2369 = vmatpush2.msra.mxu0 0.0
    %2370 = vmatprep.subr.mxu0 0.0
    %2371 = vmatpush2.msra.mxu0 0.0
    %2372 = vmatprep.subr.mxu0 0.0
    %2373 = vmatpush2.msra.mxu0 0.0
    %2374 = vmatprep.subr.mxu0 0.0
    %2375 = vmatpush2.msra.mxu0 0.0
    %2376 = vmatprep.subr.mxu0 0.0
    %2377 = vmatpush2.msra.mxu0 0.0
    %2378 = vmatprep.subr.mxu0 0.0
    %2379 = vmatpush2.msra.mxu0 0.0
    %2380 = vmatprep.subr.mxu0 0.0
    %2381 = vmatpush2.msra.mxu0 0.0
    %2382 = vmatprep.subr.mxu0 0.0
    %2383 = vmatpush2.msra.mxu0 0.0
    %2384 = vmatprep.subr.mxu0 0.0
    %2385 = vmatpush2.msra.mxu0 0.0
    %2386 = vmatprep.subr.mxu0 0.0
    %2387 = vmatpush2.msra.mxu0 0.0
    %2388 = vmatprep.subr.mxu0 0.0
    %2389 = vmatpush2.msra.mxu0 0.0
    %2390 = vmatprep.mubr.f32.mxu0 0.0
    %2391 = vmatmul.mubr.f32.gmra.mxu0 %v2324
    %v2392 = vpop.f32.mrf.mxu0
    %v2393 = vadd.f32 %v2321, %v2392
    %v2394 = vpop.f32.mrf.mxu0
    %2395 = vdwg.mxu0
    %v2396 = vmax.f32 %v2393, 0.0
    %v2397 = vld [vmem:[%s10] sm:$0xff]
    %v2398 = vld [vmem:[%s10 + $0x8] sm:$0xff]
    %v2399 = vld [vmem:[%s10 + $0x10] sm:$0xff]
    %v2400 = vld [vmem:[%s10 + $0x18] sm:$0xff]
    %v2401 = vld [vmem:[%s11] sm:$0x1]
    %v2403 = vlaneseq
    %v2404 = vshrl.u32 %v2403, 7
    %v2405 = vsub.s32 0, %v2404
    %v2406 = vrot.slane %v2401, %v2405
    %v2409 = vsel %vm221, %v2396, 0
    %2411 = vmatprep.subr.mxu0 0.0
    %2412 = vmatpush1.msra.mxu0 0.0
    %2413 = vmatprep.subr.mxu0 0.0
    %2414 = vmatpush1.msra.mxu0 0.0
    %2415 = vmatprep.subr.mxu0 0.0
    %2416 = vmatpush1.msra.mxu0 0.0
    %2417 = vmatprep.subr.mxu0 0.0
    %2418 = vmatpush1.msra.mxu0 0.0
    %2419 = vmatprep.subr.mxu0 0.0
    %2420 = vmatpush1.msra.mxu0 0.0
    %2421 = vmatprep.subr.mxu0 0.0
    %2422 = vmatpush1.msra.mxu0 0.0
    %2423 = vmatprep.subr.mxu0 0.0
    %2424 = vmatpush1.msra.mxu0 0.0
    %2425 = vmatprep.subr.mxu0 0.0
    %2426 = vmatpush1.msra.mxu0 0.0
    %2427 = vmatprep.subr.mxu0 0.0
    %2428 = vmatpush1.msra.mxu0 0.0
    %2429 = vmatprep.subr.mxu0 0.0
    %2430 = vmatpush1.msra.mxu0 0.0
    %2431 = vmatprep.subr.mxu0 0.0
    %2432 = vmatpush1.msra.mxu0 0.0
    %2433 = vmatprep.subr.mxu0 0.0
    %2434 = vmatpush1.msra.mxu0 0.0
    %2435 = vmatprep.subr.mxu0 0.0
    %2436 = vmatpush1.msra.mxu0 %v2400
    %2437 = vmatprep.subr.mxu0 0.0
    %2438 = vmatpush1.msra.mxu0 %v2399
    %2439 = vmatprep.subr.mxu0 0.0
    %2440 = vmatpush1.msra.mxu0 %v2398
    %2441 = vmatprep.subr.mxu0 0.0
    %2442 = vmatpush1.msra.mxu0 %v2397
    %2443 = vmatprep.subr.mxu0 0.0
    %2444 = vmatpush2.msra.mxu0 0.0
    %2445 = vmatprep.subr.mxu0 0.0
    %2446 = vmatpush2.msra.mxu0 0.0
    %2447 = vmatprep.subr.mxu0 0.0
    %2448 = vmatpush2.msra.mxu0 0.0
    %2449 = vmatprep.subr.mxu0 0.0
    %2450 = vmatpush2.msra.mxu0 0.0
    %2451 = vmatprep.subr.mxu0 0.0
    %2452 = vmatpush2.msra.mxu0 0.0
    %2453 = vmatprep.subr.mxu0 0.0
    %2454 = vmatpush2.msra.mxu0 0.0
    %2455 = vmatprep.subr.mxu0 0.0
    %2456 = vmatpush2.msra.mxu0 0.0
    %2457 = vmatprep.subr.mxu0 0.0
    %2458 = vmatpush2.msra.mxu0 0.0
    %2459 = vmatprep.subr.mxu0 0.0
    %2460 = vmatpush2.msra.mxu0 0.0
    %2461 = vmatprep.subr.mxu0 0.0
    %2462 = vmatpush2.msra.mxu0 0.0
    %2463 = vmatprep.subr.mxu0 0.0
    %2464 = vmatpush2.msra.mxu0 0.0
    %2465 = vmatprep.subr.mxu0 0.0
    %2466 = vmatpush2.msra.mxu0 0.0
    %2467 = vmatprep.subr.mxu0 0.0
    %2468 = vmatpush2.msra.mxu0 0.0
    %2469 = vmatprep.subr.mxu0 0.0
    %2470 = vmatpush2.msra.mxu0 0.0
    %2471 = vmatprep.subr.mxu0 0.0
    %2472 = vmatpush2.msra.mxu0 0.0
    %2473 = vmatprep.subr.mxu0 0.0
    %2474 = vmatpush2.msra.mxu0 0.0
    %2475 = vmatprep.mubr.f32.mxu0 0.0
    %2476 = vmatmul.mubr.f32.gmra.mxu0 %v2409
    %v2477 = vpop.f32.mrf.mxu0
    %v2478 = vadd.f32 %v2406, %v2477
    %v2479 = vpop.f32.mrf.mxu0
    %2480 = vdwg.mxu0
    %vm2481 = vcmask 66560
    %2482 = vst.msk [vmem:[#allocation8] sm:$0x3] %vm2481, %v2478
    // Predicated region
    $region54: #{neural_net_forward.1} parent=1 // pred_check
      _
    $region55: #{neural_net_forward.1} parent=1 // pred_check_branch
      %2484 = sbr.rel (0) target = $region57
    $region56: #{neural_net_forward.1} parent=1 // pred_region
      %s2486 = ssub.s32 32, 32
      %2487 = vsyncadd [#allocation7], %s2486
      %s2489 = sshll.u32 [#allocation8], 4
      %s2490 = int_to_ptr.vmem [resolvable:$true] %s2489
      %2492 = dma.vmem_to_hbm [thread:$0]  %s2490, 32, %s12, [#allocation7]
    $region57: #{neural_net_forward.1} parent=1 // pred_fallthru
      _
    // Predicated region
    $region58: #{neural_net_forward.1} parent=1 // pred_check
      _
    $region59: #{neural_net_forward.1} parent=1 // pred_check_branch
      %2494 = sbr.rel (0) target = $region61
    $region60: #{neural_net_forward.1} parent=1 // pred_region
      %2495 = dma.done [#allocation7], 32
    $region61: #{neural_net_forward.1} parent=1 // pred_fallthru
      _
    %2496 = vsyncpa [#allocation6], 1
    %2497 = vsyncpa [#allocation7], 1

</llo_original>
